<compile_context>
chip_gen: v6e
topology: v6e:2x2x1
jax: 0.10.0
libtpu: 0.0.40
codegen_flags: <defaults>
</compile_context>

<pallas_src>
import functools

import numpy as np

import jax
import jax.numpy as jnp
from jax.experimental import pallas as pl
from jax.experimental.pallas import tpu as pltpu


# ----------------------------- Pallas kernels --------------------------------
def xw_kernel(x_ref, w_ref, o_ref):
    # XW tile = X_tile @ W  (bf16 in, f32 accumulate on the MXU, bf16 out)
    o_ref[...] = jnp.dot(x_ref[...], w_ref[...],
                         preferred_element_type=jnp.float32).astype(o_ref.dtype)


def gcn_main_kernel(nnz_ref, kidx_ref, a_ref, xw_ref, b_ref, p_ref, out_ref, acc_ref,
                    *, max_nnz, tile, xw_resident):
    i = pl.program_id(0)
    j = pl.program_id(1)          # position within this row-tile's nonzero-block list
    nj = pl.num_programs(1)

    @pl.when(j == 0)
    def _():
        acc_ref[...] = jnp.zeros_like(acc_ref)

    # Only real (non-padded) entries of the compacted block list contribute.  Padded
    # entries repeat the last valid k index, so their A_hat DMA is deduplicated by the
    # pipeline (same block index as the previous step) -> no extra HBM traffic either.
    @pl.when(j < nnz_ref[i])
    def _():
        if xw_resident:
            k = kidx_ref[i * max_nnz + j]
            start = pl.multiple_of(k * tile, tile)
            xw_tile = xw_ref[pl.ds(start, tile), :]
        else:
            xw_tile = xw_ref[...]
        acc_ref[...] += jnp.dot(a_ref[...], xw_tile,
                                preferred_element_type=jnp.float32)

    @pl.when(j == nj - 1)
    def _():
        # GCNConv bias + ReLU, then the pooling contribution of this row tile.
        h = jnp.maximum(acc_ref[...] + b_ref[...], 0.0)
        # TODO(synk): F.dropout(p=0.1) (training-mode in the reference) is run as
        # inference identity here for determinism.
        out_ref[0] = jnp.dot(p_ref[...], h, preferred_element_type=jnp.float32)


def finalize_kernel(part_ref, wl_ref, bl_ref, out_ref, acc_ref):
    # Tiled reduction over row-tiles, then Linear + sigmoid on the last step.
    i = pl.program_id(0)

    @pl.when(i == 0)
    def _():
        acc_ref[...] = jnp.zeros_like(acc_ref)

    acc_ref[...] += part_ref[0]

    @pl.when(i == pl.num_programs(0) - 1)
    def _():
        logits = jnp.dot(acc_ref[...], wl_ref[...],
                         preferred_element_type=jnp.float32) + bl_ref[...]
        out_ref[...] = jax.nn.sigmoid(logits)        # lane-dense [G_p, 128]


# ------------------------------- helpers ---------------------------------------
def _round_up(x, m):
    return ((x + m - 1) // m) * m


def _pad2(a, rows, cols):
    return jnp.pad(a, ((0, rows - a.shape[0]), (0, cols - a.shape[1])))


# ------------------------------- wrapper ----------------------------------------
@functools.partial(jax.jit, static_argnames=("tile", "max_nnz"))
def gcn_forward(a_bf, x, w, b, pool, wl, bl, nnz, kidx, *, tile, max_nnz):
    """a_bf: padded (n_p, n_p) bf16 GCN-normalized adjacency (built once in preprocessing).
    nnz:  (num_i,)        int32 — number of nonzero A blocks per row tile.
    kidx: (num_i*max_nnz,) int32 — compacted k-block indices (padded with the last valid k)."""
    n, f = x.shape
    hidden = w.shape[1]
    g = pool.shape[0]
    out_dim = wl.shape[1]

    n_p = a_bf.shape[0]               # node dim, already a multiple of `tile`
    f_p = _round_up(f, 128)           # feature dim -> lane-dense
    h_p = _round_up(hidden, 128)      # hidden dim  -> lane-dense
    g_p = _round_up(g, 8)             # graphs      -> sublane-dense
    o_p = _round_up(out_dim, 128)     # final output-> lane-dense slab

    assert n_p == _round_up(n, tile) and n_p % tile == 0
    num_i = n_p // tile

    # zero-pad the small operands (exact for this computation: padded P columns and
    # padded W rows are zero, so padded node rows / features contribute nothing).
    x_p = _pad2(x, n_p, f_p)
    w_p = _pad2(w, f_p, h_p)
    b_p = _pad2(b, 1, h_p)
    p_p = _pad2(pool, g_p, n_p)       # NOTE: must stay zero-padded (see epilogue fusion)
    wl_p = _pad2(wl, h_p, o_p)
    bl_p = _pad2(bl, 1, o_p)

    # bf16 at the MXU boundary; all accumulation stays f32 inside the kernels.
    x_bf = x_p.astype(jnp.bfloat16)
    w_bf = w_p.astype(jnp.bfloat16)

    # ---- stage 1: XW = X @ W, tiled over node rows ---------------------------
    xw = pl.pallas_call(
        xw_kernel,
        out_shape=jax.ShapeDtypeStruct((n_p, h_p), jnp.bfloat16),
        grid_spec=pltpu.PrefetchScalarGridSpec(
            num_scalar_prefetch=0,
            grid=(num_i,),
            in_specs=[pl.BlockSpec((tile, f_p), lambda i: (i, 0)),
                      pl.BlockSpec((f_p, h_p), lambda i: (0, 0))],
            out_specs=pl.BlockSpec((tile, h_p), lambda i: (i, 0)),
        ),
        compiler_params=pltpu.CompilerParams(
            dimension_semantics=("parallel",),
            vmem_limit_bytes=32 * 1024 * 1024,
        ),
    )(x_bf, w_bf)

    # ---- stage 2: block-sparse A_hat @ XW with fused ReLU + pooled partials --
    # Keep XW fully VMEM-resident if it fits a conservative budget (headroom for
    # double-buffered A tiles; safe on v7x's 64 MiB VMEM as well as v5e/v6e 128 MiB).
    xw_bytes = n_p * h_p * 2
    xw_resident = xw_bytes <= 16 * 1024 * 1024

    if xw_resident:
        xw_spec = pl.BlockSpec((n_p, h_p), lambda i, j, nnz, kidx: (0, 0))
    else:
        xw_spec = pl.BlockSpec((tile, h_p),
                               lambda i, j, nnz, kidx: (kidx[i * max_nnz + j], 0))

    # TODO(synk): pl.Buffered(3) on the A_hat spec could hide the irregular DMA cadence
    # created by block skipping; left at the default depth here.
    a_spec = pl.BlockSpec((tile, tile),
                          lambda i, j, nnz, kidx: (i, kidx[i * max_nnz + j]))

    nnz_blocks_upper = num_i * max_nnz
    cost = pl.CostEstimate(
        flops=2 * nnz_blocks_upper * tile * tile * h_p + 2 * g_p * n_p * h_p,
        transcendentals=0,
        bytes_accessed=(nnz_blocks_upper * tile * tile * 2
                        + (xw_bytes if xw_resident else nnz_blocks_upper * tile * h_p * 2)
                        + g_p * n_p * 4 + num_i * g_p * h_p * 4),
    )

    kernel = functools.partial(gcn_main_kernel, max_nnz=max_nnz, tile=tile,
                               xw_resident=xw_resident)

    partials = pl.pallas_call(
        kernel,
        out_shape=jax.ShapeDtypeStruct((num_i, g_p, h_p), jnp.float32),
        grid_spec=pltpu.PrefetchScalarGridSpec(
            num_scalar_prefetch=2,                      # nnz, kidx -> SMEM
            grid=(num_i, max_nnz),
            in_specs=[
                a_spec,                                                  # A_hat[i, kidx[i,j]]
                xw_spec,                                                 # XW (resident or tiled)
                pl.BlockSpec((1, h_p), lambda i, j, nnz, kidx: (0, 0)),  # conv bias
                pl.BlockSpec((g_p, tile), lambda i, j, nnz, kidx: (0, i)),  # P[:, i_tile]
            ],
            out_specs=pl.BlockSpec((1, g_p, h_p), lambda i, j, nnz, kidx: (i, 0, 0)),
            scratch_shapes=[pltpu.VMEM((tile, h_p), jnp.float32)],       # f32 accumulator
        ),
        compiler_params=pltpu.CompilerParams(
            dimension_semantics=("parallel", "arbitrary"),
            vmem_limit_bytes=32 * 1024 * 1024,
        ),
        cost_estimate=cost,
    )(nnz, kidx, a_bf, xw, b_p, p_p)

    # ---- stage 3: reduce over row tiles + Linear + sigmoid --------------------
    out_padded = pl.pallas_call(
        finalize_kernel,
        out_shape=jax.ShapeDtypeStruct((g_p, o_p), jnp.float32),
        grid_spec=pltpu.PrefetchScalarGridSpec(
            num_scalar_prefetch=0,
            grid=(num_i,),
            in_specs=[pl.BlockSpec((1, g_p, h_p), lambda i: (i, 0, 0)),
                      pl.BlockSpec((h_p, o_p), lambda i: (0, 0)),
                      pl.BlockSpec((1, o_p), lambda i: (0, 0))],
            out_specs=pl.BlockSpec((g_p, o_p), lambda i: (0, 0)),
            scratch_shapes=[pltpu.VMEM((g_p, h_p), jnp.float32)],
        ),
        compiler_params=pltpu.CompilerParams(
            dimension_semantics=("arbitrary",),
            vmem_limit_bytes=32 * 1024 * 1024,
        ),
    )(partials, wl_p, bl_p)

    return out_padded[:g, :out_dim]


# ------------------------------ preprocessing (plain JAX / numpy) ---------------
def build_normalized_adjacency_padded(edge_index, edge_weight, num_nodes, n_p):
    """Dense GCN-normalized adjacency with self-loops, built directly at padded size:
    D^-1/2 (A + I) D^-1/2, zero outside [:num_nodes, :num_nodes]."""
    src, tgt = edge_index[0], edge_index[1]
    a = jnp.zeros((n_p, n_p), jnp.float32)
    # A[i, j] = weight of edge j -> i  (message from source j aggregated at target i)
    a = a.at[tgt, src].add(edge_weight)
    idx = jnp.arange(num_nodes)
    a = a.at[idx, idx].add(1.0)                       # self loops, weight 1
    deg = jnp.sum(a, axis=1)
    dinv = jnp.where(deg > 0, 1.0 / jnp.sqrt(deg), 0.0)
    return dinv[:, None] * a * dinv[None, :]


def build_mean_pool_matrix(batch, num_graphs, num_nodes):
    """P[g, n] = 1/count_g if batch[n] == g else 0."""
    onehot = (batch[None, :] == jnp.arange(num_graphs)[:, None]).astype(jnp.float32)
    counts = jnp.maximum(jnp.sum(onehot, axis=1, keepdims=True), 1.0)
    return onehot / counts


def build_block_list(edge_index, num_nodes, tile, num_blocks):
    """O(E) host-side construction of the compacted nonzero-block list of A_hat.
    Returns (nnz [num_blocks] int32, kidx [num_blocks*max_nnz] int32, max_nnz int)."""
    src = np.asarray(edge_index[0])
    tgt = np.asarray(edge_index[1])
    self_idx = np.arange(num_nodes)
    rows = np.concatenate([tgt, self_idx])            # edge targets + self loops
    cols = np.concatenate([src, self_idx])
    mask = np.zeros((num_blocks, num_blocks), dtype=bool)
    mask[rows // tile, cols // tile] = True
    nnz = mask.sum(axis=1).astype(np.int32)
    max_nnz = max(int(nnz.max()) if nnz.size else 0, 1)
    kidx = np.zeros((num_blocks, max_nnz), dtype=np.int32)
    for i in range(num_blocks):
        ks = np.nonzero(mask[i])[0]
        if len(ks):
            kidx[i, :len(ks)] = ks
            kidx[i, len(ks):] = ks[-1]                # pad with last valid k -> DMA dedup
    return jnp.asarray(nnz), jnp.asarray(kidx.reshape(-1)), max_nnz


def init_params(key, num_node_features):
    hidden = num_node_features // 2
    k1, k2 = jax.random.split(key)
    # GCNConv: glorot weight [F, F/2], zero bias (PyG defaults)
    scale_w = jnp.sqrt(6.0 / (num_node_features + hidden))
    w = jax.random.uniform(k1, (num_node_features, hidden), jnp.float32,
                           minval=-scale_w, maxval=scale_w)
    b = jnp.zeros((1, hidden), jnp.float32)
    # Linear: [F/2, 1] weight, bias [1]
    scale_l = 1.0 / jnp.sqrt(hidden)
    wl = jax.random.uniform(k2, (hidden, 1), jnp.float32, minval=-scale_l, maxval=scale_l)
    bl = jnp.zeros((1, 1), jnp.float32)
    return w, b, wl, bl


# ------------------------------- main ------------------------------------------
if __name__ == "__main__":
    key = jax.random.PRNGKey(0)
    k_feat, k_edge, k_ew, k_par = jax.random.split(key, 4)

    num_nodes = 16
    num_node_features = 16
    num_edges = 32
    num_graphs = 2
    tile = 512                        # larger tile per perf feedback (fewer grid steps)

    # synthetic graph data
    x = jax.random.normal(k_feat, (num_nodes, num_node_features), jnp.float32)
    edge_index = jax.random.randint(k_edge, (2, num_edges), 0, num_nodes, jnp.int32)
    edge_weight = jax.random.uniform(k_ew, (num_edges,), jnp.float32, minval=0.1, maxval=1.0)
    batch = jnp.concatenate([jnp.zeros(num_nodes // 2, jnp.int32),
                             jnp.ones(num_nodes - num_nodes // 2, jnp.int32)])

    # one-time preprocessing: padded A_hat (built at padded size, cast to bf16 once),
    # O(E) block list, pooling matrix, parameters.
    n_p = _round_up(num_nodes, tile)
    a_pad = build_normalized_adjacency_padded(edge_index, edge_weight, num_nodes, n_p)
    a_bf = a_pad.astype(jnp.bfloat16)
    nnz, kidx, max_nnz = build_block_list(edge_index, num_nodes, tile, n_p // tile)
    pool = build_mean_pool_matrix(batch, num_graphs, num_nodes)
    w, b, wl, bl = init_params(k_par, num_node_features)

    out = gcn_forward(a_bf, x, w, b, pool, wl, bl, nnz, kidx, tile=tile, max_nnz=max_nnz)
    out = jax.block_until_ready(out)

    # reference check in plain f32 JAX (kernel uses bf16 matmul inputs -> loose atol)
    a_hat = a_pad[:num_nodes, :num_nodes]
    h_ref = jnp.maximum(a_hat @ (x @ w) + b, 0.0)
    ref = jax.nn.sigmoid((pool @ h_ref) @ wl + bl)
    assert out.shape == (num_graphs, 1)
    assert jnp.allclose(out, ref, atol=2e-2), "mismatch vs reference"

    print("KERNEL_OK")
</pallas_src>

<mosaic_0001>
module attributes {stable_mosaic.version = 11 : i64} {
  func.func @xw_kernel(%arg0: i32, %arg1: memref<512x128xbf16, #tpu.memory_space<vmem>>, %arg2: memref<128x128xbf16, #tpu.memory_space<vmem>>, %arg3: memref<512x128xbf16, #tpu.memory_space<vmem>>) attributes {dimension_semantics = [#tpu.dimension_semantics<parallel>], iteration_bounds = array<i64: 1>, scalar_prefetch = 0 : i64, scratch_operands = 0 : i64, tpu.core_type = #tpu.core_type<tc>, window_params = [{transform_indices = @transform_0, window_bounds = array<i64: 512, 128>}, {pipeline_mode = #tpu.pipeline_mode<synchronous>, transform_indices = @transform_1, window_bounds = array<i64: 128, 128>}, {transform_indices = @transform_2, window_bounds = array<i64: 512, 128>}]} {
    %c0 = arith.constant 0 : index
    %c0_0 = arith.constant 0 : index
    %0 = vector.load %arg1[%c0, %c0_0] : memref<512x128xbf16, #tpu.memory_space<vmem>>, vector<512x128xbf16>
    %c0_1 = arith.constant 0 : index
    %c0_2 = arith.constant 0 : index
    %1 = vector.load %arg2[%c0_1, %c0_2] : memref<128x128xbf16, #tpu.memory_space<vmem>>, vector<128x128xbf16>
    %cst = arith.constant dense<0.000000e+00> : vector<512x128xf32>
    %2 = tpu.matmul %0, %1, %cst {dimension_numbers = #tpu.dot_dimension_numbers<[1], [0], [0], [1], [0, 0, 1, 1], [], []>} : vector<512x128xbf16>, vector<128x128xbf16>, vector<512x128xf32> -> vector<512x128xf32>
    %3 = arith.truncf %2 : vector<512x128xf32> to vector<512x128xbf16>
    %c0_3 = arith.constant 0 : index
    %c0_4 = arith.constant 0 : index
    %4 = vector.load %arg3[%c0_3, %c0_4] : memref<512x128xbf16, #tpu.memory_space<vmem>>, vector<512x128xbf16>
    tpu.vector_store %arg3[%c0_3, %c0_4], %3 {strides = array<i32>} : memref<512x128xbf16, #tpu.memory_space<vmem>>, vector<512x128xbf16>,
    return
  }
  func.func @transform_0(%arg0: i32) -> (i32, i32) {
    %c0_i32 = arith.constant 0 : i32
    %c0_i32_0 = arith.constant 0 : i32
    return %arg0, %c0_i32 : i32, i32
  }
  func.func @transform_1(%arg0: i32) -> (i32, i32) {
    %c0_i32 = arith.constant 0 : i32
    %c0_i32_0 = arith.constant 0 : i32
    %c0_i32_1 = arith.constant 0 : i32
    return %c0_i32, %c0_i32_0 : i32, i32
  }
  func.func @transform_2(%arg0: i32) -> (i32, i32) {
    %c0_i32 = arith.constant 0 : i32
    %c0_i32_0 = arith.constant 0 : i32
    return %arg0, %c0_i32 : i32, i32
  }
}

module attributes {stable_mosaic.version = 11 : i64} {
  func.func @gcn_main_kernel(%arg0: i32, %arg1: i32, %arg2: memref<1xi32, #tpu.memory_space<smem>>, %arg3: memref<1xi32, #tpu.memory_space<smem>>, %arg4: memref<512x512xbf16, #tpu.memory_space<vmem>>, %arg5: memref<512x128xbf16, #tpu.memory_space<vmem>>, %arg6: memref<1x128xf32, #tpu.memory_space<vmem>>, %arg7: memref<8x512xf32, #tpu.memory_space<vmem>>, %arg8: memref<1x8x128xf32, #tpu.memory_space<vmem>>, %arg9: memref<512x128xf32, #tpu.memory_space<vmem>>) attributes {dimension_semantics = [#tpu.dimension_semantics<parallel>, #tpu.dimension_semantics<arbitrary>], iteration_bounds = array<i64: 1, 1>, scalar_prefetch = 2 : i64, scratch_operands = 1 : i64, tpu.core_type = #tpu.core_type<tc>, window_params = [{transform_indices = @transform_0, window_bounds = array<i64: 512, 512>}, {pipeline_mode = #tpu.pipeline_mode<synchronous>, transform_indices = @transform_1, window_bounds = array<i64: 512, 128>}, {pipeline_mode = #tpu.pipeline_mode<synchronous>, transform_indices = @transform_2, window_bounds = array<i64: 1, 128>}, {transform_indices = @transform_3, window_bounds = array<i64: 8, 512>}, {transform_indices = @transform_4, window_bounds = array<i64: 1, 8, 128>}]} {
    %c0_i32 = arith.constant 0 : i32
    %0 = arith.cmpi eq, %arg1, %c0_i32 : i32
    %1 = arith.extui %0 : i1 to i32
    %c0_i32_0 = arith.constant 0 : i32
    %2 = arith.cmpi ne, %1, %c0_i32_0 : i32
    scf.if %2 {
      %cst = arith.constant 0.000000e+00 : f32
      %11 = vector.broadcast %cst : f32 to vector<512x128xf32>
      %c0 = arith.constant 0 : index
      %c0_4 = arith.constant 0 : index
      %12 = vector.load %arg9[%c0, %c0_4] : memref<512x128xf32, #tpu.memory_space<vmem>>, vector<512x128xf32>
      tpu.vector_store %arg9[%c0, %c0_4], %11 {strides = array<i32>} : memref<512x128xf32, #tpu.memory_space<vmem>>, vector<512x128xf32>,
    } else {
    }
    %3 = arith.index_cast %arg0 : i32 to index
    %4 = memref.load %arg2[%3] : memref<1xi32, #tpu.memory_space<smem>>
    %5 = arith.cmpi slt, %arg1, %4 : i32
    %6 = arith.extui %5 : i1 to i32
    %c0_i32_1 = arith.constant 0 : i32
    %7 = arith.cmpi ne, %6, %c0_i32_1 : i32
    scf.if %7 {
      %c1_i32 = arith.constant 1 : i32
      %11 = arith.muli %arg0, %c1_i32 : i32
      %12 = arith.addi %11, %arg1 : i32
      %13 = arith.index_cast %12 : i32 to index
      %14 = memref.load %arg3[%13] : memref<1xi32, #tpu.memory_space<smem>>
      %c512_i32 = arith.constant 512 : i32
      %15 = arith.muli %14, %c512_i32 : i32
      %16 = tpu.assume_multiple %15, 512 : i32
      %17 = arith.index_cast %16 : i32 to index
      %c0 = arith.constant 0 : index
      %18 = vector.load %arg5[%17, %c0] : memref<512x128xbf16, #tpu.memory_space<vmem>>, vector<512x128xbf16>
      %c0_4 = arith.constant 0 : index
      %c0_5 = arith.constant 0 : index
      %19 = vector.load %arg9[%c0_4, %c0_5] : memref<512x128xf32, #tpu.memory_space<vmem>>, vector<512x128xf32>
      %c0_6 = arith.constant 0 : index
      %c0_7 = arith.constant 0 : index
      %20 = vector.load %arg4[%c0_6, %c0_7] : memref<512x512xbf16, #tpu.memory_space<vmem>>, vector<512x512xbf16>
      %cst = arith.constant dense<0.000000e+00> : vector<512x128xf32>
      %21 = tpu.matmul %20, %18, %cst {dimension_numbers = #tpu.dot_dimension_numbers<[1], [0], [0], [1], [0, 0, 1, 1], [], []>} : vector<512x512xbf16>, vector<512x128xbf16>, vector<512x128xf32> -> vector<512x128xf32>
      %22 = arith.addf %19, %21 : vector<512x128xf32>
      %c0_8 = arith.constant 0 : index
      %c0_9 = arith.constant 0 : index
      %23 = vector.load %arg9[%c0_8, %c0_9] : memref<512x128xf32, #tpu.memory_space<vmem>>, vector<512x128xf32>
      tpu.vector_store %arg9[%c0_8, %c0_9], %22 {strides = array<i32>} : memref<512x128xf32, #tpu.memory_space<vmem>>, vector<512x128xf32>,
    } else {
    }
    %c0_i32_2 = arith.constant 0 : i32
    %8 = arith.cmpi eq, %arg1, %c0_i32_2 : i32
    %9 = arith.extui %8 : i1 to i32
    %c0_i32_3 = arith.constant 0 : i32
    %10 = arith.cmpi ne, %9, %c0_i32_3 : i32
    scf.if %10 {
      %c0 = arith.constant 0 : index
      %c0_4 = arith.constant 0 : index
      %11 = vector.load %arg9[%c0, %c0_4] : memref<512x128xf32, #tpu.memory_space<vmem>>, vector<512x128xf32>
      %c0_5 = arith.constant 0 : index
      %c0_6 = arith.constant 0 : index
      %12 = vector.load %arg6[%c0_5, %c0_6] : memref<1x128xf32, #tpu.memory_space<vmem>>, vector<1x128xf32>
      %13 = vector.broadcast %12 : vector<1x128xf32> to vector<512x128xf32>
      %14 = arith.addf %11, %13 : vector<512x128xf32>
      %cst = arith.constant 0.000000e+00 : f32
      %15 = vector.broadcast %cst : f32 to vector<512x128xf32>
      %16 = arith.maximumf %14, %15 : vector<512x128xf32>
      %c0_7 = arith.constant 0 : index
      %c0_8 = arith.constant 0 : index
      %17 = vector.load %arg7[%c0_7, %c0_8] : memref<8x512xf32, #tpu.memory_space<vmem>>, vector<8x512xf32>
      %cst_9 = arith.constant dense<0.000000e+00> : vector<8x128xf32>
      %18 = tpu.matmul %17, %16, %cst_9 {dimension_numbers = #tpu.dot_dimension_numbers<[1], [0], [0], [1], [0, 0, 1, 1], [], []>} : vector<8x512xf32>, vector<512x128xf32>, vector<8x128xf32> -> vector<8x128xf32>
      %c0_10 = arith.constant 0 : index
      %c0_11 = arith.constant 0 : index
      %c0_12 = arith.constant 0 : index
      %19 = vector.load %arg8[%c0_10, %c0_11, %c0_12] : memref<1x8x128xf32, #tpu.memory_space<vmem>>, vector<1x8x128xf32>
      %20 = vector.shape_cast %19 : vector<1x8x128xf32> to vector<8x128xf32>
      %21 = vector.shape_cast %18 : vector<8x128xf32> to vector<1x8x128xf32>
      tpu.vector_store %arg8[%c0_10, %c0_11, %c0_12], %21 {strides = array<i32>} : memref<1x8x128xf32, #tpu.memory_space<vmem>>, vector<1x8x128xf32>,
    } else {
    }
    return
  }
  func.func @transform_0(%arg0: i32, %arg1: i32, %arg2: memref<1xi32, #tpu.memory_space<smem>>, %arg3: memref<1xi32, #tpu.memory_space<smem>>) -> (i32, i32) {
    %c1_i32 = arith.constant 1 : i32
    %0 = arith.muli %arg0, %c1_i32 : i32
    %1 = arith.addi %0, %arg1 : i32
    %2 = arith.index_cast %1 : i32 to index
    %3 = memref.load %arg3[%2] : memref<1xi32, #tpu.memory_space<smem>>
    %c0_i32 = arith.constant 0 : i32
    return %arg0, %3 : i32, i32
  }
  func.func @transform_1(%arg0: i32, %arg1: i32, %arg2: memref<1xi32, #tpu.memory_space<smem>>, %arg3: memref<1xi32, #tpu.memory_space<smem>>) -> (i32, i32) {
    %c0_i32 = arith.constant 0 : i32
    %c0_i32_0 = arith.constant 0 : i32
    %c0_i32_1 = arith.constant 0 : i32
    return %c0_i32, %c0_i32_0 : i32, i32
  }
  func.func @transform_2(%arg0: i32, %arg1: i32, %arg2: memref<1xi32, #tpu.memory_space<smem>>, %arg3: memref<1xi32, #tpu.memory_space<smem>>) -> (i32, i32) {
    %c0_i32 = arith.constant 0 : i32
    %c0_i32_0 = arith.constant 0 : i32
    %c0_i32_1 = arith.constant 0 : i32
    return %c0_i32, %c0_i32_0 : i32, i32
  }
  func.func @transform_3(%arg0: i32, %arg1: i32, %arg2: memref<1xi32, #tpu.memory_space<smem>>, %arg3: memref<1xi32, #tpu.memory_space<smem>>) -> (i32, i32) {
    %c0_i32 = arith.constant 0 : i32
    %c0_i32_0 = arith.constant 0 : i32
    return %c0_i32, %arg0 : i32, i32
  }
  func.func @transform_4(%arg0: i32, %arg1: i32, %arg2: memref<1xi32, #tpu.memory_space<smem>>, %arg3: memref<1xi32, #tpu.memory_space<smem>>) -> (i32, i32, i32) {
    %c0_i32 = arith.constant 0 : i32
    %c0_i32_0 = arith.constant 0 : i32
    %c0_i32_1 = arith.constant 0 : i32
    return %arg0, %c0_i32, %c0_i32_0 : i32, i32, i32
  }
}

module attributes {stable_mosaic.version = 11 : i64} {
  func.func @finalize_kernel(%arg0: i32, %arg1: memref<1x8x128xf32, #tpu.memory_space<vmem>>, %arg2: memref<128x128xf32, #tpu.memory_space<vmem>>, %arg3: memref<1x128xf32, #tpu.memory_space<vmem>>, %arg4: memref<8x128xf32, #tpu.memory_space<vmem>>, %arg5: memref<8x128xf32, #tpu.memory_space<vmem>>) attributes {dimension_semantics = [#tpu.dimension_semantics<arbitrary>], iteration_bounds = array<i64: 1>, scalar_prefetch = 0 : i64, scratch_operands = 1 : i64, tpu.core_type = #tpu.core_type<tc>, window_params = [{transform_indices = @transform_0, window_bounds = array<i64: 1, 8, 128>}, {pipeline_mode = #tpu.pipeline_mode<synchronous>, transform_indices = @transform_1, window_bounds = array<i64: 128, 128>}, {pipeline_mode = #tpu.pipeline_mode<synchronous>, transform_indices = @transform_2, window_bounds = array<i64: 1, 128>}, {pipeline_mode = #tpu.pipeline_mode<synchronous>, transform_indices = @transform_3, window_bounds = array<i64: 8, 128>}]} {
    %c0_i32 = arith.constant 0 : i32
    %0 = arith.cmpi eq, %arg0, %c0_i32 : i32
    %1 = arith.extui %0 : i1 to i32
    %c0_i32_0 = arith.constant 0 : i32
    %2 = arith.cmpi ne, %1, %c0_i32_0 : i32
    scf.if %2 {
      %cst = arith.constant 0.000000e+00 : f32
      %11 = vector.broadcast %cst : f32 to vector<8x128xf32>
      %c0_9 = arith.constant 0 : index
      %c0_10 = arith.constant 0 : index
      %12 = vector.load %arg5[%c0_9, %c0_10] : memref<8x128xf32, #tpu.memory_space<vmem>>, vector<8x128xf32>
      tpu.vector_store %arg5[%c0_9, %c0_10], %11 {strides = array<i32>} : memref<8x128xf32, #tpu.memory_space<vmem>>, vector<8x128xf32>,
    } else {
    }
    %c0 = arith.constant 0 : index
    %c0_1 = arith.constant 0 : index
    %3 = vector.load %arg5[%c0, %c0_1] : memref<8x128xf32, #tpu.memory_space<vmem>>, vector<8x128xf32>
    %c0_2 = arith.constant 0 : index
    %c0_3 = arith.constant 0 : index
    %c0_4 = arith.constant 0 : index
    %4 = vector.load %arg1[%c0_2, %c0_3, %c0_4] : memref<1x8x128xf32, #tpu.memory_space<vmem>>, vector<1x8x128xf32>
    %5 = vector.shape_cast %4 : vector<1x8x128xf32> to vector<8x128xf32>
    %6 = arith.addf %3, %5 : vector<8x128xf32>
    %c0_5 = arith.constant 0 : index
    %c0_6 = arith.constant 0 : index
    %7 = vector.load %arg5[%c0_5, %c0_6] : memref<8x128xf32, #tpu.memory_space<vmem>>, vector<8x128xf32>
    tpu.vector_store %arg5[%c0_5, %c0_6], %6 {strides = array<i32>} : memref<8x128xf32, #tpu.memory_space<vmem>>, vector<8x128xf32>,
    %c0_i32_7 = arith.constant 0 : i32
    %8 = arith.cmpi eq, %arg0, %c0_i32_7 : i32
    %9 = arith.extui %8 : i1 to i32
    %c0_i32_8 = arith.constant 0 : i32
    %10 = arith.cmpi ne, %9, %c0_i32_8 : i32
    scf.if %10 {
      %c0_9 = arith.constant 0 : index
      %c0_10 = arith.constant 0 : index
      %11 = vector.load %arg5[%c0_9, %c0_10] : memref<8x128xf32, #tpu.memory_space<vmem>>, vector<8x128xf32>
      %c0_11 = arith.constant 0 : index
      %c0_12 = arith.constant 0 : index
      %12 = vector.load %arg2[%c0_11, %c0_12] : memref<128x128xf32, #tpu.memory_space<vmem>>, vector<128x128xf32>
      %cst = arith.constant dense<0.000000e+00> : vector<8x128xf32>
      %13 = tpu.matmul %11, %12, %cst {dimension_numbers = #tpu.dot_dimension_numbers<[1], [0], [0], [1], [0, 0, 1, 1], [], []>} : vector<8x128xf32>, vector<128x128xf32>, vector<8x128xf32> -> vector<8x128xf32>
      %c0_13 = arith.constant 0 : index
      %c0_14 = arith.constant 0 : index
      %14 = vector.load %arg3[%c0_13, %c0_14] : memref<1x128xf32, #tpu.memory_space<vmem>>, vector<1x128xf32>
      %15 = vector.broadcast %14 : vector<1x128xf32> to vector<8x128xf32>
      %16 = arith.addf %13, %15 : vector<8x128xf32>
      %17 = arith.negf %16 : vector<8x128xf32>
      %18 = math.exp %17 : vector<8x128xf32>
      %cst_15 = arith.constant 1.000000e+00 : f32
      %19 = vector.broadcast %cst_15 : f32 to vector<8x128xf32>
      %20 = arith.addf %19, %18 : vector<8x128xf32>
      %21 = arith.divf %19, %20 : vector<8x128xf32>
      %c0_16 = arith.constant 0 : index
      %c0_17 = arith.constant 0 : index
      %22 = vector.load %arg4[%c0_16, %c0_17] : memref<8x128xf32, #tpu.memory_space<vmem>>, vector<8x128xf32>
      tpu.vector_store %arg4[%c0_16, %c0_17], %21 {strides = array<i32>} : memref<8x128xf32, #tpu.memory_space<vmem>>, vector<8x128xf32>,
    } else {
    }
    return
  }
  func.func @transform_0(%arg0: i32) -> (i32, i32, i32) {
    %c0_i32 = arith.constant 0 : i32
    %c0_i32_0 = arith.constant 0 : i32
    %c0_i32_1 = arith.constant 0 : i32
    return %arg0, %c0_i32, %c0_i32_0 : i32, i32, i32
  }
  func.func @transform_1(%arg0: i32) -> (i32, i32) {
    %c0_i32 = arith.constant 0 : i32
    %c0_i32_0 = arith.constant 0 : i32
    %c0_i32_1 = arith.constant 0 : i32
    return %c0_i32, %c0_i32_0 : i32, i32
  }
  func.func @transform_2(%arg0: i32) -> (i32, i32) {
    %c0_i32 = arith.constant 0 : i32
    %c0_i32_0 = arith.constant 0 : i32
    %c0_i32_1 = arith.constant 0 : i32
    return %c0_i32, %c0_i32_0 : i32, i32
  }
  func.func @transform_3(%arg0: i32) -> (i32, i32) {
    %c0_i32 = arith.constant 0 : i32
    %c0_i32_0 = arith.constant 0 : i32
    %c0_i32_1 = arith.constant 0 : i32
    return %c0_i32, %c0_i32_0 : i32, i32
  }
}

</mosaic_0001>

<llo_original>
// kernel: gcn_forward.5
$region0: #{gcn_forward.5}
  #allocation0 [shape = 'u32[]', space=smem, size = 0x4, offset = 0x4, fixed_abs, tag = 'smem constant byte address 0x4 - core index']
  #allocation1 [shape = 'u32[144,128]{1,0:T(1,128)}', space=vmem, size = 0x12000, scoped, tag = 'internal scratch']
  #allocation2 [shape = 'f32[8,128]{1,0:T(8,128)}', space=vmem, size = 0x1000, scoped, tag = 'scratch operand']
  %s0 = inlined_call_operand.vmem [shape: f32[1,8,128], index: 0, kind: input, shape index: {}]
  %s1 = inlined_call_operand.vmem [shape: f32[128,128], index: 1, kind: input, shape index: {}]
  %s2 = inlined_call_operand.vmem [shape: f32[1,128], index: 2, kind: input, shape index: {}]
  %s3 = inlined_call_operand.vmem [shape: f32[8,128], index: 3, kind: output, shape index: {}]
  %s4 = sld [smem:[#allocation0]]
  $region30: #{gcn_forward.5} parent=0
    _
  %s6 = ssub.s32 1, %s4
  %s7 = scalar_select 0, %s6, %s4
  // Predicated region
  $region2: #{gcn_forward.5} parent=0 // pred_check
    _
  $region3: #{gcn_forward.5} parent=0 // pred_check_branch
    %9 = sbr.rel (0) target = $region5
  $region4: #{gcn_forward.5} parent=0 // pred_region
    _
  $region5: #{gcn_forward.5} parent=0 // pred_fallthru
    _
  // Predicated region
  $region6: #{gcn_forward.5} parent=0 // pred_check
    _
  $region7: #{gcn_forward.5} parent=0 // pred_check_branch
    %11 = sbr.rel (0) target = $region9
  $region8: #{gcn_forward.5} parent=0 // pred_region
    _
  $region9: #{gcn_forward.5} parent=0 // pred_fallthru
    _
  // Predicated region
  $region10: #{gcn_forward.5} parent=0 // pred_check
    _
  $region11: #{gcn_forward.5} parent=0 // pred_check_branch
    %13 = sbr.rel (0) target = $region13
  $region12: #{gcn_forward.5} parent=0 // pred_region
    _
  $region13: #{gcn_forward.5} parent=0 // pred_fallthru
    _
  %p14 = scmp.eq.s32.totalorder 0, 0
  // Predicated region
  $region14: #{gcn_forward.5} parent=0 // pred_check
    %p15 = pneg %p14
  $region15: #{gcn_forward.5} parent=0 // pred_check_branch
    %17 = sbr.rel (%p15) target = $region17
  $region16: #{gcn_forward.5} parent=0 // pred_region
    %18 = vst [vmem:[#allocation2] sm:$0xff] 0.0
  $region17: #{gcn_forward.5} parent=0 // pred_fallthru
    _
  %v19 = vld [vmem:[#allocation2] sm:$0xff]
  %v20 = vld [vmem:[%s0] sm:$0xff]
  %v21 = vadd.f32 %v19, %v20
  %22 = vst [vmem:[#allocation2] sm:$0xff] %v21
  // Predicated region
  $region18: #{gcn_forward.5} parent=0 // pred_check
    %p23 = pneg %p14
  $region19: #{gcn_forward.5} parent=0 // pred_check_branch
    %25 = sbr.rel (%p23) target = $region21
  $region20: #{gcn_forward.5} parent=0 // pred_region
    %v26 = vld [vmem:[#allocation2] sm:$0xff]
    %v27 = vld [vmem:[%s1] sm:$0xff]
    %v28 = vld [vmem:[%s1 + $0x8] sm:$0xff]
    %v29 = vld [vmem:[%s1 + $0x10] sm:$0xff]
    %v30 = vld [vmem:[%s1 + $0x18] sm:$0xff]
    %v31 = vld [vmem:[%s1 + $0x20] sm:$0xff]
    %v32 = vld [vmem:[%s1 + $0x28] sm:$0xff]
    %v33 = vld [vmem:[%s1 + $0x30] sm:$0xff]
    %v34 = vld [vmem:[%s1 + $0x38] sm:$0xff]
    %v35 = vld [vmem:[%s1 + $0x40] sm:$0xff]
    %v36 = vld [vmem:[%s1 + $0x48] sm:$0xff]
    %v37 = vld [vmem:[%s1 + $0x50] sm:$0xff]
    %v38 = vld [vmem:[%s1 + $0x58] sm:$0xff]
    %v39 = vld [vmem:[%s1 + $0x60] sm:$0xff]
    %v40 = vld [vmem:[%s1 + $0x68] sm:$0xff]
    %v41 = vld [vmem:[%s1 + $0x70] sm:$0xff]
    %v42 = vld [vmem:[%s1 + $0x78] sm:$0xff]
    %v43 = vld [vmem:[%s2] sm:$0x1]
    %v45 = vlaneseq
    %v46 = vshrl.u32 %v45, 7
    %v47 = vsub.s32 0, %v46
    %v48 = vrot.slane %v43, %v47
    %50 = vmatprep.subr.mxu0 0.0
    %51 = vmatpush1.msra.mxu0 %v42
    %52 = vmatprep.subr.mxu0 0.0
    %53 = vmatpush1.msra.mxu0 %v41
    %54 = vmatprep.subr.mxu0 0.0
    %55 = vmatpush1.msra.mxu0 %v40
    %56 = vmatprep.subr.mxu0 0.0
    %57 = vmatpush1.msra.mxu0 %v39
    %58 = vmatprep.subr.mxu0 0.0
    %59 = vmatpush1.msra.mxu0 %v38
    %60 = vmatprep.subr.mxu0 0.0
    %61 = vmatpush1.msra.mxu0 %v37
    %62 = vmatprep.subr.mxu0 0.0
    %63 = vmatpush1.msra.mxu0 %v36
    %64 = vmatprep.subr.mxu0 0.0
    %65 = vmatpush1.msra.mxu0 %v35
    %66 = vmatprep.subr.mxu0 0.0
    %67 = vmatpush1.msra.mxu0 %v34
    %68 = vmatprep.subr.mxu0 0.0
    %69 = vmatpush1.msra.mxu0 %v33
    %70 = vmatprep.subr.mxu0 0.0
    %71 = vmatpush1.msra.mxu0 %v32
    %72 = vmatprep.subr.mxu0 0.0
    %73 = vmatpush1.msra.mxu0 %v31
    %74 = vmatprep.subr.mxu0 0.0
    %75 = vmatpush1.msra.mxu0 %v30
    %76 = vmatprep.subr.mxu0 0.0
    %77 = vmatpush1.msra.mxu0 %v29
    %78 = vmatprep.subr.mxu0 0.0
    %79 = vmatpush1.msra.mxu0 %v28
    %80 = vmatprep.subr.mxu0 0.0
    %81 = vmatpush1.msra.mxu0 %v27
    %82 = vmatprep.subr.mxu0 0.0
    %83 = vmatpush2.msra.mxu0 0.0
    %84 = vmatprep.subr.mxu0 0.0
    %85 = vmatpush2.msra.mxu0 0.0
    %86 = vmatprep.subr.mxu0 0.0
    %87 = vmatpush2.msra.mxu0 0.0
    %88 = vmatprep.subr.mxu0 0.0
    %89 = vmatpush2.msra.mxu0 0.0
    %90 = vmatprep.subr.mxu0 0.0
    %91 = vmatpush2.msra.mxu0 0.0
    %92 = vmatprep.subr.mxu0 0.0
    %93 = vmatpush2.msra.mxu0 0.0
    %94 = vmatprep.subr.mxu0 0.0
    %95 = vmatpush2.msra.mxu0 0.0
    %96 = vmatprep.subr.mxu0 0.0
    %97 = vmatpush2.msra.mxu0 0.0
    %98 = vmatprep.subr.mxu0 0.0
    %99 = vmatpush2.msra.mxu0 0.0
    %100 = vmatprep.subr.mxu0 0.0
    %101 = vmatpush2.msra.mxu0 0.0
    %102 = vmatprep.subr.mxu0 0.0
    %103 = vmatpush2.msra.mxu0 0.0
    %104 = vmatprep.subr.mxu0 0.0
    %105 = vmatpush2.msra.mxu0 0.0
    %106 = vmatprep.subr.mxu0 0.0
    %107 = vmatpush2.msra.mxu0 0.0
    %108 = vmatprep.subr.mxu0 0.0
    %109 = vmatpush2.msra.mxu0 0.0
    %110 = vmatprep.subr.mxu0 0.0
    %111 = vmatpush2.msra.mxu0 0.0
    %112 = vmatprep.subr.mxu0 0.0
    %113 = vmatpush2.msra.mxu0 0.0
    %114 = vmatprep.mubr.f32.mxu0 0.0
    %115 = vmatmul.mubr.f32.gmra.mxu0 %v26
    %v116 = vpop.f32.mrf.mxu0
    %v117 = vadd.f32 %v48, %v116
    %v118 = vpop.f32.mrf.mxu0
    %119 = vdwg.mxu0
    %v120 = vxor.u32 %v117, 2147483648
    %v121 = vmul.f32 %v120, 1.442695
    %v122 = vpow.pop %v121
    %v123 = vadd.f32 %v122, 1.0
    %v124 = vrcp.pop %v123
    %v125 = vmul.f32 1.0, %v124
    %126 = vst [vmem:[%s3] sm:$0xff] %v125
  $region21: #{gcn_forward.5} parent=0 // pred_fallthru
    _
  // Predicated region
  $region22: #{gcn_forward.5} parent=0 // pred_check
    _
  $region23: #{gcn_forward.5} parent=0 // pred_check_branch
    %128 = sbr.rel (0) target = $region25
  $region24: #{gcn_forward.5} parent=0 // pred_region
    _
  $region25: #{gcn_forward.5} parent=0 // pred_fallthru
    _
  // Predicated region
  $region26: #{gcn_forward.5} parent=0 // pred_check
    _
  $region27: #{gcn_forward.5} parent=0 // pred_check_branch
    %130 = sbr.rel (0) target = $region29
  $region28: #{gcn_forward.5} parent=0 // pred_region
    _
  $region29: #{gcn_forward.5} parent=0 // pred_fallthru
    _

// kernel: gcn_forward.3
$region0: #{gcn_forward.3}
  #allocation0 [shape = 'u32[]', space=smem, size = 0x4, offset = 0x4, fixed_abs, tag = 'smem constant byte address 0x4 - core index']
  #allocation1 [shape = 'u32[144,128]{1,0:T(1,128)}', space=vmem, size = 0x12000, scoped, tag = 'internal scratch']
  %s0 = inlined_call_operand.vmem [shape: bf16[512,128], index: 0, kind: input, shape index: {}]
  %s1 = inlined_call_operand.vmem [shape: bf16[128,128], index: 1, kind: input, shape index: {}]
  %s2 = inlined_call_operand.vmem [shape: bf16[512,128], index: 2, kind: output, shape index: {}]
  %s3 = sld [smem:[#allocation0]]
  $region18: #{gcn_forward.3} parent=0
    _
  %s5 = ssub.s32 1, %s3
  %s6 = scalar_select 0, %s5, %s3
  // Predicated region
  $region2: #{gcn_forward.3} parent=0 // pred_check
    _
  $region3: #{gcn_forward.3} parent=0 // pred_check_branch
    %8 = sbr.rel (0) target = $region5
  $region4: #{gcn_forward.3} parent=0 // pred_region
    _
  $region5: #{gcn_forward.3} parent=0 // pred_fallthru
    _
  // Predicated region
  $region6: #{gcn_forward.3} parent=0 // pred_check
    _
  $region7: #{gcn_forward.3} parent=0 // pred_check_branch
    %10 = sbr.rel (0) target = $region9
  $region8: #{gcn_forward.3} parent=0 // pred_region
    _
  $region9: #{gcn_forward.3} parent=0 // pred_fallthru
    _
  %v12 = vld [vmem:[%s0] sm:$0xf]
  %v13 = vld [vmem:[%s0 + $0x4] sm:$0xf]
  %v14 = vld [vmem:[%s0 + $0x8] sm:$0xf]
  %v15 = vld [vmem:[%s0 + $0xc] sm:$0xf]
  %v16 = vld [vmem:[%s0 + $0x10] sm:$0xf]
  %v17 = vld [vmem:[%s0 + $0x14] sm:$0xf]
  %v18 = vld [vmem:[%s0 + $0x18] sm:$0xf]
  %v19 = vld [vmem:[%s0 + $0x1c] sm:$0xf]
  %v20 = vld [vmem:[%s0 + $0x20] sm:$0xf]
  %v21 = vld [vmem:[%s0 + $0x24] sm:$0xf]
  %v22 = vld [vmem:[%s0 + $0x28] sm:$0xf]
  %v23 = vld [vmem:[%s0 + $0x2c] sm:$0xf]
  %v24 = vld [vmem:[%s0 + $0x30] sm:$0xf]
  %v25 = vld [vmem:[%s0 + $0x34] sm:$0xf]
  %v26 = vld [vmem:[%s0 + $0x38] sm:$0xf]
  %v27 = vld [vmem:[%s0 + $0x3c] sm:$0xf]
  %v28 = vld [vmem:[%s0 + $0x40] sm:$0xf]
  %v29 = vld [vmem:[%s0 + $0x44] sm:$0xf]
  %v30 = vld [vmem:[%s0 + $0x48] sm:$0xf]
  %v31 = vld [vmem:[%s0 + $0x4c] sm:$0xf]
  %v32 = vld [vmem:[%s0 + $0x50] sm:$0xf]
  %v33 = vld [vmem:[%s0 + $0x54] sm:$0xf]
  %v34 = vld [vmem:[%s0 + $0x58] sm:$0xf]
  %v35 = vld [vmem:[%s0 + $0x5c] sm:$0xf]
  %v36 = vld [vmem:[%s0 + $0x60] sm:$0xf]
  %v37 = vld [vmem:[%s0 + $0x64] sm:$0xf]
  %v38 = vld [vmem:[%s0 + $0x68] sm:$0xf]
  %v39 = vld [vmem:[%s0 + $0x6c] sm:$0xf]
  %v40 = vld [vmem:[%s0 + $0x70] sm:$0xf]
  %v41 = vld [vmem:[%s0 + $0x74] sm:$0xf]
  %v42 = vld [vmem:[%s0 + $0x78] sm:$0xf]
  %v43 = vld [vmem:[%s0 + $0x7c] sm:$0xf]
  %v44 = vld [vmem:[%s0 + $0x80] sm:$0xf]
  %v45 = vld [vmem:[%s0 + $0x84] sm:$0xf]
  %v46 = vld [vmem:[%s0 + $0x88] sm:$0xf]
  %v47 = vld [vmem:[%s0 + $0x8c] sm:$0xf]
  %v48 = vld [vmem:[%s0 + $0x90] sm:$0xf]
  %v49 = vld [vmem:[%s0 + $0x94] sm:$0xf]
  %v50 = vld [vmem:[%s0 + $0x98] sm:$0xf]
  %v51 = vld [vmem:[%s0 + $0x9c] sm:$0xf]
  %v52 = vld [vmem:[%s0 + $0xa0] sm:$0xf]
  %v53 = vld [vmem:[%s0 + $0xa4] sm:$0xf]
  %v54 = vld [vmem:[%s0 + $0xa8] sm:$0xf]
  %v55 = vld [vmem:[%s0 + $0xac] sm:$0xf]
  %v56 = vld [vmem:[%s0 + $0xb0] sm:$0xf]
  %v57 = vld [vmem:[%s0 + $0xb4] sm:$0xf]
  %v58 = vld [vmem:[%s0 + $0xb8] sm:$0xf]
  %v59 = vld [vmem:[%s0 + $0xbc] sm:$0xf]
  %v60 = vld [vmem:[%s0 + $0xc0] sm:$0xf]
  %v61 = vld [vmem:[%s0 + $0xc4] sm:$0xf]
  %v62 = vld [vmem:[%s0 + $0xc8] sm:$0xf]
  %v63 = vld [vmem:[%s0 + $0xcc] sm:$0xf]
  %v64 = vld [vmem:[%s0 + $0xd0] sm:$0xf]
  %v65 = vld [vmem:[%s0 + $0xd4] sm:$0xf]
  %v66 = vld [vmem:[%s0 + $0xd8] sm:$0xf]
  %v67 = vld [vmem:[%s0 + $0xdc] sm:$0xf]
  %v68 = vld [vmem:[%s0 + $0xe0] sm:$0xf]
  %v69 = vld [vmem:[%s0 + $0xe4] sm:$0xf]
  %v70 = vld [vmem:[%s0 + $0xe8] sm:$0xf]
  %v71 = vld [vmem:[%s0 + $0xec] sm:$0xf]
  %v72 = vld [vmem:[%s0 + $0xf0] sm:$0xf]
  %v73 = vld [vmem:[%s0 + $0xf4] sm:$0xf]
  %v74 = vld [vmem:[%s0 + $0xf8] sm:$0xf]
  %v75 = vld [vmem:[%s0 + $0xfc] sm:$0xf]
  %v76 = vld [vmem:[%s1] sm:$0xf]
  %v77 = vld [vmem:[%s1 + $0x4] sm:$0xf]
  %v78 = vld [vmem:[%s1 + $0x8] sm:$0xf]
  %v79 = vld [vmem:[%s1 + $0xc] sm:$0xf]
  %v80 = vld [vmem:[%s1 + $0x10] sm:$0xf]
  %v81 = vld [vmem:[%s1 + $0x14] sm:$0xf]
  %v82 = vld [vmem:[%s1 + $0x18] sm:$0xf]
  %v83 = vld [vmem:[%s1 + $0x1c] sm:$0xf]
  %v84 = vld [vmem:[%s1 + $0x20] sm:$0xf]
  %v85 = vld [vmem:[%s1 + $0x24] sm:$0xf]
  %v86 = vld [vmem:[%s1 + $0x28] sm:$0xf]
  %v87 = vld [vmem:[%s1 + $0x2c] sm:$0xf]
  %v88 = vld [vmem:[%s1 + $0x30] sm:$0xf]
  %v89 = vld [vmem:[%s1 + $0x34] sm:$0xf]
  %v90 = vld [vmem:[%s1 + $0x38] sm:$0xf]
  %v91 = vld [vmem:[%s1 + $0x3c] sm:$0xf]
  %v156 = vunpack.c.l.b16 %v12
  %v157 = vunpack.c.l.b16 %v13
  %v158 = vunpack.c.l.b16 %v14
  %v159 = vunpack.c.l.b16 %v15
  %v160 = vunpack.c.l.b16 %v16
  %v161 = vunpack.c.l.b16 %v17
  %v162 = vunpack.c.l.b16 %v18
  %v163 = vunpack.c.l.b16 %v19
  %v164 = vunpack.c.l.b16 %v20
  %v165 = vunpack.c.l.b16 %v21
  %v166 = vunpack.c.l.b16 %v22
  %v167 = vunpack.c.l.b16 %v23
  %v168 = vunpack.c.l.b16 %v24
  %v169 = vunpack.c.l.b16 %v25
  %v170 = vunpack.c.l.b16 %v26
  %v171 = vunpack.c.l.b16 %v27
  %v172 = vunpack.c.l.b16 %v28
  %v173 = vunpack.c.l.b16 %v29
  %v174 = vunpack.c.l.b16 %v30
  %v175 = vunpack.c.l.b16 %v31
  %v176 = vunpack.c.l.b16 %v32
  %v177 = vunpack.c.l.b16 %v33
  %v178 = vunpack.c.l.b16 %v34
  %v179 = vunpack.c.l.b16 %v35
  %v180 = vunpack.c.l.b16 %v36
  %v181 = vunpack.c.l.b16 %v37
  %v182 = vunpack.c.l.b16 %v38
  %v183 = vunpack.c.l.b16 %v39
  %v184 = vunpack.c.l.b16 %v40
  %v185 = vunpack.c.l.b16 %v41
  %v186 = vunpack.c.l.b16 %v42
  %v187 = vunpack.c.l.b16 %v43
  %v188 = vunpack.c.l.b16 %v44
  %v189 = vunpack.c.l.b16 %v45
  %v190 = vunpack.c.l.b16 %v46
  %v191 = vunpack.c.l.b16 %v47
  %v192 = vunpack.c.l.b16 %v48
  %v193 = vunpack.c.l.b16 %v49
  %v194 = vunpack.c.l.b16 %v50
  %v195 = vunpack.c.l.b16 %v51
  %v196 = vunpack.c.l.b16 %v52
  %v197 = vunpack.c.l.b16 %v53
  %v198 = vunpack.c.l.b16 %v54
  %v199 = vunpack.c.l.b16 %v55
  %v200 = vunpack.c.l.b16 %v56
  %v201 = vunpack.c.l.b16 %v57
  %v202 = vunpack.c.l.b16 %v58
  %v203 = vunpack.c.l.b16 %v59
  %v204 = vunpack.c.l.b16 %v60
  %v205 = vunpack.c.l.b16 %v61
  %v206 = vunpack.c.l.b16 %v62
  %v207 = vunpack.c.l.b16 %v63
  %v208 = vunpack.c.l.b16 %v64
  %v209 = vunpack.c.l.b16 %v65
  %v210 = vunpack.c.l.b16 %v66
  %v211 = vunpack.c.l.b16 %v67
  %v212 = vunpack.c.l.b16 %v68
  %v213 = vunpack.c.l.b16 %v69
  %v214 = vunpack.c.l.b16 %v70
  %v215 = vunpack.c.l.b16 %v71
  %v216 = vunpack.c.l.b16 %v72
  %v217 = vunpack.c.l.b16 %v73
  %v218 = vunpack.c.l.b16 %v74
  %v219 = vunpack.c.l.b16 %v75
  %v220 = vpack.c.b16 %v157, %v156
  %v221 = vpack.c.b16 %v159, %v158
  %v222 = vpack.c.b16 %v161, %v160
  %v223 = vpack.c.b16 %v163, %v162
  %v224 = vpack.c.b16 %v165, %v164
  %v225 = vpack.c.b16 %v167, %v166
  %v226 = vpack.c.b16 %v169, %v168
  %v227 = vpack.c.b16 %v171, %v170
  %v228 = vpack.c.b16 %v173, %v172
  %v229 = vpack.c.b16 %v175, %v174
  %v230 = vpack.c.b16 %v177, %v176
  %v231 = vpack.c.b16 %v179, %v178
  %v232 = vpack.c.b16 %v181, %v180
  %v233 = vpack.c.b16 %v183, %v182
  %v234 = vpack.c.b16 %v185, %v184
  %v235 = vpack.c.b16 %v187, %v186
  %v236 = vpack.c.b16 %v189, %v188
  %v237 = vpack.c.b16 %v191, %v190
  %v238 = vpack.c.b16 %v193, %v192
  %v239 = vpack.c.b16 %v195, %v194
  %v240 = vpack.c.b16 %v197, %v196
  %v241 = vpack.c.b16 %v199, %v198
  %v242 = vpack.c.b16 %v201, %v200
  %v243 = vpack.c.b16 %v203, %v202
  %v244 = vpack.c.b16 %v205, %v204
  %v245 = vpack.c.b16 %v207, %v206
  %v246 = vpack.c.b16 %v209, %v208
  %v247 = vpack.c.b16 %v211, %v210
  %v248 = vpack.c.b16 %v213, %v212
  %v249 = vpack.c.b16 %v215, %v214
  %v250 = vpack.c.b16 %v217, %v216
  %v251 = vpack.c.b16 %v219, %v218
  %v300 = vunpack.c.l.b16 %v76
  %v301 = vunpack.c.l.b16 %v77
  %v302 = vunpack.c.l.b16 %v78
  %v303 = vunpack.c.l.b16 %v79
  %v304 = vunpack.c.l.b16 %v80
  %v305 = vunpack.c.l.b16 %v81
  %v306 = vunpack.c.l.b16 %v82
  %v307 = vunpack.c.l.b16 %v83
  %v308 = vunpack.c.l.b16 %v84
  %v309 = vunpack.c.l.b16 %v85
  %v310 = vunpack.c.l.b16 %v86
  %v311 = vunpack.c.l.b16 %v87
  %v312 = vunpack.c.l.b16 %v88
  %v313 = vunpack.c.l.b16 %v89
  %v314 = vunpack.c.l.b16 %v90
  %v315 = vunpack.c.l.b16 %v91
  %v316 = vpack.c.b16 %v301, %v300
  %v317 = vpack.c.b16 %v303, %v302
  %v318 = vpack.c.b16 %v305, %v304
  %v319 = vpack.c.b16 %v307, %v306
  %v320 = vpack.c.b16 %v309, %v308
  %v321 = vpack.c.b16 %v311, %v310
  %v322 = vpack.c.b16 %v313, %v312
  %v323 = vpack.c.b16 %v315, %v314
  %332 = vmatprep.subr.bf16.mxu0 0
  %333 = vmatpush1.bf16.msra.mxu0 %v323
  %334 = vmatprep.subr.bf16.mxu0 0
  %335 = vmatpush1.bf16.msra.mxu0 %v322
  %336 = vmatprep.subr.bf16.mxu0 0
  %337 = vmatpush1.bf16.msra.mxu0 %v321
  %338 = vmatprep.subr.bf16.mxu0 0
  %339 = vmatpush1.bf16.msra.mxu0 %v320
  %340 = vmatprep.subr.bf16.mxu0 0
  %341 = vmatpush1.bf16.msra.mxu0 %v319
  %342 = vmatprep.subr.bf16.mxu0 0
  %343 = vmatpush1.bf16.msra.mxu0 %v318
  %344 = vmatprep.subr.bf16.mxu0 0
  %345 = vmatpush1.bf16.msra.mxu0 %v317
  %346 = vmatprep.subr.bf16.mxu0 0
  %347 = vmatpush1.bf16.msra.mxu0 %v316
  %348 = vmatprep.subr.bf16.mxu0 0
  %349 = vmatpush2.bf16.msra.mxu0 0
  %350 = vmatprep.subr.bf16.mxu0 0
  %351 = vmatpush2.bf16.msra.mxu0 0
  %352 = vmatprep.subr.bf16.mxu0 0
  %353 = vmatpush2.bf16.msra.mxu0 0
  %354 = vmatprep.subr.bf16.mxu0 0
  %355 = vmatpush2.bf16.msra.mxu0 0
  %356 = vmatprep.subr.bf16.mxu0 0
  %357 = vmatpush2.bf16.msra.mxu0 0
  %358 = vmatprep.subr.bf16.mxu0 0
  %359 = vmatpush2.bf16.msra.mxu0 0
  %360 = vmatprep.subr.bf16.mxu0 0
  %361 = vmatpush2.bf16.msra.mxu0 0
  %362 = vmatprep.subr.bf16.mxu0 0
  %363 = vmatpush2.bf16.msra.mxu0 0
  %364 = vmatprep.mubr.bf16.mxu0 0
  %365 = vmatmul.mubr.bf16.gmra.mxu0 %v220
  %v366 = vpop.f32.mrf.mxu0
  %v367 = vadd.f32 0.0, %v366
  %v368 = vpop.f32.mrf.mxu0
  %v369 = vpop.f32.mrf.mxu0
  %v370 = vadd.f32 0.0, %v369
  %v371 = vpop.f32.mrf.mxu0
  %372 = vmatprep.mubr.bf16.mxu0 0
  %373 = vmatmul.mubr.bf16.gmra.mxu0 %v221
  %v374 = vpop.f32.mrf.mxu0
  %v375 = vadd.f32 0.0, %v374
  %v376 = vpop.f32.mrf.mxu0
  %v377 = vpop.f32.mrf.mxu0
  %v378 = vadd.f32 0.0, %v377
  %v379 = vpop.f32.mrf.mxu0
  %380 = vmatprep.mubr.bf16.mxu0 0
  %381 = vmatmul.mubr.bf16.gmra.mxu0 %v222
  %v382 = vpop.f32.mrf.mxu0
  %v383 = vadd.f32 0.0, %v382
  %v384 = vpop.f32.mrf.mxu0
  %v385 = vpop.f32.mrf.mxu0
  %v386 = vadd.f32 0.0, %v385
  %v387 = vpop.f32.mrf.mxu0
  %388 = vmatprep.mubr.bf16.mxu0 0
  %389 = vmatmul.mubr.bf16.gmra.mxu0 %v223
  %v390 = vpop.f32.mrf.mxu0
  %v391 = vadd.f32 0.0, %v390
  %v392 = vpop.f32.mrf.mxu0
  %v393 = vpop.f32.mrf.mxu0
  %v394 = vadd.f32 0.0, %v393
  %v395 = vpop.f32.mrf.mxu0
  %396 = vmatprep.mubr.bf16.mxu0 0
  %397 = vmatmul.mubr.bf16.gmra.mxu0 %v224
  %v398 = vpop.f32.mrf.mxu0
  %v399 = vadd.f32 0.0, %v398
  %v400 = vpop.f32.mrf.mxu0
  %v401 = vpop.f32.mrf.mxu0
  %v402 = vadd.f32 0.0, %v401
  %v403 = vpop.f32.mrf.mxu0
  %404 = vmatprep.mubr.bf16.mxu0 0
  %405 = vmatmul.mubr.bf16.gmra.mxu0 %v225
  %v406 = vpop.f32.mrf.mxu0
  %v407 = vadd.f32 0.0, %v406
  %v408 = vpop.f32.mrf.mxu0
  %v409 = vpop.f32.mrf.mxu0
  %v410 = vadd.f32 0.0, %v409
  %v411 = vpop.f32.mrf.mxu0
  %412 = vmatprep.mubr.bf16.mxu0 0
  %413 = vmatmul.mubr.bf16.gmra.mxu0 %v226
  %v414 = vpop.f32.mrf.mxu0
  %v415 = vadd.f32 0.0, %v414
  %v416 = vpop.f32.mrf.mxu0
  %v417 = vpop.f32.mrf.mxu0
  %v418 = vadd.f32 0.0, %v417
  %v419 = vpop.f32.mrf.mxu0
  %420 = vmatprep.mubr.bf16.mxu0 0
  %421 = vmatmul.mubr.bf16.gmra.mxu0 %v227
  %v422 = vpop.f32.mrf.mxu0
  %v423 = vadd.f32 0.0, %v422
  %v424 = vpop.f32.mrf.mxu0
  %v425 = vpop.f32.mrf.mxu0
  %v426 = vadd.f32 0.0, %v425
  %v427 = vpop.f32.mrf.mxu0
  %428 = vmatprep.mubr.bf16.mxu0 0
  %429 = vmatmul.mubr.bf16.gmra.mxu0 %v228
  %v430 = vpop.f32.mrf.mxu0
  %v431 = vadd.f32 0.0, %v430
  %v432 = vpop.f32.mrf.mxu0
  %v433 = vpop.f32.mrf.mxu0
  %v434 = vadd.f32 0.0, %v433
  %v435 = vpop.f32.mrf.mxu0
  %436 = vmatprep.mubr.bf16.mxu0 0
  %437 = vmatmul.mubr.bf16.gmra.mxu0 %v229
  %v438 = vpop.f32.mrf.mxu0
  %v439 = vadd.f32 0.0, %v438
  %v440 = vpop.f32.mrf.mxu0
  %v441 = vpop.f32.mrf.mxu0
  %v442 = vadd.f32 0.0, %v441
  %v443 = vpop.f32.mrf.mxu0
  %444 = vmatprep.mubr.bf16.mxu0 0
  %445 = vmatmul.mubr.bf16.gmra.mxu0 %v230
  %v446 = vpop.f32.mrf.mxu0
  %v447 = vadd.f32 0.0, %v446
  %v448 = vpop.f32.mrf.mxu0
  %v449 = vpop.f32.mrf.mxu0
  %v450 = vadd.f32 0.0, %v449
  %v451 = vpop.f32.mrf.mxu0
  %452 = vmatprep.mubr.bf16.mxu0 0
  %453 = vmatmul.mubr.bf16.gmra.mxu0 %v231
  %v454 = vpop.f32.mrf.mxu0
  %v455 = vadd.f32 0.0, %v454
  %v456 = vpop.f32.mrf.mxu0
  %v457 = vpop.f32.mrf.mxu0
  %v458 = vadd.f32 0.0, %v457
  %v459 = vpop.f32.mrf.mxu0
  %460 = vmatprep.mubr.bf16.mxu0 0
  %461 = vmatmul.mubr.bf16.gmra.mxu0 %v232
  %v462 = vpop.f32.mrf.mxu0
  %v463 = vadd.f32 0.0, %v462
  %v464 = vpop.f32.mrf.mxu0
  %v465 = vpop.f32.mrf.mxu0
  %v466 = vadd.f32 0.0, %v465
  %v467 = vpop.f32.mrf.mxu0
  %468 = vmatprep.mubr.bf16.mxu0 0
  %469 = vmatmul.mubr.bf16.gmra.mxu0 %v233
  %v470 = vpop.f32.mrf.mxu0
  %v471 = vadd.f32 0.0, %v470
  %v472 = vpop.f32.mrf.mxu0
  %v473 = vpop.f32.mrf.mxu0
  %v474 = vadd.f32 0.0, %v473
  %v475 = vpop.f32.mrf.mxu0
  %476 = vmatprep.mubr.bf16.mxu0 0
  %477 = vmatmul.mubr.bf16.gmra.mxu0 %v234
  %v478 = vpop.f32.mrf.mxu0
  %v479 = vadd.f32 0.0, %v478
  %v480 = vpop.f32.mrf.mxu0
  %v481 = vpop.f32.mrf.mxu0
  %v482 = vadd.f32 0.0, %v481
  %v483 = vpop.f32.mrf.mxu0
  %484 = vmatprep.mubr.bf16.mxu0 0
  %485 = vmatmul.mubr.bf16.gmra.mxu0 %v235
  %v486 = vpop.f32.mrf.mxu0
  %v487 = vadd.f32 0.0, %v486
  %v488 = vpop.f32.mrf.mxu0
  %v489 = vpop.f32.mrf.mxu0
  %v490 = vadd.f32 0.0, %v489
  %v491 = vpop.f32.mrf.mxu0
  %492 = vmatprep.mubr.bf16.mxu0 0
  %493 = vmatmul.mubr.bf16.gmra.mxu0 %v236
  %v494 = vpop.f32.mrf.mxu0
  %v495 = vadd.f32 0.0, %v494
  %v496 = vpop.f32.mrf.mxu0
  %v497 = vpop.f32.mrf.mxu0
  %v498 = vadd.f32 0.0, %v497
  %v499 = vpop.f32.mrf.mxu0
  %500 = vmatprep.mubr.bf16.mxu0 0
  %501 = vmatmul.mubr.bf16.gmra.mxu0 %v237
  %v502 = vpop.f32.mrf.mxu0
  %v503 = vadd.f32 0.0, %v502
  %v504 = vpop.f32.mrf.mxu0
  %v505 = vpop.f32.mrf.mxu0
  %v506 = vadd.f32 0.0, %v505
  %v507 = vpop.f32.mrf.mxu0
  %508 = vmatprep.mubr.bf16.mxu0 0
  %509 = vmatmul.mubr.bf16.gmra.mxu0 %v238
  %v510 = vpop.f32.mrf.mxu0
  %v511 = vadd.f32 0.0, %v510
  %v512 = vpop.f32.mrf.mxu0
  %v513 = vpop.f32.mrf.mxu0
  %v514 = vadd.f32 0.0, %v513
  %v515 = vpop.f32.mrf.mxu0
  %516 = vmatprep.mubr.bf16.mxu0 0
  %517 = vmatmul.mubr.bf16.gmra.mxu0 %v239
  %v518 = vpop.f32.mrf.mxu0
  %v519 = vadd.f32 0.0, %v518
  %v520 = vpop.f32.mrf.mxu0
  %v521 = vpop.f32.mrf.mxu0
  %v522 = vadd.f32 0.0, %v521
  %v523 = vpop.f32.mrf.mxu0
  %524 = vmatprep.mubr.bf16.mxu0 0
  %525 = vmatmul.mubr.bf16.gmra.mxu0 %v240
  %v526 = vpop.f32.mrf.mxu0
  %v527 = vadd.f32 0.0, %v526
  %v528 = vpop.f32.mrf.mxu0
  %v529 = vpop.f32.mrf.mxu0
  %v530 = vadd.f32 0.0, %v529
  %v531 = vpop.f32.mrf.mxu0
  %532 = vmatprep.mubr.bf16.mxu0 0
  %533 = vmatmul.mubr.bf16.gmra.mxu0 %v241
  %v534 = vpop.f32.mrf.mxu0
  %v535 = vadd.f32 0.0, %v534
  %v536 = vpop.f32.mrf.mxu0
  %v537 = vpop.f32.mrf.mxu0
  %v538 = vadd.f32 0.0, %v537
  %v539 = vpop.f32.mrf.mxu0
  %540 = vmatprep.mubr.bf16.mxu0 0
  %541 = vmatmul.mubr.bf16.gmra.mxu0 %v242
  %v542 = vpop.f32.mrf.mxu0
  %v543 = vadd.f32 0.0, %v542
  %v544 = vpop.f32.mrf.mxu0
  %v545 = vpop.f32.mrf.mxu0
  %v546 = vadd.f32 0.0, %v545
  %v547 = vpop.f32.mrf.mxu0
  %548 = vmatprep.mubr.bf16.mxu0 0
  %549 = vmatmul.mubr.bf16.gmra.mxu0 %v243
  %v550 = vpop.f32.mrf.mxu0
  %v551 = vadd.f32 0.0, %v550
  %v552 = vpop.f32.mrf.mxu0
  %v553 = vpop.f32.mrf.mxu0
  %v554 = vadd.f32 0.0, %v553
  %v555 = vpop.f32.mrf.mxu0
  %556 = vmatprep.mubr.bf16.mxu0 0
  %557 = vmatmul.mubr.bf16.gmra.mxu0 %v244
  %v558 = vpop.f32.mrf.mxu0
  %v559 = vadd.f32 0.0, %v558
  %v560 = vpop.f32.mrf.mxu0
  %v561 = vpop.f32.mrf.mxu0
  %v562 = vadd.f32 0.0, %v561
  %v563 = vpop.f32.mrf.mxu0
  %564 = vmatprep.mubr.bf16.mxu0 0
  %565 = vmatmul.mubr.bf16.gmra.mxu0 %v245
  %v566 = vpop.f32.mrf.mxu0
  %v567 = vadd.f32 0.0, %v566
  %v568 = vpop.f32.mrf.mxu0
  %v569 = vpop.f32.mrf.mxu0
  %v570 = vadd.f32 0.0, %v569
  %v571 = vpop.f32.mrf.mxu0
  %572 = vmatprep.mubr.bf16.mxu0 0
  %573 = vmatmul.mubr.bf16.gmra.mxu0 %v246
  %v574 = vpop.f32.mrf.mxu0
  %v575 = vadd.f32 0.0, %v574
  %v576 = vpop.f32.mrf.mxu0
  %v577 = vpop.f32.mrf.mxu0
  %v578 = vadd.f32 0.0, %v577
  %v579 = vpop.f32.mrf.mxu0
  %580 = vmatprep.mubr.bf16.mxu0 0
  %581 = vmatmul.mubr.bf16.gmra.mxu0 %v247
  %v582 = vpop.f32.mrf.mxu0
  %v583 = vadd.f32 0.0, %v582
  %v584 = vpop.f32.mrf.mxu0
  %v585 = vpop.f32.mrf.mxu0
  %v586 = vadd.f32 0.0, %v585
  %v587 = vpop.f32.mrf.mxu0
  %588 = vmatprep.mubr.bf16.mxu0 0
  %589 = vmatmul.mubr.bf16.gmra.mxu0 %v248
  %v590 = vpop.f32.mrf.mxu0
  %v591 = vadd.f32 0.0, %v590
  %v592 = vpop.f32.mrf.mxu0
  %v593 = vpop.f32.mrf.mxu0
  %v594 = vadd.f32 0.0, %v593
  %v595 = vpop.f32.mrf.mxu0
  %596 = vmatprep.mubr.bf16.mxu0 0
  %597 = vmatmul.mubr.bf16.gmra.mxu0 %v249
  %v598 = vpop.f32.mrf.mxu0
  %v599 = vadd.f32 0.0, %v598
  %v600 = vpop.f32.mrf.mxu0
  %v601 = vpop.f32.mrf.mxu0
  %v602 = vadd.f32 0.0, %v601
  %v603 = vpop.f32.mrf.mxu0
  %604 = vmatprep.mubr.bf16.mxu0 0
  %605 = vmatmul.mubr.bf16.gmra.mxu0 %v250
  %v606 = vpop.f32.mrf.mxu0
  %v607 = vadd.f32 0.0, %v606
  %v608 = vpop.f32.mrf.mxu0
  %v609 = vpop.f32.mrf.mxu0
  %v610 = vadd.f32 0.0, %v609
  %v611 = vpop.f32.mrf.mxu0
  %612 = vmatprep.mubr.bf16.mxu0 0
  %613 = vmatmul.mubr.bf16.gmra.mxu0 %v251
  %v614 = vpop.f32.mrf.mxu0
  %v615 = vadd.f32 0.0, %v614
  %v616 = vpop.f32.mrf.mxu0
  %v617 = vpop.f32.mrf.mxu0
  %v618 = vadd.f32 0.0, %v617
  %v619 = vpop.f32.mrf.mxu0
  %620 = vdwg.mxu0
  %v621 = vpack.c.bf16 %v370, %v367
  %v622 = vpack.c.bf16 %v378, %v375
  %v623 = vpack.c.bf16 %v386, %v383
  %v624 = vpack.c.bf16 %v394, %v391
  %v625 = vpack.c.bf16 %v402, %v399
  %v626 = vpack.c.bf16 %v410, %v407
  %v627 = vpack.c.bf16 %v418, %v415
  %v628 = vpack.c.bf16 %v426, %v423
  %v629 = vpack.c.bf16 %v434, %v431
  %v630 = vpack.c.bf16 %v442, %v439
  %v631 = vpack.c.bf16 %v450, %v447
  %v632 = vpack.c.bf16 %v458, %v455
  %v633 = vpack.c.bf16 %v466, %v463
  %v634 = vpack.c.bf16 %v474, %v471
  %v635 = vpack.c.bf16 %v482, %v479
  %v636 = vpack.c.bf16 %v490, %v487
  %v637 = vpack.c.bf16 %v498, %v495
  %v638 = vpack.c.bf16 %v506, %v503
  %v639 = vpack.c.bf16 %v514, %v511
  %v640 = vpack.c.bf16 %v522, %v519
  %v641 = vpack.c.bf16 %v530, %v527
  %v642 = vpack.c.bf16 %v538, %v535
  %v643 = vpack.c.bf16 %v546, %v543
  %v644 = vpack.c.bf16 %v554, %v551
  %v645 = vpack.c.bf16 %v562, %v559
  %v646 = vpack.c.bf16 %v570, %v567
  %v647 = vpack.c.bf16 %v578, %v575
  %v648 = vpack.c.bf16 %v586, %v583
  %v649 = vpack.c.bf16 %v594, %v591
  %v650 = vpack.c.bf16 %v602, %v599
  %v651 = vpack.c.bf16 %v610, %v607
  %v652 = vpack.c.bf16 %v618, %v615
  %v685 = vunpack.c.l.b16 %v621
  %v686 = vunpack.c.h.b16 %v621
  %v687 = vunpack.c.l.b16 %v622
  %v688 = vunpack.c.h.b16 %v622
  %v689 = vunpack.c.l.b16 %v623
  %v690 = vunpack.c.h.b16 %v623
  %v691 = vunpack.c.l.b16 %v624
  %v692 = vunpack.c.h.b16 %v624
  %v693 = vunpack.c.l.b16 %v625
  %v694 = vunpack.c.h.b16 %v625
  %v695 = vunpack.c.l.b16 %v626
  %v696 = vunpack.c.h.b16 %v626
  %v697 = vunpack.c.l.b16 %v627
  %v698 = vunpack.c.h.b16 %v627
  %v699 = vunpack.c.l.b16 %v628
  %v700 = vunpack.c.h.b16 %v628
  %v701 = vunpack.c.l.b16 %v629
  %v702 = vunpack.c.h.b16 %v629
  %v703 = vunpack.c.l.b16 %v630
  %v704 = vunpack.c.h.b16 %v630
  %v705 = vunpack.c.l.b16 %v631
  %v706 = vunpack.c.h.b16 %v631
  %v707 = vunpack.c.l.b16 %v632
  %v708 = vunpack.c.h.b16 %v632
  %v709 = vunpack.c.l.b16 %v633
  %v710 = vunpack.c.h.b16 %v633
  %v711 = vunpack.c.l.b16 %v634
  %v712 = vunpack.c.h.b16 %v634
  %v713 = vunpack.c.l.b16 %v635
  %v714 = vunpack.c.h.b16 %v635
  %v715 = vunpack.c.l.b16 %v636
  %v716 = vunpack.c.h.b16 %v636
  %v717 = vunpack.c.l.b16 %v637
  %v718 = vunpack.c.h.b16 %v637
  %v719 = vunpack.c.l.b16 %v638
  %v720 = vunpack.c.h.b16 %v638
  %v721 = vunpack.c.l.b16 %v639
  %v722 = vunpack.c.h.b16 %v639
  %v723 = vunpack.c.l.b16 %v640
  %v724 = vunpack.c.h.b16 %v640
  %v725 = vunpack.c.l.b16 %v641
  %v726 = vunpack.c.h.b16 %v641
  %v727 = vunpack.c.l.b16 %v642
  %v728 = vunpack.c.h.b16 %v642
  %v729 = vunpack.c.l.b16 %v643
  %v730 = vunpack.c.h.b16 %v643
  %v731 = vunpack.c.l.b16 %v644
  %v732 = vunpack.c.h.b16 %v644
  %v733 = vunpack.c.l.b16 %v645
  %v734 = vunpack.c.h.b16 %v645
  %v735 = vunpack.c.l.b16 %v646
  %v736 = vunpack.c.h.b16 %v646
  %v737 = vunpack.c.l.b16 %v647
  %v738 = vunpack.c.h.b16 %v647
  %v739 = vunpack.c.l.b16 %v648
  %v740 = vunpack.c.h.b16 %v648
  %v741 = vunpack.c.l.b16 %v649
  %v742 = vunpack.c.h.b16 %v649
  %v743 = vunpack.c.l.b16 %v650
  %v744 = vunpack.c.h.b16 %v650
  %v745 = vunpack.c.l.b16 %v651
  %v746 = vunpack.c.h.b16 %v651
  %v747 = vunpack.c.l.b16 %v652
  %v748 = vunpack.c.h.b16 %v652
  %v749 = vpack.c.b16 %v685, %v685
  %v750 = vpack.c.b16 %v686, %v686
  %v751 = vpack.c.b16 %v687, %v687
  %v752 = vpack.c.b16 %v688, %v688
  %v753 = vpack.c.b16 %v689, %v689
  %v754 = vpack.c.b16 %v690, %v690
  %v755 = vpack.c.b16 %v691, %v691
  %v756 = vpack.c.b16 %v692, %v692
  %v757 = vpack.c.b16 %v693, %v693
  %v758 = vpack.c.b16 %v694, %v694
  %v759 = vpack.c.b16 %v695, %v695
  %v760 = vpack.c.b16 %v696, %v696
  %v761 = vpack.c.b16 %v697, %v697
  %v762 = vpack.c.b16 %v698, %v698
  %v763 = vpack.c.b16 %v699, %v699
  %v764 = vpack.c.b16 %v700, %v700
  %v765 = vpack.c.b16 %v701, %v701
  %v766 = vpack.c.b16 %v702, %v702
  %v767 = vpack.c.b16 %v703, %v703
  %v768 = vpack.c.b16 %v704, %v704
  %v769 = vpack.c.b16 %v705, %v705
  %v770 = vpack.c.b16 %v706, %v706
  %v771 = vpack.c.b16 %v707, %v707
  %v772 = vpack.c.b16 %v708, %v708
  %v773 = vpack.c.b16 %v709, %v709
  %v774 = vpack.c.b16 %v710, %v710
  %v775 = vpack.c.b16 %v711, %v711
  %v776 = vpack.c.b16 %v712, %v712
  %v777 = vpack.c.b16 %v713, %v713
  %v778 = vpack.c.b16 %v714, %v714
  %v779 = vpack.c.b16 %v715, %v715
  %v780 = vpack.c.b16 %v716, %v716
  %v781 = vpack.c.b16 %v717, %v717
  %v782 = vpack.c.b16 %v718, %v718
  %v783 = vpack.c.b16 %v719, %v719
  %v784 = vpack.c.b16 %v720, %v720
  %v785 = vpack.c.b16 %v721, %v721
  %v786 = vpack.c.b16 %v722, %v722
  %v787 = vpack.c.b16 %v723, %v723
  %v788 = vpack.c.b16 %v724, %v724
  %v789 = vpack.c.b16 %v725, %v725
  %v790 = vpack.c.b16 %v726, %v726
  %v791 = vpack.c.b16 %v727, %v727
  %v792 = vpack.c.b16 %v728, %v728
  %v793 = vpack.c.b16 %v729, %v729
  %v794 = vpack.c.b16 %v730, %v730
  %v795 = vpack.c.b16 %v731, %v731
  %v796 = vpack.c.b16 %v732, %v732
  %v797 = vpack.c.b16 %v733, %v733
  %v798 = vpack.c.b16 %v734, %v734
  %v799 = vpack.c.b16 %v735, %v735
  %v800 = vpack.c.b16 %v736, %v736
  %v801 = vpack.c.b16 %v737, %v737
  %v802 = vpack.c.b16 %v738, %v738
  %v803 = vpack.c.b16 %v739, %v739
  %v804 = vpack.c.b16 %v740, %v740
  %v805 = vpack.c.b16 %v741, %v741
  %v806 = vpack.c.b16 %v742, %v742
  %v807 = vpack.c.b16 %v743, %v743
  %v808 = vpack.c.b16 %v744, %v744
  %v809 = vpack.c.b16 %v745, %v745
  %v810 = vpack.c.b16 %v746, %v746
  %v811 = vpack.c.b16 %v747, %v747
  %v812 = vpack.c.b16 %v748, %v748
  %877 = vst [vmem:[%s2] sm:$0xf] %v749
  %878 = vst [vmem:[%s2 + $0x4] sm:$0xf] %v750
  %879 = vst [vmem:[%s2 + $0x8] sm:$0xf] %v751
  %880 = vst [vmem:[%s2 + $0xc] sm:$0xf] %v752
  %881 = vst [vmem:[%s2 + $0x10] sm:$0xf] %v753
  %882 = vst [vmem:[%s2 + $0x14] sm:$0xf] %v754
  %883 = vst [vmem:[%s2 + $0x18] sm:$0xf] %v755
  %884 = vst [vmem:[%s2 + $0x1c] sm:$0xf] %v756
  %885 = vst [vmem:[%s2 + $0x20] sm:$0xf] %v757
  %886 = vst [vmem:[%s2 + $0x24] sm:$0xf] %v758
  %887 = vst [vmem:[%s2 + $0x28] sm:$0xf] %v759
  %888 = vst [vmem:[%s2 + $0x2c] sm:$0xf] %v760
  %889 = vst [vmem:[%s2 + $0x30] sm:$0xf] %v761
  %890 = vst [vmem:[%s2 + $0x34] sm:$0xf] %v762
  %891 = vst [vmem:[%s2 + $0x38] sm:$0xf] %v763
  %892 = vst [vmem:[%s2 + $0x3c] sm:$0xf] %v764
  %893 = vst [vmem:[%s2 + $0x40] sm:$0xf] %v765
  %894 = vst [vmem:[%s2 + $0x44] sm:$0xf] %v766
  %895 = vst [vmem:[%s2 + $0x48] sm:$0xf] %v767
  %896 = vst [vmem:[%s2 + $0x4c] sm:$0xf] %v768
  %897 = vst [vmem:[%s2 + $0x50] sm:$0xf] %v769
  %898 = vst [vmem:[%s2 + $0x54] sm:$0xf] %v770
  %899 = vst [vmem:[%s2 + $0x58] sm:$0xf] %v771
  %900 = vst [vmem:[%s2 + $0x5c] sm:$0xf] %v772
  %901 = vst [vmem:[%s2 + $0x60] sm:$0xf] %v773
  %902 = vst [vmem:[%s2 + $0x64] sm:$0xf] %v774
  %903 = vst [vmem:[%s2 + $0x68] sm:$0xf] %v775
  %904 = vst [vmem:[%s2 + $0x6c] sm:$0xf] %v776
  %905 = vst [vmem:[%s2 + $0x70] sm:$0xf] %v777
  %906 = vst [vmem:[%s2 + $0x74] sm:$0xf] %v778
  %907 = vst [vmem:[%s2 + $0x78] sm:$0xf] %v779
  %908 = vst [vmem:[%s2 + $0x7c] sm:$0xf] %v780
  %909 = vst [vmem:[%s2 + $0x80] sm:$0xf] %v781
  %910 = vst [vmem:[%s2 + $0x84] sm:$0xf] %v782
  %911 = vst [vmem:[%s2 + $0x88] sm:$0xf] %v783
  %912 = vst [vmem:[%s2 + $0x8c] sm:$0xf] %v784
  %913 = vst [vmem:[%s2 + $0x90] sm:$0xf] %v785
  %914 = vst [vmem:[%s2 + $0x94] sm:$0xf] %v786
  %915 = vst [vmem:[%s2 + $0x98] sm:$0xf] %v787
  %916 = vst [vmem:[%s2 + $0x9c] sm:$0xf] %v788
  %917 = vst [vmem:[%s2 + $0xa0] sm:$0xf] %v789
  %918 = vst [vmem:[%s2 + $0xa4] sm:$0xf] %v790
  %919 = vst [vmem:[%s2 + $0xa8] sm:$0xf] %v791
  %920 = vst [vmem:[%s2 + $0xac] sm:$0xf] %v792
  %921 = vst [vmem:[%s2 + $0xb0] sm:$0xf] %v793
  %922 = vst [vmem:[%s2 + $0xb4] sm:$0xf] %v794
  %923 = vst [vmem:[%s2 + $0xb8] sm:$0xf] %v795
  %924 = vst [vmem:[%s2 + $0xbc] sm:$0xf] %v796
  %925 = vst [vmem:[%s2 + $0xc0] sm:$0xf] %v797
  %926 = vst [vmem:[%s2 + $0xc4] sm:$0xf] %v798
  %927 = vst [vmem:[%s2 + $0xc8] sm:$0xf] %v799
  %928 = vst [vmem:[%s2 + $0xcc] sm:$0xf] %v800
  %929 = vst [vmem:[%s2 + $0xd0] sm:$0xf] %v801
  %930 = vst [vmem:[%s2 + $0xd4] sm:$0xf] %v802
  %931 = vst [vmem:[%s2 + $0xd8] sm:$0xf] %v803
  %932 = vst [vmem:[%s2 + $0xdc] sm:$0xf] %v804
  %933 = vst [vmem:[%s2 + $0xe0] sm:$0xf] %v805
  %934 = vst [vmem:[%s2 + $0xe4] sm:$0xf] %v806
  %935 = vst [vmem:[%s2 + $0xe8] sm:$0xf] %v807
  %936 = vst [vmem:[%s2 + $0xec] sm:$0xf] %v808
  %937 = vst [vmem:[%s2 + $0xf0] sm:$0xf] %v809
  %938 = vst [vmem:[%s2 + $0xf4] sm:$0xf] %v810
  %939 = vst [vmem:[%s2 + $0xf8] sm:$0xf] %v811
  %940 = vst [vmem:[%s2 + $0xfc] sm:$0xf] %v812
  // Predicated region
  $region10: #{gcn_forward.3} parent=0 // pred_check
    _
  $region11: #{gcn_forward.3} parent=0 // pred_check_branch
    %942 = sbr.rel (0) target = $region13
  $region12: #{gcn_forward.3} parent=0 // pred_region
    _
  $region13: #{gcn_forward.3} parent=0 // pred_fallthru
    _
  // Predicated region
  $region14: #{gcn_forward.3} parent=0 // pred_check
    _
  $region15: #{gcn_forward.3} parent=0 // pred_check_branch
    %944 = sbr.rel (0) target = $region17
  $region16: #{gcn_forward.3} parent=0 // pred_region
    _
  $region17: #{gcn_forward.3} parent=0 // pred_fallthru
    _

// kernel: gcn_forward.4
$region0: #{gcn_forward.4}
  #allocation0 [shape = 'u32[]', space=smem, size = 0x4, offset = 0x4, fixed_abs, tag = 'smem constant byte address 0x4 - core index']
  #allocation1 [shape = 'u32[144,128]{1,0:T(1,128)}', space=vmem, size = 0x12000, scoped, tag = 'internal scratch']
  #allocation2 [shape = 'f32[512,128]{1,0:T(8,128)}', space=vmem, size = 0x40000, scoped, tag = 'scratch operand']
  #allocation3 [shape = 's32[1]{0}', space=sflag, size = 0x4, scoped, tag = 'scoped memory for gcn_forward.4']
  #allocation4 [shape = 's32[1]{0:T(128)S(6)}', space=smem, size = 0x200, scoped, tag = 'prefetched SMEM operand 0']
  #allocation5 [shape = 's32[1]{0:T(128)S(6)}', space=smem, size = 0x200, scoped, tag = 'prefetched SMEM operand 1']
  %s0 = inlined_call_operand.<no memory space> [shape: s32[1], index: 0, kind: input, shape index: {}]
  %s1 = inlined_call_operand.<no memory space> [shape: s32[1], index: 1, kind: input, shape index: {}]
  %s2 = inlined_call_operand.hbm [shape: bf16[512,512], index: 2, kind: input, shape index: {}]
  %s3 = inlined_call_operand.vmem [shape: bf16[512,128], index: 3, kind: input, shape index: {}]
  %s4 = inlined_call_operand.vmem [shape: f32[1,128], index: 4, kind: input, shape index: {}]
  %s5 = inlined_call_operand.vmem [shape: f32[8,512], index: 5, kind: input, shape index: {}]
  %s6 = inlined_call_operand.vmem [shape: f32[1,8,128], index: 6, kind: output, shape index: {}]
  %s7 = sld [smem:[#allocation0]]
  $region42: #{gcn_forward.4} parent=0
    _
  %s9 = ssub.s32 1, %s7
  %s10 = scalar_select 0, %s9, %s7
  %11 = sst [smem:[#allocation4]] %s0
  %12 = sst [smem:[#allocation5]] %s1
  $region1: #{gcn_forward.4} parent=0
    #allocation6 [shape = 'u8[524288]{0}', space=vmem, size = 0x80000, scoped, tag = 'input window, operand 2, single buffered']
    #allocation7 [shape = 's32[1]{0}', space=sflag, size = 0x4, scoped, tag = 'scoped memory for gcn_forward.4']
    %13 = vsyncpa [#allocation7], 0
    // Predicated region
    $region2: #{gcn_forward.4} parent=1 // pred_check
      _
    $region3: #{gcn_forward.4} parent=1 // pred_check_branch
      %15 = sbr.rel (0) target = $region5
    $region4: #{gcn_forward.4} parent=1 // pred_region
      %s16 = sadd.s32 0, 0
      %s17 = sld [smem:[#allocation5 + %s16]]
      %s18 = smul.u32 4, %s17
      %s20 = ssub.s32 16384, 16384
      %21 = vsyncadd [#allocation7], %s20
      %s22 = smul.addr %s18, 64
      %s23 = scalar_lea.hbm %s2, %s22
      %s24 = sshll.u32 [#allocation6], 4
      %s25 = int_to_ptr.vmem [resolvable:$true] %s24
      %30 = dma.hbm_to_vmem [thread:$0]  %s23, 16384, %s25, [#allocation7], 256, 256, 16
    $region5: #{gcn_forward.4} parent=1 // pred_fallthru
      _
    // Predicated region
    $region6: #{gcn_forward.4} parent=1 // pred_check
      _
    $region7: #{gcn_forward.4} parent=1 // pred_check_branch
      %32 = sbr.rel (0) target = $region9
    $region8: #{gcn_forward.4} parent=1 // pred_region
      _
    $region9: #{gcn_forward.4} parent=1 // pred_fallthru
      _
    // Predicated region
    $region10: #{gcn_forward.4} parent=1 // pred_check
      _
    $region11: #{gcn_forward.4} parent=1 // pred_check_branch
      %34 = sbr.rel (0) target = $region13
    $region12: #{gcn_forward.4} parent=1 // pred_region
      _
    $region13: #{gcn_forward.4} parent=1 // pred_fallthru
      _
    // Predicated region
    $region14: #{gcn_forward.4} parent=1 // pred_check
      _
    $region15: #{gcn_forward.4} parent=1 // pred_check_branch
      %36 = sbr.rel (0) target = $region17
    $region16: #{gcn_forward.4} parent=1 // pred_region
      _
    $region17: #{gcn_forward.4} parent=1 // pred_fallthru
      _
    // Predicated region
    $region18: #{gcn_forward.4} parent=1 // pred_check
      _
    $region19: #{gcn_forward.4} parent=1 // pred_check_branch
      %38 = sbr.rel (0) target = $region21
    $region20: #{gcn_forward.4} parent=1 // pred_region
      %39 = dma.done [#allocation7], 16384
    $region21: #{gcn_forward.4} parent=1 // pred_fallthru
      _
    %s40 = sadd.s32 0, 0
    %s41 = sld [smem:[#allocation5 + %s40]]
    %s42 = smul.u32 4, %s41
    %p44 = scmp.eq.s32.totalorder 0, 0
    // Predicated region
    $region22: #{gcn_forward.4} parent=1 // pred_check
      %p45 = pneg %p44
    $region23: #{gcn_forward.4} parent=1 // pred_check_branch
      %47 = sbr.rel (%p45) target = $region25
    $region24: #{gcn_forward.4} parent=1 // pred_region
      %48 = vst [vmem:[#allocation2] sm:$0xff] 0.0
      %49 = vst [vmem:[#allocation2 + $0x8] sm:$0xff] 0.0
      %50 = vst [vmem:[#allocation2 + $0x10] sm:$0xff] 0.0
      %51 = vst [vmem:[#allocation2 + $0x18] sm:$0xff] 0.0
      %52 = vst [vmem:[#allocation2 + $0x20] sm:$0xff] 0.0
      %53 = vst [vmem:[#allocation2 + $0x28] sm:$0xff] 0.0
      %54 = vst [vmem:[#allocation2 + $0x30] sm:$0xff] 0.0
      %55 = vst [vmem:[#allocation2 + $0x38] sm:$0xff] 0.0
      %56 = vst [vmem:[#allocation2 + $0x40] sm:$0xff] 0.0
      %57 = vst [vmem:[#allocation2 + $0x48] sm:$0xff] 0.0
      %58 = vst [vmem:[#allocation2 + $0x50] sm:$0xff] 0.0
      %59 = vst [vmem:[#allocation2 + $0x58] sm:$0xff] 0.0
      %60 = vst [vmem:[#allocation2 + $0x60] sm:$0xff] 0.0
      %61 = vst [vmem:[#allocation2 + $0x68] sm:$0xff] 0.0
      %62 = vst [vmem:[#allocation2 + $0x70] sm:$0xff] 0.0
      %63 = vst [vmem:[#allocation2 + $0x78] sm:$0xff] 0.0
      %64 = vst [vmem:[#allocation2 + $0x80] sm:$0xff] 0.0
      %65 = vst [vmem:[#allocation2 + $0x88] sm:$0xff] 0.0
      %66 = vst [vmem:[#allocation2 + $0x90] sm:$0xff] 0.0
      %67 = vst [vmem:[#allocation2 + $0x98] sm:$0xff] 0.0
      %68 = vst [vmem:[#allocation2 + $0xa0] sm:$0xff] 0.0
      %69 = vst [vmem:[#allocation2 + $0xa8] sm:$0xff] 0.0
      %70 = vst [vmem:[#allocation2 + $0xb0] sm:$0xff] 0.0
      %71 = vst [vmem:[#allocation2 + $0xb8] sm:$0xff] 0.0
      %72 = vst [vmem:[#allocation2 + $0xc0] sm:$0xff] 0.0
      %73 = vst [vmem:[#allocation2 + $0xc8] sm:$0xff] 0.0
      %74 = vst [vmem:[#allocation2 + $0xd0] sm:$0xff] 0.0
      %75 = vst [vmem:[#allocation2 + $0xd8] sm:$0xff] 0.0
      %76 = vst [vmem:[#allocation2 + $0xe0] sm:$0xff] 0.0
      %77 = vst [vmem:[#allocation2 + $0xe8] sm:$0xff] 0.0
      %78 = vst [vmem:[#allocation2 + $0xf0] sm:$0xff] 0.0
      %79 = vst [vmem:[#allocation2 + $0xf8] sm:$0xff] 0.0
      %80 = vst [vmem:[#allocation2 + $0x100] sm:$0xff] 0.0
      %81 = vst [vmem:[#allocation2 + $0x108] sm:$0xff] 0.0
      %82 = vst [vmem:[#allocation2 + $0x110] sm:$0xff] 0.0
      %83 = vst [vmem:[#allocation2 + $0x118] sm:$0xff] 0.0
      %84 = vst [vmem:[#allocation2 + $0x120] sm:$0xff] 0.0
      %85 = vst [vmem:[#allocation2 + $0x128] sm:$0xff] 0.0
      %86 = vst [vmem:[#allocation2 + $0x130] sm:$0xff] 0.0
      %87 = vst [vmem:[#allocation2 + $0x138] sm:$0xff] 0.0
      %88 = vst [vmem:[#allocation2 + $0x140] sm:$0xff] 0.0
      %89 = vst [vmem:[#allocation2 + $0x148] sm:$0xff] 0.0
      %90 = vst [vmem:[#allocation2 + $0x150] sm:$0xff] 0.0
      %91 = vst [vmem:[#allocation2 + $0x158] sm:$0xff] 0.0
      %92 = vst [vmem:[#allocation2 + $0x160] sm:$0xff] 0.0
      %93 = vst [vmem:[#allocation2 + $0x168] sm:$0xff] 0.0
      %94 = vst [vmem:[#allocation2 + $0x170] sm:$0xff] 0.0
      %95 = vst [vmem:[#allocation2 + $0x178] sm:$0xff] 0.0
      %96 = vst [vmem:[#allocation2 + $0x180] sm:$0xff] 0.0
      %97 = vst [vmem:[#allocation2 + $0x188] sm:$0xff] 0.0
      %98 = vst [vmem:[#allocation2 + $0x190] sm:$0xff] 0.0
      %99 = vst [vmem:[#allocation2 + $0x198] sm:$0xff] 0.0
      %100 = vst [vmem:[#allocation2 + $0x1a0] sm:$0xff] 0.0
      %101 = vst [vmem:[#allocation2 + $0x1a8] sm:$0xff] 0.0
      %102 = vst [vmem:[#allocation2 + $0x1b0] sm:$0xff] 0.0
      %103 = vst [vmem:[#allocation2 + $0x1b8] sm:$0xff] 0.0
      %104 = vst [vmem:[#allocation2 + $0x1c0] sm:$0xff] 0.0
      %105 = vst [vmem:[#allocation2 + $0x1c8] sm:$0xff] 0.0
      %106 = vst [vmem:[#allocation2 + $0x1d0] sm:$0xff] 0.0
      %107 = vst [vmem:[#allocation2 + $0x1d8] sm:$0xff] 0.0
      %108 = vst [vmem:[#allocation2 + $0x1e0] sm:$0xff] 0.0
      %109 = vst [vmem:[#allocation2 + $0x1e8] sm:$0xff] 0.0
      %110 = vst [vmem:[#allocation2 + $0x1f0] sm:$0xff] 0.0
      %111 = vst [vmem:[#allocation2 + $0x1f8] sm:$0xff] 0.0
    $region25: #{gcn_forward.4} parent=1 // pred_fallthru
      _
    %s112 = sld [smem:[#allocation4]]
    %p113 = scmp.lt.s32.totalorder 0, %s112
    // Predicated region
    $region26: #{gcn_forward.4} parent=1 // pred_check
      %p114 = pneg %p113
    $region27: #{gcn_forward.4} parent=1 // pred_check_branch
      %116 = sbr.rel (%p114) target = $region29
    $region28: #{gcn_forward.4} parent=1 // pred_region
      %s117 = sadd.s32 0, 0
      %s118 = sld [smem:[#allocation5 + %s117]]
      %s119 = smul.u32 %s118, 512
      %s120 = sshra.s32 %s119, 3
      %s121 = sand.u32 %s119, 7
      %s122 = smul.addr %s120, 4
      %s123 = scalar_lea.vmem %s3, %s122
      %v124 = vld [vmem:[%s123] sm:$0xf]
      %v125 = vld [vmem:[%s123 + $0x4] sm:$0xf]
      %v126 = vld [vmem:[%s123 + $0x8] sm:$0xf]
      %v127 = vld [vmem:[%s123 + $0xc] sm:$0xf]
      %v128 = vld [vmem:[%s123 + $0x10] sm:$0xf]
      %v129 = vld [vmem:[%s123 + $0x14] sm:$0xf]
      %v130 = vld [vmem:[%s123 + $0x18] sm:$0xf]
      %v131 = vld [vmem:[%s123 + $0x1c] sm:$0xf]
      %v132 = vld [vmem:[%s123 + $0x20] sm:$0xf]
      %v133 = vld [vmem:[%s123 + $0x24] sm:$0xf]
      %v134 = vld [vmem:[%s123 + $0x28] sm:$0xf]
      %v135 = vld [vmem:[%s123 + $0x2c] sm:$0xf]
      %v136 = vld [vmem:[%s123 + $0x30] sm:$0xf]
      %v137 = vld [vmem:[%s123 + $0x34] sm:$0xf]
      %v138 = vld [vmem:[%s123 + $0x38] sm:$0xf]
      %v139 = vld [vmem:[%s123 + $0x3c] sm:$0xf]
      %v140 = vld [vmem:[%s123 + $0x40] sm:$0xf]
      %v141 = vld [vmem:[%s123 + $0x44] sm:$0xf]
      %v142 = vld [vmem:[%s123 + $0x48] sm:$0xf]
      %v143 = vld [vmem:[%s123 + $0x4c] sm:$0xf]
      %v144 = vld [vmem:[%s123 + $0x50] sm:$0xf]
      %v145 = vld [vmem:[%s123 + $0x54] sm:$0xf]
      %v146 = vld [vmem:[%s123 + $0x58] sm:$0xf]
      %v147 = vld [vmem:[%s123 + $0x5c] sm:$0xf]
      %v148 = vld [vmem:[%s123 + $0x60] sm:$0xf]
      %v149 = vld [vmem:[%s123 + $0x64] sm:$0xf]
      %v150 = vld [vmem:[%s123 + $0x68] sm:$0xf]
      %v151 = vld [vmem:[%s123 + $0x6c] sm:$0xf]
      %v152 = vld [vmem:[%s123 + $0x70] sm:$0xf]
      %v153 = vld [vmem:[%s123 + $0x74] sm:$0xf]
      %v154 = vld [vmem:[%s123 + $0x78] sm:$0xf]
      %v155 = vld [vmem:[%s123 + $0x7c] sm:$0xf]
      %v156 = vld [vmem:[%s123 + $0x80] sm:$0xf]
      %v157 = vld [vmem:[%s123 + $0x84] sm:$0xf]
      %v158 = vld [vmem:[%s123 + $0x88] sm:$0xf]
      %v159 = vld [vmem:[%s123 + $0x8c] sm:$0xf]
      %v160 = vld [vmem:[%s123 + $0x90] sm:$0xf]
      %v161 = vld [vmem:[%s123 + $0x94] sm:$0xf]
      %v162 = vld [vmem:[%s123 + $0x98] sm:$0xf]
      %v163 = vld [vmem:[%s123 + $0x9c] sm:$0xf]
      %v164 = vld [vmem:[%s123 + $0xa0] sm:$0xf]
      %v165 = vld [vmem:[%s123 + $0xa4] sm:$0xf]
      %v166 = vld [vmem:[%s123 + $0xa8] sm:$0xf]
      %v167 = vld [vmem:[%s123 + $0xac] sm:$0xf]
      %v168 = vld [vmem:[%s123 + $0xb0] sm:$0xf]
      %v169 = vld [vmem:[%s123 + $0xb4] sm:$0xf]
      %v170 = vld [vmem:[%s123 + $0xb8] sm:$0xf]
      %v171 = vld [vmem:[%s123 + $0xbc] sm:$0xf]
      %v172 = vld [vmem:[%s123 + $0xc0] sm:$0xf]
      %v173 = vld [vmem:[%s123 + $0xc4] sm:$0xf]
      %v174 = vld [vmem:[%s123 + $0xc8] sm:$0xf]
      %v175 = vld [vmem:[%s123 + $0xcc] sm:$0xf]
      %v176 = vld [vmem:[%s123 + $0xd0] sm:$0xf]
      %v177 = vld [vmem:[%s123 + $0xd4] sm:$0xf]
      %v178 = vld [vmem:[%s123 + $0xd8] sm:$0xf]
      %v179 = vld [vmem:[%s123 + $0xdc] sm:$0xf]
      %v180 = vld [vmem:[%s123 + $0xe0] sm:$0xf]
      %v181 = vld [vmem:[%s123 + $0xe4] sm:$0xf]
      %v182 = vld [vmem:[%s123 + $0xe8] sm:$0xf]
      %v183 = vld [vmem:[%s123 + $0xec] sm:$0xf]
      %v184 = vld [vmem:[%s123 + $0xf0] sm:$0xf]
      %v185 = vld [vmem:[%s123 + $0xf4] sm:$0xf]
      %v186 = vld [vmem:[%s123 + $0xf8] sm:$0xf]
      %v187 = vld [vmem:[%s123 + $0xfc] sm:$0xf]
      %v188 = vld [vmem:[#allocation2] sm:$0xff]
      %v189 = vld [vmem:[#allocation2 + $0x8] sm:$0xff]
      %v190 = vld [vmem:[#allocation2 + $0x10] sm:$0xff]
      %v191 = vld [vmem:[#allocation2 + $0x18] sm:$0xff]
      %v192 = vld [vmem:[#allocation2 + $0x20] sm:$0xff]
      %v193 = vld [vmem:[#allocation2 + $0x28] sm:$0xff]
      %v194 = vld [vmem:[#allocation2 + $0x30] sm:$0xff]
      %v195 = vld [vmem:[#allocation2 + $0x38] sm:$0xff]
      %v196 = vld [vmem:[#allocation2 + $0x40] sm:$0xff]
      %v197 = vld [vmem:[#allocation2 + $0x48] sm:$0xff]
      %v198 = vld [vmem:[#allocation2 + $0x50] sm:$0xff]
      %v199 = vld [vmem:[#allocation2 + $0x58] sm:$0xff]
      %v200 = vld [vmem:[#allocation2 + $0x60] sm:$0xff]
      %v201 = vld [vmem:[#allocation2 + $0x68] sm:$0xff]
      %v202 = vld [vmem:[#allocation2 + $0x70] sm:$0xff]
      %v203 = vld [vmem:[#allocation2 + $0x78] sm:$0xff]
      %v204 = vld [vmem:[#allocation2 + $0x80] sm:$0xff]
      %v205 = vld [vmem:[#allocation2 + $0x88] sm:$0xff]
      %v206 = vld [vmem:[#allocation2 + $0x90] sm:$0xff]
      %v207 = vld [vmem:[#allocation2 + $0x98] sm:$0xff]
      %v208 = vld [vmem:[#allocation2 + $0xa0] sm:$0xff]
      %v209 = vld [vmem:[#allocation2 + $0xa8] sm:$0xff]
      %v210 = vld [vmem:[#allocation2 + $0xb0] sm:$0xff]
      %v211 = vld [vmem:[#allocation2 + $0xb8] sm:$0xff]
      %v212 = vld [vmem:[#allocation2 + $0xc0] sm:$0xff]
      %v213 = vld [vmem:[#allocation2 + $0xc8] sm:$0xff]
      %v214 = vld [vmem:[#allocation2 + $0xd0] sm:$0xff]
      %v215 = vld [vmem:[#allocation2 + $0xd8] sm:$0xff]
      %v216 = vld [vmem:[#allocation2 + $0xe0] sm:$0xff]
      %v217 = vld [vmem:[#allocation2 + $0xe8] sm:$0xff]
      %v218 = vld [vmem:[#allocation2 + $0xf0] sm:$0xff]
      %v219 = vld [vmem:[#allocation2 + $0xf8] sm:$0xff]
      %v220 = vld [vmem:[#allocation2 + $0x100] sm:$0xff]
      %v221 = vld [vmem:[#allocation2 + $0x108] sm:$0xff]
      %v222 = vld [vmem:[#allocation2 + $0x110] sm:$0xff]
      %v223 = vld [vmem:[#allocation2 + $0x118] sm:$0xff]
      %v224 = vld [vmem:[#allocation2 + $0x120] sm:$0xff]
      %v225 = vld [vmem:[#allocation2 + $0x128] sm:$0xff]
      %v226 = vld [vmem:[#allocation2 + $0x130] sm:$0xff]
      %v227 = vld [vmem:[#allocation2 + $0x138] sm:$0xff]
      %v228 = vld [vmem:[#allocation2 + $0x140] sm:$0xff]
      %v229 = vld [vmem:[#allocation2 + $0x148] sm:$0xff]
      %v230 = vld [vmem:[#allocation2 + $0x150] sm:$0xff]
      %v231 = vld [vmem:[#allocation2 + $0x158] sm:$0xff]
      %v232 = vld [vmem:[#allocation2 + $0x160] sm:$0xff]
      %v233 = vld [vmem:[#allocation2 + $0x168] sm:$0xff]
      %v234 = vld [vmem:[#allocation2 + $0x170] sm:$0xff]
      %v235 = vld [vmem:[#allocation2 + $0x178] sm:$0xff]
      %v236 = vld [vmem:[#allocation2 + $0x180] sm:$0xff]
      %v237 = vld [vmem:[#allocation2 + $0x188] sm:$0xff]
      %v238 = vld [vmem:[#allocation2 + $0x190] sm:$0xff]
      %v239 = vld [vmem:[#allocation2 + $0x198] sm:$0xff]
      %v240 = vld [vmem:[#allocation2 + $0x1a0] sm:$0xff]
      %v241 = vld [vmem:[#allocation2 + $0x1a8] sm:$0xff]
      %v242 = vld [vmem:[#allocation2 + $0x1b0] sm:$0xff]
      %v243 = vld [vmem:[#allocation2 + $0x1b8] sm:$0xff]
      %v244 = vld [vmem:[#allocation2 + $0x1c0] sm:$0xff]
      %v245 = vld [vmem:[#allocation2 + $0x1c8] sm:$0xff]
      %v246 = vld [vmem:[#allocation2 + $0x1d0] sm:$0xff]
      %v247 = vld [vmem:[#allocation2 + $0x1d8] sm:$0xff]
      %v248 = vld [vmem:[#allocation2 + $0x1e0] sm:$0xff]
      %v249 = vld [vmem:[#allocation2 + $0x1e8] sm:$0xff]
      %v250 = vld [vmem:[#allocation2 + $0x1f0] sm:$0xff]
      %v251 = vld [vmem:[#allocation2 + $0x1f8] sm:$0xff]
      %v252 = vld [vmem:[#allocation6] sm:$0xff]
      %v253 = vld [vmem:[#allocation6 + $0x8] sm:$0xff]
      %v254 = vld [vmem:[#allocation6 + $0x10] sm:$0xff]
      %v255 = vld [vmem:[#allocation6 + $0x18] sm:$0xff]
      %v256 = vld [vmem:[#allocation6 + $0x20] sm:$0xff]
      %v257 = vld [vmem:[#allocation6 + $0x28] sm:$0xff]
      %v258 = vld [vmem:[#allocation6 + $0x30] sm:$0xff]
      %v259 = vld [vmem:[#allocation6 + $0x38] sm:$0xff]
      %v260 = vld [vmem:[#allocation6 + $0x40] sm:$0xff]
      %v261 = vld [vmem:[#allocation6 + $0x48] sm:$0xff]
      %v262 = vld [vmem:[#allocation6 + $0x50] sm:$0xff]
      %v263 = vld [vmem:[#allocation6 + $0x58] sm:$0xff]
      %v264 = vld [vmem:[#allocation6 + $0x60] sm:$0xff]
      %v265 = vld [vmem:[#allocation6 + $0x68] sm:$0xff]
      %v266 = vld [vmem:[#allocation6 + $0x70] sm:$0xff]
      %v267 = vld [vmem:[#allocation6 + $0x78] sm:$0xff]
      %v268 = vld [vmem:[#allocation6 + $0x80] sm:$0xff]
      %v269 = vld [vmem:[#allocation6 + $0x88] sm:$0xff]
      %v270 = vld [vmem:[#allocation6 + $0x90] sm:$0xff]
      %v271 = vld [vmem:[#allocation6 + $0x98] sm:$0xff]
      %v272 = vld [vmem:[#allocation6 + $0xa0] sm:$0xff]
      %v273 = vld [vmem:[#allocation6 + $0xa8] sm:$0xff]
      %v274 = vld [vmem:[#allocation6 + $0xb0] sm:$0xff]
      %v275 = vld [vmem:[#allocation6 + $0xb8] sm:$0xff]
      %v276 = vld [vmem:[#allocation6 + $0xc0] sm:$0xff]
      %v277 = vld [vmem:[#allocation6 + $0xc8] sm:$0xff]
      %v278 = vld [vmem:[#allocation6 + $0xd0] sm:$0xff]
      %v279 = vld [vmem:[#allocation6 + $0xd8] sm:$0xff]
      %v280 = vld [vmem:[#allocation6 + $0xe0] sm:$0xff]
      %v281 = vld [vmem:[#allocation6 + $0xe8] sm:$0xff]
      %v282 = vld [vmem:[#allocation6 + $0xf0] sm:$0xff]
      %v283 = vld [vmem:[#allocation6 + $0xf8] sm:$0xff]
      %v284 = vld [vmem:[#allocation6 + $0x100] sm:$0xff]
      %v285 = vld [vmem:[#allocation6 + $0x108] sm:$0xff]
      %v286 = vld [vmem:[#allocation6 + $0x110] sm:$0xff]
      %v287 = vld [vmem:[#allocation6 + $0x118] sm:$0xff]
      %v288 = vld [vmem:[#allocation6 + $0x120] sm:$0xff]
      %v289 = vld [vmem:[#allocation6 + $0x128] sm:$0xff]
      %v290 = vld [vmem:[#allocation6 + $0x130] sm:$0xff]
      %v291 = vld [vmem:[#allocation6 + $0x138] sm:$0xff]
      %v292 = vld [vmem:[#allocation6 + $0x140] sm:$0xff]
      %v293 = vld [vmem:[#allocation6 + $0x148] sm:$0xff]
      %v294 = vld [vmem:[#allocation6 + $0x150] sm:$0xff]
      %v295 = vld [vmem:[#allocation6 + $0x158] sm:$0xff]
      %v296 = vld [vmem:[#allocation6 + $0x160] sm:$0xff]
      %v297 = vld [vmem:[#allocation6 + $0x168] sm:$0xff]
      %v298 = vld [vmem:[#allocation6 + $0x170] sm:$0xff]
      %v299 = vld [vmem:[#allocation6 + $0x178] sm:$0xff]
      %v300 = vld [vmem:[#allocation6 + $0x180] sm:$0xff]
      %v301 = vld [vmem:[#allocation6 + $0x188] sm:$0xff]
      %v302 = vld [vmem:[#allocation6 + $0x190] sm:$0xff]
      %v303 = vld [vmem:[#allocation6 + $0x198] sm:$0xff]
      %v304 = vld [vmem:[#allocation6 + $0x1a0] sm:$0xff]
      %v305 = vld [vmem:[#allocation6 + $0x1a8] sm:$0xff]
      %v306 = vld [vmem:[#allocation6 + $0x1b0] sm:$0xff]
      %v307 = vld [vmem:[#allocation6 + $0x1b8] sm:$0xff]
      %v308 = vld [vmem:[#allocation6 + $0x1c0] sm:$0xff]
      %v309 = vld [vmem:[#allocation6 + $0x1c8] sm:$0xff]
      %v310 = vld [vmem:[#allocation6 + $0x1d0] sm:$0xff]
      %v311 = vld [vmem:[#allocation6 + $0x1d8] sm:$0xff]
      %v312 = vld [vmem:[#allocation6 + $0x1e0] sm:$0xff]
      %v313 = vld [vmem:[#allocation6 + $0x1e8] sm:$0xff]
      %v314 = vld [vmem:[#allocation6 + $0x1f0] sm:$0xff]
      %v315 = vld [vmem:[#allocation6 + $0x1f8] sm:$0xff]
      %v316 = vld [vmem:[#allocation6 + $0x200] sm:$0xff]
      %v317 = vld [vmem:[#allocation6 + $0x208] sm:$0xff]
      %v318 = vld [vmem:[#allocation6 + $0x210] sm:$0xff]
      %v319 = vld [vmem:[#allocation6 + $0x218] sm:$0xff]
      %v320 = vld [vmem:[#allocation6 + $0x220] sm:$0xff]
      %v321 = vld [vmem:[#allocation6 + $0x228] sm:$0xff]
      %v322 = vld [vmem:[#allocation6 + $0x230] sm:$0xff]
      %v323 = vld [vmem:[#allocation6 + $0x238] sm:$0xff]
      %v324 = vld [vmem:[#allocation6 + $0x240] sm:$0xff]
      %v325 = vld [vmem:[#allocation6 + $0x248] sm:$0xff]
      %v326 = vld [vmem:[#allocation6 + $0x250] sm:$0xff]
      %v327 = vld [vmem:[#allocation6 + $0x258] sm:$0xff]
      %v328 = vld [vmem:[#allocation6 + $0x260] sm:$0xff]
      %v329 = vld [vmem:[#allocation6 + $0x268] sm:$0xff]
      %v330 = vld [vmem:[#allocation6 + $0x270] sm:$0xff]
      %v331 = vld [vmem:[#allocation6 + $0x278] sm:$0xff]
      %v332 = vld [vmem:[#allocation6 + $0x280] sm:$0xff]
      %v333 = vld [vmem:[#allocation6 + $0x288] sm:$0xff]
      %v334 = vld [vmem:[#allocation6 + $0x290] sm:$0xff]
      %v335 = vld [vmem:[#allocation6 + $0x298] sm:$0xff]
      %v336 = vld [vmem:[#allocation6 + $0x2a0] sm:$0xff]
      %v337 = vld [vmem:[#allocation6 + $0x2a8] sm:$0xff]
      %v338 = vld [vmem:[#allocation6 + $0x2b0] sm:$0xff]
      %v339 = vld [vmem:[#allocation6 + $0x2b8] sm:$0xff]
      %v340 = vld [vmem:[#allocation6 + $0x2c0] sm:$0xff]
      %v341 = vld [vmem:[#allocation6 + $0x2c8] sm:$0xff]
      %v342 = vld [vmem:[#allocation6 + $0x2d0] sm:$0xff]
      %v343 = vld [vmem:[#allocation6 + $0x2d8] sm:$0xff]
      %v344 = vld [vmem:[#allocation6 + $0x2e0] sm:$0xff]
      %v345 = vld [vmem:[#allocation6 + $0x2e8] sm:$0xff]
      %v346 = vld [vmem:[#allocation6 + $0x2f0] sm:$0xff]
      %v347 = vld [vmem:[#allocation6 + $0x2f8] sm:$0xff]
      %v348 = vld [vmem:[#allocation6 + $0x300] sm:$0xff]
      %v349 = vld [vmem:[#allocation6 + $0x308] sm:$0xff]
      %v350 = vld [vmem:[#allocation6 + $0x310] sm:$0xff]
      %v351 = vld [vmem:[#allocation6 + $0x318] sm:$0xff]
      %v352 = vld [vmem:[#allocation6 + $0x320] sm:$0xff]
      %v353 = vld [vmem:[#allocation6 + $0x328] sm:$0xff]
      %v354 = vld [vmem:[#allocation6 + $0x330] sm:$0xff]
      %v355 = vld [vmem:[#allocation6 + $0x338] sm:$0xff]
      %v356 = vld [vmem:[#allocation6 + $0x340] sm:$0xff]
      %v357 = vld [vmem:[#allocation6 + $0x348] sm:$0xff]
      %v358 = vld [vmem:[#allocation6 + $0x350] sm:$0xff]
      %v359 = vld [vmem:[#allocation6 + $0x358] sm:$0xff]
      %v360 = vld [vmem:[#allocation6 + $0x360] sm:$0xff]
      %v361 = vld [vmem:[#allocation6 + $0x368] sm:$0xff]
      %v362 = vld [vmem:[#allocation6 + $0x370] sm:$0xff]
      %v363 = vld [vmem:[#allocation6 + $0x378] sm:$0xff]
      %v364 = vld [vmem:[#allocation6 + $0x380] sm:$0xff]
      %v365 = vld [vmem:[#allocation6 + $0x388] sm:$0xff]
      %v366 = vld [vmem:[#allocation6 + $0x390] sm:$0xff]
      %v367 = vld [vmem:[#allocation6 + $0x398] sm:$0xff]
      %v368 = vld [vmem:[#allocation6 + $0x3a0] sm:$0xff]
      %v369 = vld [vmem:[#allocation6 + $0x3a8] sm:$0xff]
      %v370 = vld [vmem:[#allocation6 + $0x3b0] sm:$0xff]
      %v371 = vld [vmem:[#allocation6 + $0x3b8] sm:$0xff]
      %v372 = vld [vmem:[#allocation6 + $0x3c0] sm:$0xff]
      %v373 = vld [vmem:[#allocation6 + $0x3c8] sm:$0xff]
      %v374 = vld [vmem:[#allocation6 + $0x3d0] sm:$0xff]
      %v375 = vld [vmem:[#allocation6 + $0x3d8] sm:$0xff]
      %v376 = vld [vmem:[#allocation6 + $0x3e0] sm:$0xff]
      %v377 = vld [vmem:[#allocation6 + $0x3e8] sm:$0xff]
      %v378 = vld [vmem:[#allocation6 + $0x3f0] sm:$0xff]
      %v379 = vld [vmem:[#allocation6 + $0x3f8] sm:$0xff]
      %v508 = vunpack.c.l.b16 %v252
      %v509 = vunpack.c.h.b16 %v252
      %v510 = vunpack.c.l.b16 %v253
      %v511 = vunpack.c.h.b16 %v253
      %v512 = vunpack.c.l.b16 %v254
      %v513 = vunpack.c.h.b16 %v254
      %v514 = vunpack.c.l.b16 %v255
      %v515 = vunpack.c.h.b16 %v255
      %v516 = vunpack.c.l.b16 %v256
      %v517 = vunpack.c.h.b16 %v256
      %v518 = vunpack.c.l.b16 %v257
      %v519 = vunpack.c.h.b16 %v257
      %v520 = vunpack.c.l.b16 %v258
      %v521 = vunpack.c.h.b16 %v258
      %v522 = vunpack.c.l.b16 %v259
      %v523 = vunpack.c.h.b16 %v259
      %v524 = vunpack.c.l.b16 %v260
      %v525 = vunpack.c.h.b16 %v260
      %v526 = vunpack.c.l.b16 %v261
      %v527 = vunpack.c.h.b16 %v261
      %v528 = vunpack.c.l.b16 %v262
      %v529 = vunpack.c.h.b16 %v262
      %v530 = vunpack.c.l.b16 %v263
      %v531 = vunpack.c.h.b16 %v263
      %v532 = vunpack.c.l.b16 %v264
      %v533 = vunpack.c.h.b16 %v264
      %v534 = vunpack.c.l.b16 %v265
      %v535 = vunpack.c.h.b16 %v265
      %v536 = vunpack.c.l.b16 %v266
      %v537 = vunpack.c.h.b16 %v266
      %v538 = vunpack.c.l.b16 %v267
      %v539 = vunpack.c.h.b16 %v267
      %v540 = vunpack.c.l.b16 %v268
      %v541 = vunpack.c.h.b16 %v268
      %v542 = vunpack.c.l.b16 %v269
      %v543 = vunpack.c.h.b16 %v269
      %v544 = vunpack.c.l.b16 %v270
      %v545 = vunpack.c.h.b16 %v270
      %v546 = vunpack.c.l.b16 %v271
      %v547 = vunpack.c.h.b16 %v271
      %v548 = vunpack.c.l.b16 %v272
      %v549 = vunpack.c.h.b16 %v272
      %v550 = vunpack.c.l.b16 %v273
      %v551 = vunpack.c.h.b16 %v273
      %v552 = vunpack.c.l.b16 %v274
      %v553 = vunpack.c.h.b16 %v274
      %v554 = vunpack.c.l.b16 %v275
      %v555 = vunpack.c.h.b16 %v275
      %v556 = vunpack.c.l.b16 %v276
      %v557 = vunpack.c.h.b16 %v276
      %v558 = vunpack.c.l.b16 %v277
      %v559 = vunpack.c.h.b16 %v277
      %v560 = vunpack.c.l.b16 %v278
      %v561 = vunpack.c.h.b16 %v278
      %v562 = vunpack.c.l.b16 %v279
      %v563 = vunpack.c.h.b16 %v279
      %v564 = vunpack.c.l.b16 %v280
      %v565 = vunpack.c.h.b16 %v280
      %v566 = vunpack.c.l.b16 %v281
      %v567 = vunpack.c.h.b16 %v281
      %v568 = vunpack.c.l.b16 %v282
      %v569 = vunpack.c.h.b16 %v282
      %v570 = vunpack.c.l.b16 %v283
      %v571 = vunpack.c.h.b16 %v283
      %v572 = vunpack.c.l.b16 %v284
      %v573 = vunpack.c.h.b16 %v284
      %v574 = vunpack.c.l.b16 %v285
      %v575 = vunpack.c.h.b16 %v285
      %v576 = vunpack.c.l.b16 %v286
      %v577 = vunpack.c.h.b16 %v286
      %v578 = vunpack.c.l.b16 %v287
      %v579 = vunpack.c.h.b16 %v287
      %v580 = vunpack.c.l.b16 %v288
      %v581 = vunpack.c.h.b16 %v288
      %v582 = vunpack.c.l.b16 %v289
      %v583 = vunpack.c.h.b16 %v289
      %v584 = vunpack.c.l.b16 %v290
      %v585 = vunpack.c.h.b16 %v290
      %v586 = vunpack.c.l.b16 %v291
      %v587 = vunpack.c.h.b16 %v291
      %v588 = vunpack.c.l.b16 %v292
      %v589 = vunpack.c.h.b16 %v292
      %v590 = vunpack.c.l.b16 %v293
      %v591 = vunpack.c.h.b16 %v293
      %v592 = vunpack.c.l.b16 %v294
      %v593 = vunpack.c.h.b16 %v294
      %v594 = vunpack.c.l.b16 %v295
      %v595 = vunpack.c.h.b16 %v295
      %v596 = vunpack.c.l.b16 %v296
      %v597 = vunpack.c.h.b16 %v296
      %v598 = vunpack.c.l.b16 %v297
      %v599 = vunpack.c.h.b16 %v297
      %v600 = vunpack.c.l.b16 %v298
      %v601 = vunpack.c.h.b16 %v298
      %v602 = vunpack.c.l.b16 %v299
      %v603 = vunpack.c.h.b16 %v299
      %v604 = vunpack.c.l.b16 %v300
      %v605 = vunpack.c.h.b16 %v300
      %v606 = vunpack.c.l.b16 %v301
      %v607 = vunpack.c.h.b16 %v301
      %v608 = vunpack.c.l.b16 %v302
      %v609 = vunpack.c.h.b16 %v302
      %v610 = vunpack.c.l.b16 %v303
      %v611 = vunpack.c.h.b16 %v303
      %v612 = vunpack.c.l.b16 %v304
      %v613 = vunpack.c.h.b16 %v304
      %v614 = vunpack.c.l.b16 %v305
      %v615 = vunpack.c.h.b16 %v305
      %v616 = vunpack.c.l.b16 %v306
      %v617 = vunpack.c.h.b16 %v306
      %v618 = vunpack.c.l.b16 %v307
      %v619 = vunpack.c.h.b16 %v307
      %v620 = vunpack.c.l.b16 %v308
      %v621 = vunpack.c.h.b16 %v308
      %v622 = vunpack.c.l.b16 %v309
      %v623 = vunpack.c.h.b16 %v309
      %v624 = vunpack.c.l.b16 %v310
      %v625 = vunpack.c.h.b16 %v310
      %v626 = vunpack.c.l.b16 %v311
      %v627 = vunpack.c.h.b16 %v311
      %v628 = vunpack.c.l.b16 %v312
      %v629 = vunpack.c.h.b16 %v312
      %v630 = vunpack.c.l.b16 %v313
      %v631 = vunpack.c.h.b16 %v313
      %v632 = vunpack.c.l.b16 %v314
      %v633 = vunpack.c.h.b16 %v314
      %v634 = vunpack.c.l.b16 %v315
      %v635 = vunpack.c.h.b16 %v315
      %v636 = vunpack.c.l.b16 %v316
      %v637 = vunpack.c.h.b16 %v316
      %v638 = vunpack.c.l.b16 %v317
      %v639 = vunpack.c.h.b16 %v317
      %v640 = vunpack.c.l.b16 %v318
      %v641 = vunpack.c.h.b16 %v318
      %v642 = vunpack.c.l.b16 %v319
      %v643 = vunpack.c.h.b16 %v319
      %v644 = vunpack.c.l.b16 %v320
      %v645 = vunpack.c.h.b16 %v320
      %v646 = vunpack.c.l.b16 %v321
      %v647 = vunpack.c.h.b16 %v321
      %v648 = vunpack.c.l.b16 %v322
      %v649 = vunpack.c.h.b16 %v322
      %v650 = vunpack.c.l.b16 %v323
      %v651 = vunpack.c.h.b16 %v323
      %v652 = vunpack.c.l.b16 %v324
      %v653 = vunpack.c.h.b16 %v324
      %v654 = vunpack.c.l.b16 %v325
      %v655 = vunpack.c.h.b16 %v325
      %v656 = vunpack.c.l.b16 %v326
      %v657 = vunpack.c.h.b16 %v326
      %v658 = vunpack.c.l.b16 %v327
      %v659 = vunpack.c.h.b16 %v327
      %v660 = vunpack.c.l.b16 %v328
      %v661 = vunpack.c.h.b16 %v328
      %v662 = vunpack.c.l.b16 %v329
      %v663 = vunpack.c.h.b16 %v329
      %v664 = vunpack.c.l.b16 %v330
      %v665 = vunpack.c.h.b16 %v330
      %v666 = vunpack.c.l.b16 %v331
      %v667 = vunpack.c.h.b16 %v331
      %v668 = vunpack.c.l.b16 %v332
      %v669 = vunpack.c.h.b16 %v332
      %v670 = vunpack.c.l.b16 %v333
      %v671 = vunpack.c.h.b16 %v333
      %v672 = vunpack.c.l.b16 %v334
      %v673 = vunpack.c.h.b16 %v334
      %v674 = vunpack.c.l.b16 %v335
      %v675 = vunpack.c.h.b16 %v335
      %v676 = vunpack.c.l.b16 %v336
      %v677 = vunpack.c.h.b16 %v336
      %v678 = vunpack.c.l.b16 %v337
      %v679 = vunpack.c.h.b16 %v337
      %v680 = vunpack.c.l.b16 %v338
      %v681 = vunpack.c.h.b16 %v338
      %v682 = vunpack.c.l.b16 %v339
      %v683 = vunpack.c.h.b16 %v339
      %v684 = vunpack.c.l.b16 %v340
      %v685 = vunpack.c.h.b16 %v340
      %v686 = vunpack.c.l.b16 %v341
      %v687 = vunpack.c.h.b16 %v341
      %v688 = vunpack.c.l.b16 %v342
      %v689 = vunpack.c.h.b16 %v342
      %v690 = vunpack.c.l.b16 %v343
      %v691 = vunpack.c.h.b16 %v343
      %v692 = vunpack.c.l.b16 %v344
      %v693 = vunpack.c.h.b16 %v344
      %v694 = vunpack.c.l.b16 %v345
      %v695 = vunpack.c.h.b16 %v345
      %v696 = vunpack.c.l.b16 %v346
      %v697 = vunpack.c.h.b16 %v346
      %v698 = vunpack.c.l.b16 %v347
      %v699 = vunpack.c.h.b16 %v347
      %v700 = vunpack.c.l.b16 %v348
      %v701 = vunpack.c.h.b16 %v348
      %v702 = vunpack.c.l.b16 %v349
      %v703 = vunpack.c.h.b16 %v349
      %v704 = vunpack.c.l.b16 %v350
      %v705 = vunpack.c.h.b16 %v350
      %v706 = vunpack.c.l.b16 %v351
      %v707 = vunpack.c.h.b16 %v351
      %v708 = vunpack.c.l.b16 %v352
      %v709 = vunpack.c.h.b16 %v352
      %v710 = vunpack.c.l.b16 %v353
      %v711 = vunpack.c.h.b16 %v353
      %v712 = vunpack.c.l.b16 %v354
      %v713 = vunpack.c.h.b16 %v354
      %v714 = vunpack.c.l.b16 %v355
      %v715 = vunpack.c.h.b16 %v355
      %v716 = vunpack.c.l.b16 %v356
      %v717 = vunpack.c.h.b16 %v356
      %v718 = vunpack.c.l.b16 %v357
      %v719 = vunpack.c.h.b16 %v357
      %v720 = vunpack.c.l.b16 %v358
      %v721 = vunpack.c.h.b16 %v358
      %v722 = vunpack.c.l.b16 %v359
      %v723 = vunpack.c.h.b16 %v359
      %v724 = vunpack.c.l.b16 %v360
      %v725 = vunpack.c.h.b16 %v360
      %v726 = vunpack.c.l.b16 %v361
      %v727 = vunpack.c.h.b16 %v361
      %v728 = vunpack.c.l.b16 %v362
      %v729 = vunpack.c.h.b16 %v362
      %v730 = vunpack.c.l.b16 %v363
      %v731 = vunpack.c.h.b16 %v363
      %v732 = vunpack.c.l.b16 %v364
      %v733 = vunpack.c.h.b16 %v364
      %v734 = vunpack.c.l.b16 %v365
      %v735 = vunpack.c.h.b16 %v365
      %v736 = vunpack.c.l.b16 %v366
      %v737 = vunpack.c.h.b16 %v366
      %v738 = vunpack.c.l.b16 %v367
      %v739 = vunpack.c.h.b16 %v367
      %v740 = vunpack.c.l.b16 %v368
      %v741 = vunpack.c.h.b16 %v368
      %v742 = vunpack.c.l.b16 %v369
      %v743 = vunpack.c.h.b16 %v369
      %v744 = vunpack.c.l.b16 %v370
      %v745 = vunpack.c.h.b16 %v370
      %v746 = vunpack.c.l.b16 %v371
      %v747 = vunpack.c.h.b16 %v371
      %v748 = vunpack.c.l.b16 %v372
      %v749 = vunpack.c.h.b16 %v372
      %v750 = vunpack.c.l.b16 %v373
      %v751 = vunpack.c.h.b16 %v373
      %v752 = vunpack.c.l.b16 %v374
      %v753 = vunpack.c.h.b16 %v374
      %v754 = vunpack.c.l.b16 %v375
      %v755 = vunpack.c.h.b16 %v375
      %v756 = vunpack.c.l.b16 %v376
      %v757 = vunpack.c.h.b16 %v376
      %v758 = vunpack.c.l.b16 %v377
      %v759 = vunpack.c.h.b16 %v377
      %v760 = vunpack.c.l.b16 %v378
      %v761 = vunpack.c.h.b16 %v378
      %v762 = vunpack.c.l.b16 %v379
      %v763 = vunpack.c.h.b16 %v379
      %v764 = vpack.c.b16 %v512, %v508
      %v765 = vpack.c.b16 %v513, %v509
      %v766 = vpack.c.b16 %v514, %v510
      %v767 = vpack.c.b16 %v515, %v511
      %v768 = vpack.c.b16 %v520, %v516
      %v769 = vpack.c.b16 %v521, %v517
      %v770 = vpack.c.b16 %v522, %v518
      %v771 = vpack.c.b16 %v523, %v519
      %v772 = vpack.c.b16 %v528, %v524
      %v773 = vpack.c.b16 %v529, %v525
      %v774 = vpack.c.b16 %v530, %v526
      %v775 = vpack.c.b16 %v531, %v527
      %v776 = vpack.c.b16 %v536, %v532
      %v777 = vpack.c.b16 %v537, %v533
      %v778 = vpack.c.b16 %v538, %v534
      %v779 = vpack.c.b16 %v539, %v535
      %v780 = vpack.c.b16 %v544, %v540
      %v781 = vpack.c.b16 %v545, %v541
      %v782 = vpack.c.b16 %v546, %v542
      %v783 = vpack.c.b16 %v547, %v543
      %v784 = vpack.c.b16 %v552, %v548
      %v785 = vpack.c.b16 %v553, %v549
      %v786 = vpack.c.b16 %v554, %v550
      %v787 = vpack.c.b16 %v555, %v551
      %v788 = vpack.c.b16 %v560, %v556
      %v789 = vpack.c.b16 %v561, %v557
      %v790 = vpack.c.b16 %v562, %v558
      %v791 = vpack.c.b16 %v563, %v559
      %v792 = vpack.c.b16 %v568, %v564
      %v793 = vpack.c.b16 %v569, %v565
      %v794 = vpack.c.b16 %v570, %v566
      %v795 = vpack.c.b16 %v571, %v567
      %v796 = vpack.c.b16 %v576, %v572
      %v797 = vpack.c.b16 %v577, %v573
      %v798 = vpack.c.b16 %v578, %v574
      %v799 = vpack.c.b16 %v579, %v575
      %v800 = vpack.c.b16 %v584, %v580
      %v801 = vpack.c.b16 %v585, %v581
      %v802 = vpack.c.b16 %v586, %v582
      %v803 = vpack.c.b16 %v587, %v583
      %v804 = vpack.c.b16 %v592, %v588
      %v805 = vpack.c.b16 %v593, %v589
      %v806 = vpack.c.b16 %v594, %v590
      %v807 = vpack.c.b16 %v595, %v591
      %v808 = vpack.c.b16 %v600, %v596
      %v809 = vpack.c.b16 %v601, %v597
      %v810 = vpack.c.b16 %v602, %v598
      %v811 = vpack.c.b16 %v603, %v599
      %v812 = vpack.c.b16 %v608, %v604
      %v813 = vpack.c.b16 %v609, %v605
      %v814 = vpack.c.b16 %v610, %v606
      %v815 = vpack.c.b16 %v611, %v607
      %v816 = vpack.c.b16 %v616, %v612
      %v817 = vpack.c.b16 %v617, %v613
      %v818 = vpack.c.b16 %v618, %v614
      %v819 = vpack.c.b16 %v619, %v615
      %v820 = vpack.c.b16 %v624, %v620
      %v821 = vpack.c.b16 %v625, %v621
      %v822 = vpack.c.b16 %v626, %v622
      %v823 = vpack.c.b16 %v627, %v623
      %v824 = vpack.c.b16 %v632, %v628
      %v825 = vpack.c.b16 %v633, %v629
      %v826 = vpack.c.b16 %v634, %v630
      %v827 = vpack.c.b16 %v635, %v631
      %v828 = vpack.c.b16 %v640, %v636
      %v829 = vpack.c.b16 %v641, %v637
      %v830 = vpack.c.b16 %v642, %v638
      %v831 = vpack.c.b16 %v643, %v639
      %v832 = vpack.c.b16 %v648, %v644
      %v833 = vpack.c.b16 %v649, %v645
      %v834 = vpack.c.b16 %v650, %v646
      %v835 = vpack.c.b16 %v651, %v647
      %v836 = vpack.c.b16 %v656, %v652
      %v837 = vpack.c.b16 %v657, %v653
      %v838 = vpack.c.b16 %v658, %v654
      %v839 = vpack.c.b16 %v659, %v655
      %v840 = vpack.c.b16 %v664, %v660
      %v841 = vpack.c.b16 %v665, %v661
      %v842 = vpack.c.b16 %v666, %v662
      %v843 = vpack.c.b16 %v667, %v663
      %v844 = vpack.c.b16 %v672, %v668
      %v845 = vpack.c.b16 %v673, %v669
      %v846 = vpack.c.b16 %v674, %v670
      %v847 = vpack.c.b16 %v675, %v671
      %v848 = vpack.c.b16 %v680, %v676
      %v849 = vpack.c.b16 %v681, %v677
      %v850 = vpack.c.b16 %v682, %v678
      %v851 = vpack.c.b16 %v683, %v679
      %v852 = vpack.c.b16 %v688, %v684
      %v853 = vpack.c.b16 %v689, %v685
      %v854 = vpack.c.b16 %v690, %v686
      %v855 = vpack.c.b16 %v691, %v687
      %v856 = vpack.c.b16 %v696, %v692
      %v857 = vpack.c.b16 %v697, %v693
      %v858 = vpack.c.b16 %v698, %v694
      %v859 = vpack.c.b16 %v699, %v695
      %v860 = vpack.c.b16 %v704, %v700
      %v861 = vpack.c.b16 %v705, %v701
      %v862 = vpack.c.b16 %v706, %v702
      %v863 = vpack.c.b16 %v707, %v703
      %v864 = vpack.c.b16 %v712, %v708
      %v865 = vpack.c.b16 %v713, %v709
      %v866 = vpack.c.b16 %v714, %v710
      %v867 = vpack.c.b16 %v715, %v711
      %v868 = vpack.c.b16 %v720, %v716
      %v869 = vpack.c.b16 %v721, %v717
      %v870 = vpack.c.b16 %v722, %v718
      %v871 = vpack.c.b16 %v723, %v719
      %v872 = vpack.c.b16 %v728, %v724
      %v873 = vpack.c.b16 %v729, %v725
      %v874 = vpack.c.b16 %v730, %v726
      %v875 = vpack.c.b16 %v731, %v727
      %v876 = vpack.c.b16 %v736, %v732
      %v877 = vpack.c.b16 %v737, %v733
      %v878 = vpack.c.b16 %v738, %v734
      %v879 = vpack.c.b16 %v739, %v735
      %v880 = vpack.c.b16 %v744, %v740
      %v881 = vpack.c.b16 %v745, %v741
      %v882 = vpack.c.b16 %v746, %v742
      %v883 = vpack.c.b16 %v747, %v743
      %v884 = vpack.c.b16 %v752, %v748
      %v885 = vpack.c.b16 %v753, %v749
      %v886 = vpack.c.b16 %v754, %v750
      %v887 = vpack.c.b16 %v755, %v751
      %v888 = vpack.c.b16 %v760, %v756
      %v889 = vpack.c.b16 %v761, %v757
      %v890 = vpack.c.b16 %v762, %v758
      %v891 = vpack.c.b16 %v763, %v759
      %v1084 = vunpack.c.l.b16 %v124
      %v1085 = vunpack.c.l.b16 %v125
      %v1086 = vunpack.c.l.b16 %v126
      %v1087 = vunpack.c.l.b16 %v127
      %v1088 = vunpack.c.l.b16 %v128
      %v1089 = vunpack.c.l.b16 %v129
      %v1090 = vunpack.c.l.b16 %v130
      %v1091 = vunpack.c.l.b16 %v131
      %v1092 = vunpack.c.l.b16 %v132
      %v1093 = vunpack.c.l.b16 %v133
      %v1094 = vunpack.c.l.b16 %v134
      %v1095 = vunpack.c.l.b16 %v135
      %v1096 = vunpack.c.l.b16 %v136
      %v1097 = vunpack.c.l.b16 %v137
      %v1098 = vunpack.c.l.b16 %v138
      %v1099 = vunpack.c.l.b16 %v139
      %v1100 = vunpack.c.l.b16 %v140
      %v1101 = vunpack.c.l.b16 %v141
      %v1102 = vunpack.c.l.b16 %v142
      %v1103 = vunpack.c.l.b16 %v143
      %v1104 = vunpack.c.l.b16 %v144
      %v1105 = vunpack.c.l.b16 %v145
      %v1106 = vunpack.c.l.b16 %v146
      %v1107 = vunpack.c.l.b16 %v147
      %v1108 = vunpack.c.l.b16 %v148
      %v1109 = vunpack.c.l.b16 %v149
      %v1110 = vunpack.c.l.b16 %v150
      %v1111 = vunpack.c.l.b16 %v151
      %v1112 = vunpack.c.l.b16 %v152
      %v1113 = vunpack.c.l.b16 %v153
      %v1114 = vunpack.c.l.b16 %v154
      %v1115 = vunpack.c.l.b16 %v155
      %v1116 = vunpack.c.l.b16 %v156
      %v1117 = vunpack.c.l.b16 %v157
      %v1118 = vunpack.c.l.b16 %v158
      %v1119 = vunpack.c.l.b16 %v159
      %v1120 = vunpack.c.l.b16 %v160
      %v1121 = vunpack.c.l.b16 %v161
      %v1122 = vunpack.c.l.b16 %v162
      %v1123 = vunpack.c.l.b16 %v163
      %v1124 = vunpack.c.l.b16 %v164
      %v1125 = vunpack.c.l.b16 %v165
      %v1126 = vunpack.c.l.b16 %v166
      %v1127 = vunpack.c.l.b16 %v167
      %v1128 = vunpack.c.l.b16 %v168
      %v1129 = vunpack.c.l.b16 %v169
      %v1130 = vunpack.c.l.b16 %v170
      %v1131 = vunpack.c.l.b16 %v171
      %v1132 = vunpack.c.l.b16 %v172
      %v1133 = vunpack.c.l.b16 %v173
      %v1134 = vunpack.c.l.b16 %v174
      %v1135 = vunpack.c.l.b16 %v175
      %v1136 = vunpack.c.l.b16 %v176
      %v1137 = vunpack.c.l.b16 %v177
      %v1138 = vunpack.c.l.b16 %v178
      %v1139 = vunpack.c.l.b16 %v179
      %v1140 = vunpack.c.l.b16 %v180
      %v1141 = vunpack.c.l.b16 %v181
      %v1142 = vunpack.c.l.b16 %v182
      %v1143 = vunpack.c.l.b16 %v183
      %v1144 = vunpack.c.l.b16 %v184
      %v1145 = vunpack.c.l.b16 %v185
      %v1146 = vunpack.c.l.b16 %v186
      %v1147 = vunpack.c.l.b16 %v187
      %v1148 = vpack.c.b16 %v1085, %v1084
      %v1149 = vpack.c.b16 %v1087, %v1086
      %v1150 = vpack.c.b16 %v1089, %v1088
      %v1151 = vpack.c.b16 %v1091, %v1090
      %v1152 = vpack.c.b16 %v1093, %v1092
      %v1153 = vpack.c.b16 %v1095, %v1094
      %v1154 = vpack.c.b16 %v1097, %v1096
      %v1155 = vpack.c.b16 %v1099, %v1098
      %v1156 = vpack.c.b16 %v1101, %v1100
      %v1157 = vpack.c.b16 %v1103, %v1102
      %v1158 = vpack.c.b16 %v1105, %v1104
      %v1159 = vpack.c.b16 %v1107, %v1106
      %v1160 = vpack.c.b16 %v1109, %v1108
      %v1161 = vpack.c.b16 %v1111, %v1110
      %v1162 = vpack.c.b16 %v1113, %v1112
      %v1163 = vpack.c.b16 %v1115, %v1114
      %v1164 = vpack.c.b16 %v1117, %v1116
      %v1165 = vpack.c.b16 %v1119, %v1118
      %v1166 = vpack.c.b16 %v1121, %v1120
      %v1167 = vpack.c.b16 %v1123, %v1122
      %v1168 = vpack.c.b16 %v1125, %v1124
      %v1169 = vpack.c.b16 %v1127, %v1126
      %v1170 = vpack.c.b16 %v1129, %v1128
      %v1171 = vpack.c.b16 %v1131, %v1130
      %v1172 = vpack.c.b16 %v1133, %v1132
      %v1173 = vpack.c.b16 %v1135, %v1134
      %v1174 = vpack.c.b16 %v1137, %v1136
      %v1175 = vpack.c.b16 %v1139, %v1138
      %v1176 = vpack.c.b16 %v1141, %v1140
      %v1177 = vpack.c.b16 %v1143, %v1142
      %v1178 = vpack.c.b16 %v1145, %v1144
      %v1179 = vpack.c.b16 %v1147, %v1146
      %1212 = vmatprep.subr.bf16.mxu0 0
      %1213 = vmatpush1.bf16.msra.mxu0 %v1155
      %1214 = vmatprep.subr.bf16.mxu0 0
      %1215 = vmatpush1.bf16.msra.mxu0 %v1154
      %1216 = vmatprep.subr.bf16.mxu0 0
      %1217 = vmatpush1.bf16.msra.mxu0 %v1153
      %1218 = vmatprep.subr.bf16.mxu0 0
      %1219 = vmatpush1.bf16.msra.mxu0 %v1152
      %1220 = vmatprep.subr.bf16.mxu0 0
      %1221 = vmatpush1.bf16.msra.mxu0 %v1151
      %1222 = vmatprep.subr.bf16.mxu0 0
      %1223 = vmatpush1.bf16.msra.mxu0 %v1150
      %1224 = vmatprep.subr.bf16.mxu0 0
      %1225 = vmatpush1.bf16.msra.mxu0 %v1149
      %1226 = vmatprep.subr.bf16.mxu0 0
      %1227 = vmatpush1.bf16.msra.mxu0 %v1148
      %1228 = vmatprep.subr.bf16.mxu0 0
      %1229 = vmatpush2.bf16.msra.mxu0 %v1163
      %1230 = vmatprep.subr.bf16.mxu0 0
      %1231 = vmatpush2.bf16.msra.mxu0 %v1162
      %1232 = vmatprep.subr.bf16.mxu0 0
      %1233 = vmatpush2.bf16.msra.mxu0 %v1161
      %1234 = vmatprep.subr.bf16.mxu0 0
      %1235 = vmatpush2.bf16.msra.mxu0 %v1160
      %1236 = vmatprep.subr.bf16.mxu0 0
      %1237 = vmatpush2.bf16.msra.mxu0 %v1159
      %1238 = vmatprep.subr.bf16.mxu0 0
      %1239 = vmatpush2.bf16.msra.mxu0 %v1158
      %1240 = vmatprep.subr.bf16.mxu0 0
      %1241 = vmatpush2.bf16.msra.mxu0 %v1157
      %1242 = vmatprep.subr.bf16.mxu0 0
      %1243 = vmatpush2.bf16.msra.mxu0 %v1156
      %1244 = vmatprep.mubr.bf16.mxu0 %v765
      %1245 = vmatmul.mubr.bf16.gmra.mxu0 %v764
      %v1246 = vpop.f32.mrf.mxu0
      %v1247 = vadd.f32 0.0, %v1246
      %v1248 = vpop.f32.mrf.mxu0
      %v1249 = vpop.f32.mrf.mxu0
      %v1250 = vadd.f32 0.0, %v1249
      %v1251 = vpop.f32.mrf.mxu0
      %1252 = vmatprep.mubr.bf16.mxu0 %v769
      %1253 = vmatmul.mubr.bf16.gmra.mxu0 %v768
      %v1254 = vpop.f32.mrf.mxu0
      %v1255 = vadd.f32 0.0, %v1254
      %v1256 = vpop.f32.mrf.mxu0
      %v1257 = vpop.f32.mrf.mxu0
      %v1258 = vadd.f32 0.0, %v1257
      %v1259 = vpop.f32.mrf.mxu0
      %1260 = vmatprep.mubr.bf16.mxu0 %v773
      %1261 = vmatmul.mubr.bf16.gmra.mxu0 %v772
      %v1262 = vpop.f32.mrf.mxu0
      %v1263 = vadd.f32 0.0, %v1262
      %v1264 = vpop.f32.mrf.mxu0
      %v1265 = vpop.f32.mrf.mxu0
      %v1266 = vadd.f32 0.0, %v1265
      %v1267 = vpop.f32.mrf.mxu0
      %1268 = vmatprep.mubr.bf16.mxu0 %v777
      %1269 = vmatmul.mubr.bf16.gmra.mxu0 %v776
      %v1270 = vpop.f32.mrf.mxu0
      %v1271 = vadd.f32 0.0, %v1270
      %v1272 = vpop.f32.mrf.mxu0
      %v1273 = vpop.f32.mrf.mxu0
      %v1274 = vadd.f32 0.0, %v1273
      %v1275 = vpop.f32.mrf.mxu0
      %1276 = vmatprep.mubr.bf16.mxu0 %v781
      %1277 = vmatmul.mubr.bf16.gmra.mxu0 %v780
      %v1278 = vpop.f32.mrf.mxu0
      %v1279 = vadd.f32 0.0, %v1278
      %v1280 = vpop.f32.mrf.mxu0
      %v1281 = vpop.f32.mrf.mxu0
      %v1282 = vadd.f32 0.0, %v1281
      %v1283 = vpop.f32.mrf.mxu0
      %1284 = vmatprep.mubr.bf16.mxu0 %v785
      %1285 = vmatmul.mubr.bf16.gmra.mxu0 %v784
      %v1286 = vpop.f32.mrf.mxu0
      %v1287 = vadd.f32 0.0, %v1286
      %v1288 = vpop.f32.mrf.mxu0
      %v1289 = vpop.f32.mrf.mxu0
      %v1290 = vadd.f32 0.0, %v1289
      %v1291 = vpop.f32.mrf.mxu0
      %1292 = vmatprep.mubr.bf16.mxu0 %v789
      %1293 = vmatmul.mubr.bf16.gmra.mxu0 %v788
      %v1294 = vpop.f32.mrf.mxu0
      %v1295 = vadd.f32 0.0, %v1294
      %v1296 = vpop.f32.mrf.mxu0
      %v1297 = vpop.f32.mrf.mxu0
      %v1298 = vadd.f32 0.0, %v1297
      %v1299 = vpop.f32.mrf.mxu0
      %1300 = vmatprep.mubr.bf16.mxu0 %v793
      %1301 = vmatmul.mubr.bf16.gmra.mxu0 %v792
      %v1302 = vpop.f32.mrf.mxu0
      %v1303 = vadd.f32 0.0, %v1302
      %v1304 = vpop.f32.mrf.mxu0
      %v1305 = vpop.f32.mrf.mxu0
      %v1306 = vadd.f32 0.0, %v1305
      %v1307 = vpop.f32.mrf.mxu0
      %1308 = vmatprep.mubr.bf16.mxu0 %v797
      %1309 = vmatmul.mubr.bf16.gmra.mxu0 %v796
      %v1310 = vpop.f32.mrf.mxu0
      %v1311 = vadd.f32 0.0, %v1310
      %v1312 = vpop.f32.mrf.mxu0
      %v1313 = vpop.f32.mrf.mxu0
      %v1314 = vadd.f32 0.0, %v1313
      %v1315 = vpop.f32.mrf.mxu0
      %1316 = vmatprep.mubr.bf16.mxu0 %v801
      %1317 = vmatmul.mubr.bf16.gmra.mxu0 %v800
      %v1318 = vpop.f32.mrf.mxu0
      %v1319 = vadd.f32 0.0, %v1318
      %v1320 = vpop.f32.mrf.mxu0
      %v1321 = vpop.f32.mrf.mxu0
      %v1322 = vadd.f32 0.0, %v1321
      %v1323 = vpop.f32.mrf.mxu0
      %1324 = vmatprep.mubr.bf16.mxu0 %v805
      %1325 = vmatmul.mubr.bf16.gmra.mxu0 %v804
      %v1326 = vpop.f32.mrf.mxu0
      %v1327 = vadd.f32 0.0, %v1326
      %v1328 = vpop.f32.mrf.mxu0
      %v1329 = vpop.f32.mrf.mxu0
      %v1330 = vadd.f32 0.0, %v1329
      %v1331 = vpop.f32.mrf.mxu0
      %1332 = vmatprep.mubr.bf16.mxu0 %v809
      %1333 = vmatmul.mubr.bf16.gmra.mxu0 %v808
      %v1334 = vpop.f32.mrf.mxu0
      %v1335 = vadd.f32 0.0, %v1334
      %v1336 = vpop.f32.mrf.mxu0
      %v1337 = vpop.f32.mrf.mxu0
      %v1338 = vadd.f32 0.0, %v1337
      %v1339 = vpop.f32.mrf.mxu0
      %1340 = vmatprep.mubr.bf16.mxu0 %v813
      %1341 = vmatmul.mubr.bf16.gmra.mxu0 %v812
      %v1342 = vpop.f32.mrf.mxu0
      %v1343 = vadd.f32 0.0, %v1342
      %v1344 = vpop.f32.mrf.mxu0
      %v1345 = vpop.f32.mrf.mxu0
      %v1346 = vadd.f32 0.0, %v1345
      %v1347 = vpop.f32.mrf.mxu0
      %1348 = vmatprep.mubr.bf16.mxu0 %v817
      %1349 = vmatmul.mubr.bf16.gmra.mxu0 %v816
      %v1350 = vpop.f32.mrf.mxu0
      %v1351 = vadd.f32 0.0, %v1350
      %v1352 = vpop.f32.mrf.mxu0
      %v1353 = vpop.f32.mrf.mxu0
      %v1354 = vadd.f32 0.0, %v1353
      %v1355 = vpop.f32.mrf.mxu0
      %1356 = vmatprep.mubr.bf16.mxu0 %v821
      %1357 = vmatmul.mubr.bf16.gmra.mxu0 %v820
      %v1358 = vpop.f32.mrf.mxu0
      %v1359 = vadd.f32 0.0, %v1358
      %v1360 = vpop.f32.mrf.mxu0
      %v1361 = vpop.f32.mrf.mxu0
      %v1362 = vadd.f32 0.0, %v1361
      %v1363 = vpop.f32.mrf.mxu0
      %1364 = vmatprep.mubr.bf16.mxu0 %v825
      %1365 = vmatmul.mubr.bf16.gmra.mxu0 %v824
      %v1366 = vpop.f32.mrf.mxu0
      %v1367 = vadd.f32 0.0, %v1366
      %v1368 = vpop.f32.mrf.mxu0
      %v1369 = vpop.f32.mrf.mxu0
      %v1370 = vadd.f32 0.0, %v1369
      %v1371 = vpop.f32.mrf.mxu0
      %1372 = vmatprep.mubr.bf16.mxu0 %v829
      %1373 = vmatmul.mubr.bf16.gmra.mxu0 %v828
      %v1374 = vpop.f32.mrf.mxu0
      %v1375 = vadd.f32 0.0, %v1374
      %v1376 = vpop.f32.mrf.mxu0
      %v1377 = vpop.f32.mrf.mxu0
      %v1378 = vadd.f32 0.0, %v1377
      %v1379 = vpop.f32.mrf.mxu0
      %1380 = vmatprep.mubr.bf16.mxu0 %v833
      %1381 = vmatmul.mubr.bf16.gmra.mxu0 %v832
      %v1382 = vpop.f32.mrf.mxu0
      %v1383 = vadd.f32 0.0, %v1382
      %v1384 = vpop.f32.mrf.mxu0
      %v1385 = vpop.f32.mrf.mxu0
      %v1386 = vadd.f32 0.0, %v1385
      %v1387 = vpop.f32.mrf.mxu0
      %1388 = vmatprep.mubr.bf16.mxu0 %v837
      %1389 = vmatmul.mubr.bf16.gmra.mxu0 %v836
      %v1390 = vpop.f32.mrf.mxu0
      %v1391 = vadd.f32 0.0, %v1390
      %v1392 = vpop.f32.mrf.mxu0
      %v1393 = vpop.f32.mrf.mxu0
      %v1394 = vadd.f32 0.0, %v1393
      %v1395 = vpop.f32.mrf.mxu0
      %1396 = vmatprep.mubr.bf16.mxu0 %v841
      %1397 = vmatmul.mubr.bf16.gmra.mxu0 %v840
      %v1398 = vpop.f32.mrf.mxu0
      %v1399 = vadd.f32 0.0, %v1398
      %v1400 = vpop.f32.mrf.mxu0
      %v1401 = vpop.f32.mrf.mxu0
      %v1402 = vadd.f32 0.0, %v1401
      %v1403 = vpop.f32.mrf.mxu0
      %1404 = vmatprep.mubr.bf16.mxu0 %v845
      %1405 = vmatmul.mubr.bf16.gmra.mxu0 %v844
      %v1406 = vpop.f32.mrf.mxu0
      %v1407 = vadd.f32 0.0, %v1406
      %v1408 = vpop.f32.mrf.mxu0
      %v1409 = vpop.f32.mrf.mxu0
      %v1410 = vadd.f32 0.0, %v1409
      %v1411 = vpop.f32.mrf.mxu0
      %1412 = vmatprep.mubr.bf16.mxu0 %v849
      %1413 = vmatmul.mubr.bf16.gmra.mxu0 %v848
      %v1414 = vpop.f32.mrf.mxu0
      %v1415 = vadd.f32 0.0, %v1414
      %v1416 = vpop.f32.mrf.mxu0
      %v1417 = vpop.f32.mrf.mxu0
      %v1418 = vadd.f32 0.0, %v1417
      %v1419 = vpop.f32.mrf.mxu0
      %1420 = vmatprep.mubr.bf16.mxu0 %v853
      %1421 = vmatmul.mubr.bf16.gmra.mxu0 %v852
      %v1422 = vpop.f32.mrf.mxu0
      %v1423 = vadd.f32 0.0, %v1422
      %v1424 = vpop.f32.mrf.mxu0
      %v1425 = vpop.f32.mrf.mxu0
      %v1426 = vadd.f32 0.0, %v1425
      %v1427 = vpop.f32.mrf.mxu0
      %1428 = vmatprep.mubr.bf16.mxu0 %v857
      %1429 = vmatmul.mubr.bf16.gmra.mxu0 %v856
      %v1430 = vpop.f32.mrf.mxu0
      %v1431 = vadd.f32 0.0, %v1430
      %v1432 = vpop.f32.mrf.mxu0
      %v1433 = vpop.f32.mrf.mxu0
      %v1434 = vadd.f32 0.0, %v1433
      %v1435 = vpop.f32.mrf.mxu0
      %1436 = vmatprep.mubr.bf16.mxu0 %v861
      %1437 = vmatmul.mubr.bf16.gmra.mxu0 %v860
      %v1438 = vpop.f32.mrf.mxu0
      %v1439 = vadd.f32 0.0, %v1438
      %v1440 = vpop.f32.mrf.mxu0
      %v1441 = vpop.f32.mrf.mxu0
      %v1442 = vadd.f32 0.0, %v1441
      %v1443 = vpop.f32.mrf.mxu0
      %1444 = vmatprep.mubr.bf16.mxu0 %v865
      %1445 = vmatmul.mubr.bf16.gmra.mxu0 %v864
      %v1446 = vpop.f32.mrf.mxu0
      %v1447 = vadd.f32 0.0, %v1446
      %v1448 = vpop.f32.mrf.mxu0
      %v1449 = vpop.f32.mrf.mxu0
      %v1450 = vadd.f32 0.0, %v1449
      %v1451 = vpop.f32.mrf.mxu0
      %1452 = vmatprep.mubr.bf16.mxu0 %v869
      %1453 = vmatmul.mubr.bf16.gmra.mxu0 %v868
      %v1454 = vpop.f32.mrf.mxu0
      %v1455 = vadd.f32 0.0, %v1454
      %v1456 = vpop.f32.mrf.mxu0
      %v1457 = vpop.f32.mrf.mxu0
      %v1458 = vadd.f32 0.0, %v1457
      %v1459 = vpop.f32.mrf.mxu0
      %1460 = vmatprep.mubr.bf16.mxu0 %v873
      %1461 = vmatmul.mubr.bf16.gmra.mxu0 %v872
      %v1462 = vpop.f32.mrf.mxu0
      %v1463 = vadd.f32 0.0, %v1462
      %v1464 = vpop.f32.mrf.mxu0
      %v1465 = vpop.f32.mrf.mxu0
      %v1466 = vadd.f32 0.0, %v1465
      %v1467 = vpop.f32.mrf.mxu0
      %1468 = vmatprep.mubr.bf16.mxu0 %v877
      %1469 = vmatmul.mubr.bf16.gmra.mxu0 %v876
      %v1470 = vpop.f32.mrf.mxu0
      %v1471 = vadd.f32 0.0, %v1470
      %v1472 = vpop.f32.mrf.mxu0
      %v1473 = vpop.f32.mrf.mxu0
      %v1474 = vadd.f32 0.0, %v1473
      %v1475 = vpop.f32.mrf.mxu0
      %1476 = vmatprep.mubr.bf16.mxu0 %v881
      %1477 = vmatmul.mubr.bf16.gmra.mxu0 %v880
      %v1478 = vpop.f32.mrf.mxu0
      %v1479 = vadd.f32 0.0, %v1478
      %v1480 = vpop.f32.mrf.mxu0
      %v1481 = vpop.f32.mrf.mxu0
      %v1482 = vadd.f32 0.0, %v1481
      %v1483 = vpop.f32.mrf.mxu0
      %1484 = vmatprep.mubr.bf16.mxu0 %v885
      %1485 = vmatmul.mubr.bf16.gmra.mxu0 %v884
      %v1486 = vpop.f32.mrf.mxu0
      %v1487 = vadd.f32 0.0, %v1486
      %v1488 = vpop.f32.mrf.mxu0
      %v1489 = vpop.f32.mrf.mxu0
      %v1490 = vadd.f32 0.0, %v1489
      %v1491 = vpop.f32.mrf.mxu0
      %1492 = vmatprep.mubr.bf16.mxu0 %v889
      %1493 = vmatmul.mubr.bf16.gmra.mxu0 %v888
      %v1494 = vpop.f32.mrf.mxu0
      %v1495 = vadd.f32 0.0, %v1494
      %v1496 = vpop.f32.mrf.mxu0
      %v1497 = vpop.f32.mrf.mxu0
      %v1498 = vadd.f32 0.0, %v1497
      %v1499 = vpop.f32.mrf.mxu0
      %1500 = vdwg.mxu0
      %1501 = vmatprep.subr.bf16.mxu0 0
      %1502 = vmatpush1.bf16.msra.mxu0 %v1171
      %1503 = vmatprep.subr.bf16.mxu0 0
      %1504 = vmatpush1.bf16.msra.mxu0 %v1170
      %1505 = vmatprep.subr.bf16.mxu0 0
      %1506 = vmatpush1.bf16.msra.mxu0 %v1169
      %1507 = vmatprep.subr.bf16.mxu0 0
      %1508 = vmatpush1.bf16.msra.mxu0 %v1168
      %1509 = vmatprep.subr.bf16.mxu0 0
      %1510 = vmatpush1.bf16.msra.mxu0 %v1167
      %1511 = vmatprep.subr.bf16.mxu0 0
      %1512 = vmatpush1.bf16.msra.mxu0 %v1166
      %1513 = vmatprep.subr.bf16.mxu0 0
      %1514 = vmatpush1.bf16.msra.mxu0 %v1165
      %1515 = vmatprep.subr.bf16.mxu0 0
      %1516 = vmatpush1.bf16.msra.mxu0 %v1164
      %1517 = vmatprep.subr.bf16.mxu0 0
      %1518 = vmatpush2.bf16.msra.mxu0 %v1179
      %1519 = vmatprep.subr.bf16.mxu0 0
      %1520 = vmatpush2.bf16.msra.mxu0 %v1178
      %1521 = vmatprep.subr.bf16.mxu0 0
      %1522 = vmatpush2.bf16.msra.mxu0 %v1177
      %1523 = vmatprep.subr.bf16.mxu0 0
      %1524 = vmatpush2.bf16.msra.mxu0 %v1176
      %1525 = vmatprep.subr.bf16.mxu0 0
      %1526 = vmatpush2.bf16.msra.mxu0 %v1175
      %1527 = vmatprep.subr.bf16.mxu0 0
      %1528 = vmatpush2.bf16.msra.mxu0 %v1174
      %1529 = vmatprep.subr.bf16.mxu0 0
      %1530 = vmatpush2.bf16.msra.mxu0 %v1173
      %1531 = vmatprep.subr.bf16.mxu0 0
      %1532 = vmatpush2.bf16.msra.mxu0 %v1172
      %1533 = vmatprep.mubr.bf16.mxu0 %v767
      %1534 = vmatmul.mubr.bf16.gmra.mxu0 %v766
      %v1535 = vpop.f32.mrf.mxu0
      %v1536 = vadd.f32 %v1247, %v1535
      %v1537 = vpop.f32.mrf.mxu0
      %v1538 = vpop.f32.mrf.mxu0
      %v1539 = vadd.f32 %v1250, %v1538
      %v1540 = vpop.f32.mrf.mxu0
      %1541 = vmatprep.mubr.bf16.mxu0 %v771
      %1542 = vmatmul.mubr.bf16.gmra.mxu0 %v770
      %v1543 = vpop.f32.mrf.mxu0
      %v1544 = vadd.f32 %v1255, %v1543
      %v1545 = vpop.f32.mrf.mxu0
      %v1546 = vpop.f32.mrf.mxu0
      %v1547 = vadd.f32 %v1258, %v1546
      %v1548 = vpop.f32.mrf.mxu0
      %1549 = vmatprep.mubr.bf16.mxu0 %v775
      %1550 = vmatmul.mubr.bf16.gmra.mxu0 %v774
      %v1551 = vpop.f32.mrf.mxu0
      %v1552 = vadd.f32 %v1263, %v1551
      %v1553 = vpop.f32.mrf.mxu0
      %v1554 = vpop.f32.mrf.mxu0
      %v1555 = vadd.f32 %v1266, %v1554
      %v1556 = vpop.f32.mrf.mxu0
      %1557 = vmatprep.mubr.bf16.mxu0 %v779
      %1558 = vmatmul.mubr.bf16.gmra.mxu0 %v778
      %v1559 = vpop.f32.mrf.mxu0
      %v1560 = vadd.f32 %v1271, %v1559
      %v1561 = vpop.f32.mrf.mxu0
      %v1562 = vpop.f32.mrf.mxu0
      %v1563 = vadd.f32 %v1274, %v1562
      %v1564 = vpop.f32.mrf.mxu0
      %1565 = vmatprep.mubr.bf16.mxu0 %v783
      %1566 = vmatmul.mubr.bf16.gmra.mxu0 %v782
      %v1567 = vpop.f32.mrf.mxu0
      %v1568 = vadd.f32 %v1279, %v1567
      %v1569 = vpop.f32.mrf.mxu0
      %v1570 = vpop.f32.mrf.mxu0
      %v1571 = vadd.f32 %v1282, %v1570
      %v1572 = vpop.f32.mrf.mxu0
      %1573 = vmatprep.mubr.bf16.mxu0 %v787
      %1574 = vmatmul.mubr.bf16.gmra.mxu0 %v786
      %v1575 = vpop.f32.mrf.mxu0
      %v1576 = vadd.f32 %v1287, %v1575
      %v1577 = vpop.f32.mrf.mxu0
      %v1578 = vpop.f32.mrf.mxu0
      %v1579 = vadd.f32 %v1290, %v1578
      %v1580 = vpop.f32.mrf.mxu0
      %1581 = vmatprep.mubr.bf16.mxu0 %v791
      %1582 = vmatmul.mubr.bf16.gmra.mxu0 %v790
      %v1583 = vpop.f32.mrf.mxu0
      %v1584 = vadd.f32 %v1295, %v1583
      %v1585 = vpop.f32.mrf.mxu0
      %v1586 = vpop.f32.mrf.mxu0
      %v1587 = vadd.f32 %v1298, %v1586
      %v1588 = vpop.f32.mrf.mxu0
      %1589 = vmatprep.mubr.bf16.mxu0 %v795
      %1590 = vmatmul.mubr.bf16.gmra.mxu0 %v794
      %v1591 = vpop.f32.mrf.mxu0
      %v1592 = vadd.f32 %v1303, %v1591
      %v1593 = vpop.f32.mrf.mxu0
      %v1594 = vpop.f32.mrf.mxu0
      %v1595 = vadd.f32 %v1306, %v1594
      %v1596 = vpop.f32.mrf.mxu0
      %1597 = vmatprep.mubr.bf16.mxu0 %v799
      %1598 = vmatmul.mubr.bf16.gmra.mxu0 %v798
      %v1599 = vpop.f32.mrf.mxu0
      %v1600 = vadd.f32 %v1311, %v1599
      %v1601 = vpop.f32.mrf.mxu0
      %v1602 = vpop.f32.mrf.mxu0
      %v1603 = vadd.f32 %v1314, %v1602
      %v1604 = vpop.f32.mrf.mxu0
      %1605 = vmatprep.mubr.bf16.mxu0 %v803
      %1606 = vmatmul.mubr.bf16.gmra.mxu0 %v802
      %v1607 = vpop.f32.mrf.mxu0
      %v1608 = vadd.f32 %v1319, %v1607
      %v1609 = vpop.f32.mrf.mxu0
      %v1610 = vpop.f32.mrf.mxu0
      %v1611 = vadd.f32 %v1322, %v1610
      %v1612 = vpop.f32.mrf.mxu0
      %1613 = vmatprep.mubr.bf16.mxu0 %v807
      %1614 = vmatmul.mubr.bf16.gmra.mxu0 %v806
      %v1615 = vpop.f32.mrf.mxu0
      %v1616 = vadd.f32 %v1327, %v1615
      %v1617 = vpop.f32.mrf.mxu0
      %v1618 = vpop.f32.mrf.mxu0
      %v1619 = vadd.f32 %v1330, %v1618
      %v1620 = vpop.f32.mrf.mxu0
      %1621 = vmatprep.mubr.bf16.mxu0 %v811
      %1622 = vmatmul.mubr.bf16.gmra.mxu0 %v810
      %v1623 = vpop.f32.mrf.mxu0
      %v1624 = vadd.f32 %v1335, %v1623
      %v1625 = vpop.f32.mrf.mxu0
      %v1626 = vpop.f32.mrf.mxu0
      %v1627 = vadd.f32 %v1338, %v1626
      %v1628 = vpop.f32.mrf.mxu0
      %1629 = vmatprep.mubr.bf16.mxu0 %v815
      %1630 = vmatmul.mubr.bf16.gmra.mxu0 %v814
      %v1631 = vpop.f32.mrf.mxu0
      %v1632 = vadd.f32 %v1343, %v1631
      %v1633 = vpop.f32.mrf.mxu0
      %v1634 = vpop.f32.mrf.mxu0
      %v1635 = vadd.f32 %v1346, %v1634
      %v1636 = vpop.f32.mrf.mxu0
      %1637 = vmatprep.mubr.bf16.mxu0 %v819
      %1638 = vmatmul.mubr.bf16.gmra.mxu0 %v818
      %v1639 = vpop.f32.mrf.mxu0
      %v1640 = vadd.f32 %v1351, %v1639
      %v1641 = vpop.f32.mrf.mxu0
      %v1642 = vpop.f32.mrf.mxu0
      %v1643 = vadd.f32 %v1354, %v1642
      %v1644 = vpop.f32.mrf.mxu0
      %1645 = vmatprep.mubr.bf16.mxu0 %v823
      %1646 = vmatmul.mubr.bf16.gmra.mxu0 %v822
      %v1647 = vpop.f32.mrf.mxu0
      %v1648 = vadd.f32 %v1359, %v1647
      %v1649 = vpop.f32.mrf.mxu0
      %v1650 = vpop.f32.mrf.mxu0
      %v1651 = vadd.f32 %v1362, %v1650
      %v1652 = vpop.f32.mrf.mxu0
      %1653 = vmatprep.mubr.bf16.mxu0 %v827
      %1654 = vmatmul.mubr.bf16.gmra.mxu0 %v826
      %v1655 = vpop.f32.mrf.mxu0
      %v1656 = vadd.f32 %v1367, %v1655
      %v1657 = vpop.f32.mrf.mxu0
      %v1658 = vpop.f32.mrf.mxu0
      %v1659 = vadd.f32 %v1370, %v1658
      %v1660 = vpop.f32.mrf.mxu0
      %1661 = vmatprep.mubr.bf16.mxu0 %v831
      %1662 = vmatmul.mubr.bf16.gmra.mxu0 %v830
      %v1663 = vpop.f32.mrf.mxu0
      %v1664 = vadd.f32 %v1375, %v1663
      %v1665 = vpop.f32.mrf.mxu0
      %v1666 = vpop.f32.mrf.mxu0
      %v1667 = vadd.f32 %v1378, %v1666
      %v1668 = vpop.f32.mrf.mxu0
      %1669 = vmatprep.mubr.bf16.mxu0 %v835
      %1670 = vmatmul.mubr.bf16.gmra.mxu0 %v834
      %v1671 = vpop.f32.mrf.mxu0
      %v1672 = vadd.f32 %v1383, %v1671
      %v1673 = vpop.f32.mrf.mxu0
      %v1674 = vpop.f32.mrf.mxu0
      %v1675 = vadd.f32 %v1386, %v1674
      %v1676 = vpop.f32.mrf.mxu0
      %1677 = vmatprep.mubr.bf16.mxu0 %v839
      %1678 = vmatmul.mubr.bf16.gmra.mxu0 %v838
      %v1679 = vpop.f32.mrf.mxu0
      %v1680 = vadd.f32 %v1391, %v1679
      %v1681 = vpop.f32.mrf.mxu0
      %v1682 = vpop.f32.mrf.mxu0
      %v1683 = vadd.f32 %v1394, %v1682
      %v1684 = vpop.f32.mrf.mxu0
      %1685 = vmatprep.mubr.bf16.mxu0 %v843
      %1686 = vmatmul.mubr.bf16.gmra.mxu0 %v842
      %v1687 = vpop.f32.mrf.mxu0
      %v1688 = vadd.f32 %v1399, %v1687
      %v1689 = vpop.f32.mrf.mxu0
      %v1690 = vpop.f32.mrf.mxu0
      %v1691 = vadd.f32 %v1402, %v1690
      %v1692 = vpop.f32.mrf.mxu0
      %1693 = vmatprep.mubr.bf16.mxu0 %v847
      %1694 = vmatmul.mubr.bf16.gmra.mxu0 %v846
      %v1695 = vpop.f32.mrf.mxu0
      %v1696 = vadd.f32 %v1407, %v1695
      %v1697 = vpop.f32.mrf.mxu0
      %v1698 = vpop.f32.mrf.mxu0
      %v1699 = vadd.f32 %v1410, %v1698
      %v1700 = vpop.f32.mrf.mxu0
      %1701 = vmatprep.mubr.bf16.mxu0 %v851
      %1702 = vmatmul.mubr.bf16.gmra.mxu0 %v850
      %v1703 = vpop.f32.mrf.mxu0
      %v1704 = vadd.f32 %v1415, %v1703
      %v1705 = vpop.f32.mrf.mxu0
      %v1706 = vpop.f32.mrf.mxu0
      %v1707 = vadd.f32 %v1418, %v1706
      %v1708 = vpop.f32.mrf.mxu0
      %1709 = vmatprep.mubr.bf16.mxu0 %v855
      %1710 = vmatmul.mubr.bf16.gmra.mxu0 %v854
      %v1711 = vpop.f32.mrf.mxu0
      %v1712 = vadd.f32 %v1423, %v1711
      %v1713 = vpop.f32.mrf.mxu0
      %v1714 = vpop.f32.mrf.mxu0
      %v1715 = vadd.f32 %v1426, %v1714
      %v1716 = vpop.f32.mrf.mxu0
      %1717 = vmatprep.mubr.bf16.mxu0 %v859
      %1718 = vmatmul.mubr.bf16.gmra.mxu0 %v858
      %v1719 = vpop.f32.mrf.mxu0
      %v1720 = vadd.f32 %v1431, %v1719
      %v1721 = vpop.f32.mrf.mxu0
      %v1722 = vpop.f32.mrf.mxu0
      %v1723 = vadd.f32 %v1434, %v1722
      %v1724 = vpop.f32.mrf.mxu0
      %1725 = vmatprep.mubr.bf16.mxu0 %v863
      %1726 = vmatmul.mubr.bf16.gmra.mxu0 %v862
      %v1727 = vpop.f32.mrf.mxu0
      %v1728 = vadd.f32 %v1439, %v1727
      %v1729 = vpop.f32.mrf.mxu0
      %v1730 = vpop.f32.mrf.mxu0
      %v1731 = vadd.f32 %v1442, %v1730
      %v1732 = vpop.f32.mrf.mxu0
      %1733 = vmatprep.mubr.bf16.mxu0 %v867
      %1734 = vmatmul.mubr.bf16.gmra.mxu0 %v866
      %v1735 = vpop.f32.mrf.mxu0
      %v1736 = vadd.f32 %v1447, %v1735
      %v1737 = vpop.f32.mrf.mxu0
      %v1738 = vpop.f32.mrf.mxu0
      %v1739 = vadd.f32 %v1450, %v1738
      %v1740 = vpop.f32.mrf.mxu0
      %1741 = vmatprep.mubr.bf16.mxu0 %v871
      %1742 = vmatmul.mubr.bf16.gmra.mxu0 %v870
      %v1743 = vpop.f32.mrf.mxu0
      %v1744 = vadd.f32 %v1455, %v1743
      %v1745 = vpop.f32.mrf.mxu0
      %v1746 = vpop.f32.mrf.mxu0
      %v1747 = vadd.f32 %v1458, %v1746
      %v1748 = vpop.f32.mrf.mxu0
      %1749 = vmatprep.mubr.bf16.mxu0 %v875
      %1750 = vmatmul.mubr.bf16.gmra.mxu0 %v874
      %v1751 = vpop.f32.mrf.mxu0
      %v1752 = vadd.f32 %v1463, %v1751
      %v1753 = vpop.f32.mrf.mxu0
      %v1754 = vpop.f32.mrf.mxu0
      %v1755 = vadd.f32 %v1466, %v1754
      %v1756 = vpop.f32.mrf.mxu0
      %1757 = vmatprep.mubr.bf16.mxu0 %v879
      %1758 = vmatmul.mubr.bf16.gmra.mxu0 %v878
      %v1759 = vpop.f32.mrf.mxu0
      %v1760 = vadd.f32 %v1471, %v1759
      %v1761 = vpop.f32.mrf.mxu0
      %v1762 = vpop.f32.mrf.mxu0
      %v1763 = vadd.f32 %v1474, %v1762
      %v1764 = vpop.f32.mrf.mxu0
      %1765 = vmatprep.mubr.bf16.mxu0 %v883
      %1766 = vmatmul.mubr.bf16.gmra.mxu0 %v882
      %v1767 = vpop.f32.mrf.mxu0
      %v1768 = vadd.f32 %v1479, %v1767
      %v1769 = vpop.f32.mrf.mxu0
      %v1770 = vpop.f32.mrf.mxu0
      %v1771 = vadd.f32 %v1482, %v1770
      %v1772 = vpop.f32.mrf.mxu0
      %1773 = vmatprep.mubr.bf16.mxu0 %v887
      %1774 = vmatmul.mubr.bf16.gmra.mxu0 %v886
      %v1775 = vpop.f32.mrf.mxu0
      %v1776 = vadd.f32 %v1487, %v1775
      %v1777 = vpop.f32.mrf.mxu0
      %v1778 = vpop.f32.mrf.mxu0
      %v1779 = vadd.f32 %v1490, %v1778
      %v1780 = vpop.f32.mrf.mxu0
      %1781 = vmatprep.mubr.bf16.mxu0 %v891
      %1782 = vmatmul.mubr.bf16.gmra.mxu0 %v890
      %v1783 = vpop.f32.mrf.mxu0
      %v1784 = vadd.f32 %v1495, %v1783
      %v1785 = vpop.f32.mrf.mxu0
      %v1786 = vpop.f32.mrf.mxu0
      %v1787 = vadd.f32 %v1498, %v1786
      %v1788 = vpop.f32.mrf.mxu0
      %1789 = vdwg.mxu0
      %v1790 = vadd.f32 %v188, %v1536
      %v1791 = vadd.f32 %v189, %v1539
      %v1792 = vadd.f32 %v190, %v1544
      %v1793 = vadd.f32 %v191, %v1547
      %v1794 = vadd.f32 %v192, %v1552
      %v1795 = vadd.f32 %v193, %v1555
      %v1796 = vadd.f32 %v194, %v1560
      %v1797 = vadd.f32 %v195, %v1563
      %v1798 = vadd.f32 %v196, %v1568
      %v1799 = vadd.f32 %v197, %v1571
      %v1800 = vadd.f32 %v198, %v1576
      %v1801 = vadd.f32 %v199, %v1579
      %v1802 = vadd.f32 %v200, %v1584
      %v1803 = vadd.f32 %v201, %v1587
      %v1804 = vadd.f32 %v202, %v1592
      %v1805 = vadd.f32 %v203, %v1595
      %v1806 = vadd.f32 %v204, %v1600
      %v1807 = vadd.f32 %v205, %v1603
      %v1808 = vadd.f32 %v206, %v1608
      %v1809 = vadd.f32 %v207, %v1611
      %v1810 = vadd.f32 %v208, %v1616
      %v1811 = vadd.f32 %v209, %v1619
      %v1812 = vadd.f32 %v210, %v1624
      %v1813 = vadd.f32 %v211, %v1627
      %v1814 = vadd.f32 %v212, %v1632
      %v1815 = vadd.f32 %v213, %v1635
      %v1816 = vadd.f32 %v214, %v1640
      %v1817 = vadd.f32 %v215, %v1643
      %v1818 = vadd.f32 %v216, %v1648
      %v1819 = vadd.f32 %v217, %v1651
      %v1820 = vadd.f32 %v218, %v1656
      %v1821 = vadd.f32 %v219, %v1659
      %v1822 = vadd.f32 %v220, %v1664
      %v1823 = vadd.f32 %v221, %v1667
      %v1824 = vadd.f32 %v222, %v1672
      %v1825 = vadd.f32 %v223, %v1675
      %v1826 = vadd.f32 %v224, %v1680
      %v1827 = vadd.f32 %v225, %v1683
      %v1828 = vadd.f32 %v226, %v1688
      %v1829 = vadd.f32 %v227, %v1691
      %v1830 = vadd.f32 %v228, %v1696
      %v1831 = vadd.f32 %v229, %v1699
      %v1832 = vadd.f32 %v230, %v1704
      %v1833 = vadd.f32 %v231, %v1707
      %v1834 = vadd.f32 %v232, %v1712
      %v1835 = vadd.f32 %v233, %v1715
      %v1836 = vadd.f32 %v234, %v1720
      %v1837 = vadd.f32 %v235, %v1723
      %v1838 = vadd.f32 %v236, %v1728
      %v1839 = vadd.f32 %v237, %v1731
      %v1840 = vadd.f32 %v238, %v1736
      %v1841 = vadd.f32 %v239, %v1739
      %v1842 = vadd.f32 %v240, %v1744
      %v1843 = vadd.f32 %v241, %v1747
      %v1844 = vadd.f32 %v242, %v1752
      %v1845 = vadd.f32 %v243, %v1755
      %v1846 = vadd.f32 %v244, %v1760
      %v1847 = vadd.f32 %v245, %v1763
      %v1848 = vadd.f32 %v246, %v1768
      %v1849 = vadd.f32 %v247, %v1771
      %v1850 = vadd.f32 %v248, %v1776
      %v1851 = vadd.f32 %v249, %v1779
      %v1852 = vadd.f32 %v250, %v1784
      %v1853 = vadd.f32 %v251, %v1787
      %1854 = vst [vmem:[#allocation2] sm:$0xff] %v1790
      %1855 = vst [vmem:[#allocation2 + $0x8] sm:$0xff] %v1791
      %1856 = vst [vmem:[#allocation2 + $0x10] sm:$0xff] %v1792
      %1857 = vst [vmem:[#allocation2 + $0x18] sm:$0xff] %v1793
      %1858 = vst [vmem:[#allocation2 + $0x20] sm:$0xff] %v1794
      %1859 = vst [vmem:[#allocation2 + $0x28] sm:$0xff] %v1795
      %1860 = vst [vmem:[#allocation2 + $0x30] sm:$0xff] %v1796
      %1861 = vst [vmem:[#allocation2 + $0x38] sm:$0xff] %v1797
      %1862 = vst [vmem:[#allocation2 + $0x40] sm:$0xff] %v1798
      %1863 = vst [vmem:[#allocation2 + $0x48] sm:$0xff] %v1799
      %1864 = vst [vmem:[#allocation2 + $0x50] sm:$0xff] %v1800
      %1865 = vst [vmem:[#allocation2 + $0x58] sm:$0xff] %v1801
      %1866 = vst [vmem:[#allocation2 + $0x60] sm:$0xff] %v1802
      %1867 = vst [vmem:[#allocation2 + $0x68] sm:$0xff] %v1803
      %1868 = vst [vmem:[#allocation2 + $0x70] sm:$0xff] %v1804
      %1869 = vst [vmem:[#allocation2 + $0x78] sm:$0xff] %v1805
      %1870 = vst [vmem:[#allocation2 + $0x80] sm:$0xff] %v1806
      %1871 = vst [vmem:[#allocation2 + $0x88] sm:$0xff] %v1807
      %1872 = vst [vmem:[#allocation2 + $0x90] sm:$0xff] %v1808
      %1873 = vst [vmem:[#allocation2 + $0x98] sm:$0xff] %v1809
      %1874 = vst [vmem:[#allocation2 + $0xa0] sm:$0xff] %v1810
      %1875 = vst [vmem:[#allocation2 + $0xa8] sm:$0xff] %v1811
      %1876 = vst [vmem:[#allocation2 + $0xb0] sm:$0xff] %v1812
      %1877 = vst [vmem:[#allocation2 + $0xb8] sm:$0xff] %v1813
      %1878 = vst [vmem:[#allocation2 + $0xc0] sm:$0xff] %v1814
      %1879 = vst [vmem:[#allocation2 + $0xc8] sm:$0xff] %v1815
      %1880 = vst [vmem:[#allocation2 + $0xd0] sm:$0xff] %v1816
      %1881 = vst [vmem:[#allocation2 + $0xd8] sm:$0xff] %v1817
      %1882 = vst [vmem:[#allocation2 + $0xe0] sm:$0xff] %v1818
      %1883 = vst [vmem:[#allocation2 + $0xe8] sm:$0xff] %v1819
      %1884 = vst [vmem:[#allocation2 + $0xf0] sm:$0xff] %v1820
      %1885 = vst [vmem:[#allocation2 + $0xf8] sm:$0xff] %v1821
      %1886 = vst [vmem:[#allocation2 + $0x100] sm:$0xff] %v1822
      %1887 = vst [vmem:[#allocation2 + $0x108] sm:$0xff] %v1823
      %1888 = vst [vmem:[#allocation2 + $0x110] sm:$0xff] %v1824
      %1889 = vst [vmem:[#allocation2 + $0x118] sm:$0xff] %v1825
      %1890 = vst [vmem:[#allocation2 + $0x120] sm:$0xff] %v1826
      %1891 = vst [vmem:[#allocation2 + $0x128] sm:$0xff] %v1827
      %1892 = vst [vmem:[#allocation2 + $0x130] sm:$0xff] %v1828
      %1893 = vst [vmem:[#allocation2 + $0x138] sm:$0xff] %v1829
      %1894 = vst [vmem:[#allocation2 + $0x140] sm:$0xff] %v1830
      %1895 = vst [vmem:[#allocation2 + $0x148] sm:$0xff] %v1831
      %1896 = vst [vmem:[#allocation2 + $0x150] sm:$0xff] %v1832
      %1897 = vst [vmem:[#allocation2 + $0x158] sm:$0xff] %v1833
      %1898 = vst [vmem:[#allocation2 + $0x160] sm:$0xff] %v1834
      %1899 = vst [vmem:[#allocation2 + $0x168] sm:$0xff] %v1835
      %1900 = vst [vmem:[#allocation2 + $0x170] sm:$0xff] %v1836
      %1901 = vst [vmem:[#allocation2 + $0x178] sm:$0xff] %v1837
      %1902 = vst [vmem:[#allocation2 + $0x180] sm:$0xff] %v1838
      %1903 = vst [vmem:[#allocation2 + $0x188] sm:$0xff] %v1839
      %1904 = vst [vmem:[#allocation2 + $0x190] sm:$0xff] %v1840
      %1905 = vst [vmem:[#allocation2 + $0x198] sm:$0xff] %v1841
      %1906 = vst [vmem:[#allocation2 + $0x1a0] sm:$0xff] %v1842
      %1907 = vst [vmem:[#allocation2 + $0x1a8] sm:$0xff] %v1843
      %1908 = vst [vmem:[#allocation2 + $0x1b0] sm:$0xff] %v1844
      %1909 = vst [vmem:[#allocation2 + $0x1b8] sm:$0xff] %v1845
      %1910 = vst [vmem:[#allocation2 + $0x1c0] sm:$0xff] %v1846
      %1911 = vst [vmem:[#allocation2 + $0x1c8] sm:$0xff] %v1847
      %1912 = vst [vmem:[#allocation2 + $0x1d0] sm:$0xff] %v1848
      %1913 = vst [vmem:[#allocation2 + $0x1d8] sm:$0xff] %v1849
      %1914 = vst [vmem:[#allocation2 + $0x1e0] sm:$0xff] %v1850
      %1915 = vst [vmem:[#allocation2 + $0x1e8] sm:$0xff] %v1851
      %1916 = vst [vmem:[#allocation2 + $0x1f0] sm:$0xff] %v1852
      %1917 = vst [vmem:[#allocation2 + $0x1f8] sm:$0xff] %v1853
    $region29: #{gcn_forward.4} parent=1 // pred_fallthru
      _
    // Predicated region
    $region30: #{gcn_forward.4} parent=1 // pred_check
      %p1918 = pneg %p44
    $region31: #{gcn_forward.4} parent=1 // pred_check_branch
      %1920 = sbr.rel (%p1918) target = $region33
    $region32: #{gcn_forward.4} parent=1 // pred_region
      %v1921 = vld [vmem:[#allocation2] sm:$0xff]
      %v1922 = vld [vmem:[#allocation2 + $0x8] sm:$0xff]
      %v1923 = vld [vmem:[#allocation2 + $0x10] sm:$0xff]
      %v1924 = vld [vmem:[#allocation2 + $0x18] sm:$0xff]
      %v1925 = vld [vmem:[#allocation2 + $0x20] sm:$0xff]
      %v1926 = vld [vmem:[#allocation2 + $0x28] sm:$0xff]
      %v1927 = vld [vmem:[#allocation2 + $0x30] sm:$0xff]
      %v1928 = vld [vmem:[#allocation2 + $0x38] sm:$0xff]
      %v1929 = vld [vmem:[#allocation2 + $0x40] sm:$0xff]
      %v1930 = vld [vmem:[#allocation2 + $0x48] sm:$0xff]
      %v1931 = vld [vmem:[#allocation2 + $0x50] sm:$0xff]
      %v1932 = vld [vmem:[#allocation2 + $0x58] sm:$0xff]
      %v1933 = vld [vmem:[#allocation2 + $0x60] sm:$0xff]
      %v1934 = vld [vmem:[#allocation2 + $0x68] sm:$0xff]
      %v1935 = vld [vmem:[#allocation2 + $0x70] sm:$0xff]
      %v1936 = vld [vmem:[#allocation2 + $0x78] sm:$0xff]
      %v1937 = vld [vmem:[#allocation2 + $0x80] sm:$0xff]
      %v1938 = vld [vmem:[#allocation2 + $0x88] sm:$0xff]
      %v1939 = vld [vmem:[#allocation2 + $0x90] sm:$0xff]
      %v1940 = vld [vmem:[#allocation2 + $0x98] sm:$0xff]
      %v1941 = vld [vmem:[#allocation2 + $0xa0] sm:$0xff]
      %v1942 = vld [vmem:[#allocation2 + $0xa8] sm:$0xff]
      %v1943 = vld [vmem:[#allocation2 + $0xb0] sm:$0xff]
      %v1944 = vld [vmem:[#allocation2 + $0xb8] sm:$0xff]
      %v1945 = vld [vmem:[#allocation2 + $0xc0] sm:$0xff]
      %v1946 = vld [vmem:[#allocation2 + $0xc8] sm:$0xff]
      %v1947 = vld [vmem:[#allocation2 + $0xd0] sm:$0xff]
      %v1948 = vld [vmem:[#allocation2 + $0xd8] sm:$0xff]
      %v1949 = vld [vmem:[#allocation2 + $0xe0] sm:$0xff]
      %v1950 = vld [vmem:[#allocation2 + $0xe8] sm:$0xff]
      %v1951 = vld [vmem:[#allocation2 + $0xf0] sm:$0xff]
      %v1952 = vld [vmem:[#allocation2 + $0xf8] sm:$0xff]
      %v1953 = vld [vmem:[#allocation2 + $0x100] sm:$0xff]
      %v1954 = vld [vmem:[#allocation2 + $0x108] sm:$0xff]
      %v1955 = vld [vmem:[#allocation2 + $0x110] sm:$0xff]
      %v1956 = vld [vmem:[#allocation2 + $0x118] sm:$0xff]
      %v1957 = vld [vmem:[#allocation2 + $0x120] sm:$0xff]
      %v1958 = vld [vmem:[#allocation2 + $0x128] sm:$0xff]
      %v1959 = vld [vmem:[#allocation2 + $0x130] sm:$0xff]
      %v1960 = vld [vmem:[#allocation2 + $0x138] sm:$0xff]
      %v1961 = vld [vmem:[#allocation2 + $0x140] sm:$0xff]
      %v1962 = vld [vmem:[#allocation2 + $0x148] sm:$0xff]
      %v1963 = vld [vmem:[#allocation2 + $0x150] sm:$0xff]
      %v1964 = vld [vmem:[#allocation2 + $0x158] sm:$0xff]
      %v1965 = vld [vmem:[#allocation2 + $0x160] sm:$0xff]
      %v1966 = vld [vmem:[#allocation2 + $0x168] sm:$0xff]
      %v1967 = vld [vmem:[#allocation2 + $0x170] sm:$0xff]
      %v1968 = vld [vmem:[#allocation2 + $0x178] sm:$0xff]
      %v1969 = vld [vmem:[#allocation2 + $0x180] sm:$0xff]
      %v1970 = vld [vmem:[#allocation2 + $0x188] sm:$0xff]
      %v1971 = vld [vmem:[#allocation2 + $0x190] sm:$0xff]
      %v1972 = vld [vmem:[#allocation2 + $0x198] sm:$0xff]
      %v1973 = vld [vmem:[#allocation2 + $0x1a0] sm:$0xff]
      %v1974 = vld [vmem:[#allocation2 + $0x1a8] sm:$0xff]
      %v1975 = vld [vmem:[#allocation2 + $0x1b0] sm:$0xff]
      %v1976 = vld [vmem:[#allocation2 + $0x1b8] sm:$0xff]
      %v1977 = vld [vmem:[#allocation2 + $0x1c0] sm:$0xff]
      %v1978 = vld [vmem:[#allocation2 + $0x1c8] sm:$0xff]
      %v1979 = vld [vmem:[#allocation2 + $0x1d0] sm:$0xff]
      %v1980 = vld [vmem:[#allocation2 + $0x1d8] sm:$0xff]
      %v1981 = vld [vmem:[#allocation2 + $0x1e0] sm:$0xff]
      %v1982 = vld [vmem:[#allocation2 + $0x1e8] sm:$0xff]
      %v1983 = vld [vmem:[#allocation2 + $0x1f0] sm:$0xff]
      %v1984 = vld [vmem:[#allocation2 + $0x1f8] sm:$0xff]
      %v1985 = vld [vmem:[%s4] sm:$0x1]
      %v1987 = vlaneseq
      %v1988 = vshrl.u32 %v1987, 7
      %v1989 = vsub.s32 0, %v1988
      %v1990 = vrot.slane %v1985, %v1989
      %v1992 = vadd.f32 %v1921, %v1990
      %v1993 = vadd.f32 %v1922, %v1990
      %v1994 = vadd.f32 %v1923, %v1990
      %v1995 = vadd.f32 %v1924, %v1990
      %v1996 = vadd.f32 %v1925, %v1990
      %v1997 = vadd.f32 %v1926, %v1990
      %v1998 = vadd.f32 %v1927, %v1990
      %v1999 = vadd.f32 %v1928, %v1990
      %v2000 = vadd.f32 %v1929, %v1990
      %v2001 = vadd.f32 %v1930, %v1990
      %v2002 = vadd.f32 %v1931, %v1990
      %v2003 = vadd.f32 %v1932, %v1990
      %v2004 = vadd.f32 %v1933, %v1990
      %v2005 = vadd.f32 %v1934, %v1990
      %v2006 = vadd.f32 %v1935, %v1990
      %v2007 = vadd.f32 %v1936, %v1990
      %v2008 = vadd.f32 %v1937, %v1990
      %v2009 = vadd.f32 %v1938, %v1990
      %v2010 = vadd.f32 %v1939, %v1990
      %v2011 = vadd.f32 %v1940, %v1990
      %v2012 = vadd.f32 %v1941, %v1990
      %v2013 = vadd.f32 %v1942, %v1990
      %v2014 = vadd.f32 %v1943, %v1990
      %v2015 = vadd.f32 %v1944, %v1990
      %v2016 = vadd.f32 %v1945, %v1990
      %v2017 = vadd.f32 %v1946, %v1990
      %v2018 = vadd.f32 %v1947, %v1990
      %v2019 = vadd.f32 %v1948, %v1990
      %v2020 = vadd.f32 %v1949, %v1990
      %v2021 = vadd.f32 %v1950, %v1990
      %v2022 = vadd.f32 %v1951, %v1990
      %v2023 = vadd.f32 %v1952, %v1990
      %v2024 = vadd.f32 %v1953, %v1990
      %v2025 = vadd.f32 %v1954, %v1990
      %v2026 = vadd.f32 %v1955, %v1990
      %v2027 = vadd.f32 %v1956, %v1990
      %v2028 = vadd.f32 %v1957, %v1990
      %v2029 = vadd.f32 %v1958, %v1990
      %v2030 = vadd.f32 %v1959, %v1990
      %v2031 = vadd.f32 %v1960, %v1990
      %v2032 = vadd.f32 %v1961, %v1990
      %v2033 = vadd.f32 %v1962, %v1990
      %v2034 = vadd.f32 %v1963, %v1990
      %v2035 = vadd.f32 %v1964, %v1990
      %v2036 = vadd.f32 %v1965, %v1990
      %v2037 = vadd.f32 %v1966, %v1990
      %v2038 = vadd.f32 %v1967, %v1990
      %v2039 = vadd.f32 %v1968, %v1990
      %v2040 = vadd.f32 %v1969, %v1990
      %v2041 = vadd.f32 %v1970, %v1990
      %v2042 = vadd.f32 %v1971, %v1990
      %v2043 = vadd.f32 %v1972, %v1990
      %v2044 = vadd.f32 %v1973, %v1990
      %v2045 = vadd.f32 %v1974, %v1990
      %v2046 = vadd.f32 %v1975, %v1990
      %v2047 = vadd.f32 %v1976, %v1990
      %v2048 = vadd.f32 %v1977, %v1990
      %v2049 = vadd.f32 %v1978, %v1990
      %v2050 = vadd.f32 %v1979, %v1990
      %v2051 = vadd.f32 %v1980, %v1990
      %v2052 = vadd.f32 %v1981, %v1990
      %v2053 = vadd.f32 %v1982, %v1990
      %v2054 = vadd.f32 %v1983, %v1990
      %v2055 = vadd.f32 %v1984, %v1990
      %v2056 = vmax.f32 %v1992, 0.0
      %v2057 = vmax.f32 %v1993, 0.0
      %v2058 = vmax.f32 %v1994, 0.0
      %v2059 = vmax.f32 %v1995, 0.0
      %v2060 = vmax.f32 %v1996, 0.0
      %v2061 = vmax.f32 %v1997, 0.0
      %v2062 = vmax.f32 %v1998, 0.0
      %v2063 = vmax.f32 %v1999, 0.0
      %v2064 = vmax.f32 %v2000, 0.0
      %v2065 = vmax.f32 %v2001, 0.0
      %v2066 = vmax.f32 %v2002, 0.0
      %v2067 = vmax.f32 %v2003, 0.0
      %v2068 = vmax.f32 %v2004, 0.0
      %v2069 = vmax.f32 %v2005, 0.0
      %v2070 = vmax.f32 %v2006, 0.0
      %v2071 = vmax.f32 %v2007, 0.0
      %v2072 = vmax.f32 %v2008, 0.0
      %v2073 = vmax.f32 %v2009, 0.0
      %v2074 = vmax.f32 %v2010, 0.0
      %v2075 = vmax.f32 %v2011, 0.0
      %v2076 = vmax.f32 %v2012, 0.0
      %v2077 = vmax.f32 %v2013, 0.0
      %v2078 = vmax.f32 %v2014, 0.0
      %v2079 = vmax.f32 %v2015, 0.0
      %v2080 = vmax.f32 %v2016, 0.0
      %v2081 = vmax.f32 %v2017, 0.0
      %v2082 = vmax.f32 %v2018, 0.0
      %v2083 = vmax.f32 %v2019, 0.0
      %v2084 = vmax.f32 %v2020, 0.0
      %v2085 = vmax.f32 %v2021, 0.0
      %v2086 = vmax.f32 %v2022, 0.0
      %v2087 = vmax.f32 %v2023, 0.0
      %v2088 = vmax.f32 %v2024, 0.0
      %v2089 = vmax.f32 %v2025, 0.0
      %v2090 = vmax.f32 %v2026, 0.0
      %v2091 = vmax.f32 %v2027, 0.0
      %v2092 = vmax.f32 %v2028, 0.0
      %v2093 = vmax.f32 %v2029, 0.0
      %v2094 = vmax.f32 %v2030, 0.0
      %v2095 = vmax.f32 %v2031, 0.0
      %v2096 = vmax.f32 %v2032, 0.0
      %v2097 = vmax.f32 %v2033, 0.0
      %v2098 = vmax.f32 %v2034, 0.0
      %v2099 = vmax.f32 %v2035, 0.0
      %v2100 = vmax.f32 %v2036, 0.0
      %v2101 = vmax.f32 %v2037, 0.0
      %v2102 = vmax.f32 %v2038, 0.0
      %v2103 = vmax.f32 %v2039, 0.0
      %v2104 = vmax.f32 %v2040, 0.0
      %v2105 = vmax.f32 %v2041, 0.0
      %v2106 = vmax.f32 %v2042, 0.0
      %v2107 = vmax.f32 %v2043, 0.0
      %v2108 = vmax.f32 %v2044, 0.0
      %v2109 = vmax.f32 %v2045, 0.0
      %v2110 = vmax.f32 %v2046, 0.0
      %v2111 = vmax.f32 %v2047, 0.0
      %v2112 = vmax.f32 %v2048, 0.0
      %v2113 = vmax.f32 %v2049, 0.0
      %v2114 = vmax.f32 %v2050, 0.0
      %v2115 = vmax.f32 %v2051, 0.0
      %v2116 = vmax.f32 %v2052, 0.0
      %v2117 = vmax.f32 %v2053, 0.0
      %v2118 = vmax.f32 %v2054, 0.0
      %v2119 = vmax.f32 %v2055, 0.0
      %v2120 = vld [vmem:[%s5] sm:$0xff]
      %v2121 = vld [vmem:[%s5 + $0x8] sm:$0xff]
      %v2122 = vld [vmem:[%s5 + $0x10] sm:$0xff]
      %v2123 = vld [vmem:[%s5 + $0x18] sm:$0xff]
      %2124 = vmatprep.subr.mxu0 0.0
      %2125 = vmatpush1.msra.mxu0 %v2071
      %2126 = vmatprep.subr.mxu0 0.0
      %2127 = vmatpush1.msra.mxu0 %v2070
      %2128 = vmatprep.subr.mxu0 0.0
      %2129 = vmatpush1.msra.mxu0 %v2069
      %2130 = vmatprep.subr.mxu0 0.0
      %2131 = vmatpush1.msra.mxu0 %v2068
      %2132 = vmatprep.subr.mxu0 0.0
      %2133 = vmatpush1.msra.mxu0 %v2067
      %2134 = vmatprep.subr.mxu0 0.0
      %2135 = vmatpush1.msra.mxu0 %v2066
      %2136 = vmatprep.subr.mxu0 0.0
      %2137 = vmatpush1.msra.mxu0 %v2065
      %2138 = vmatprep.subr.mxu0 0.0
      %2139 = vmatpush1.msra.mxu0 %v2064
      %2140 = vmatprep.subr.mxu0 0.0
      %2141 = vmatpush1.msra.mxu0 %v2063
      %2142 = vmatprep.subr.mxu0 0.0
      %2143 = vmatpush1.msra.mxu0 %v2062
      %2144 = vmatprep.subr.mxu0 0.0
      %2145 = vmatpush1.msra.mxu0 %v2061
      %2146 = vmatprep.subr.mxu0 0.0
      %2147 = vmatpush1.msra.mxu0 %v2060
      %2148 = vmatprep.subr.mxu0 0.0
      %2149 = vmatpush1.msra.mxu0 %v2059
      %2150 = vmatprep.subr.mxu0 0.0
      %2151 = vmatpush1.msra.mxu0 %v2058
      %2152 = vmatprep.subr.mxu0 0.0
      %2153 = vmatpush1.msra.mxu0 %v2057
      %2154 = vmatprep.subr.mxu0 0.0
      %2155 = vmatpush1.msra.mxu0 %v2056
      %2156 = vmatprep.subr.mxu0 0.0
      %2157 = vmatpush2.msra.mxu0 %v2087
      %2158 = vmatprep.subr.mxu0 0.0
      %2159 = vmatpush2.msra.mxu0 %v2086
      %2160 = vmatprep.subr.mxu0 0.0
      %2161 = vmatpush2.msra.mxu0 %v2085
      %2162 = vmatprep.subr.mxu0 0.0
      %2163 = vmatpush2.msra.mxu0 %v2084
      %2164 = vmatprep.subr.mxu0 0.0
      %2165 = vmatpush2.msra.mxu0 %v2083
      %2166 = vmatprep.subr.mxu0 0.0
      %2167 = vmatpush2.msra.mxu0 %v2082
      %2168 = vmatprep.subr.mxu0 0.0
      %2169 = vmatpush2.msra.mxu0 %v2081
      %2170 = vmatprep.subr.mxu0 0.0
      %2171 = vmatpush2.msra.mxu0 %v2080
      %2172 = vmatprep.subr.mxu0 0.0
      %2173 = vmatpush2.msra.mxu0 %v2079
      %2174 = vmatprep.subr.mxu0 0.0
      %2175 = vmatpush2.msra.mxu0 %v2078
      %2176 = vmatprep.subr.mxu0 0.0
      %2177 = vmatpush2.msra.mxu0 %v2077
      %2178 = vmatprep.subr.mxu0 0.0
      %2179 = vmatpush2.msra.mxu0 %v2076
      %2180 = vmatprep.subr.mxu0 0.0
      %2181 = vmatpush2.msra.mxu0 %v2075
      %2182 = vmatprep.subr.mxu0 0.0
      %2183 = vmatpush2.msra.mxu0 %v2074
      %2184 = vmatprep.subr.mxu0 0.0
      %2185 = vmatpush2.msra.mxu0 %v2073
      %2186 = vmatprep.subr.mxu0 0.0
      %2187 = vmatpush2.msra.mxu0 %v2072
      %2188 = vmatprep.mubr.f32.mxu0 %v2121
      %2189 = vmatmul.mubr.f32.gmra.mxu0 %v2120
      %v2190 = vpop.f32.mrf.mxu0
      %v2191 = vadd.f32 0.0, %v2190
      %v2192 = vpop.f32.mrf.mxu0
      %2193 = vdwg.mxu0
      %2194 = vmatprep.subr.mxu0 0.0
      %2195 = vmatpush1.msra.mxu0 %v2103
      %2196 = vmatprep.subr.mxu0 0.0
      %2197 = vmatpush1.msra.mxu0 %v2102
      %2198 = vmatprep.subr.mxu0 0.0
      %2199 = vmatpush1.msra.mxu0 %v2101
      %2200 = vmatprep.subr.mxu0 0.0
      %2201 = vmatpush1.msra.mxu0 %v2100
      %2202 = vmatprep.subr.mxu0 0.0
      %2203 = vmatpush1.msra.mxu0 %v2099
      %2204 = vmatprep.subr.mxu0 0.0
      %2205 = vmatpush1.msra.mxu0 %v2098
      %2206 = vmatprep.subr.mxu0 0.0
      %2207 = vmatpush1.msra.mxu0 %v2097
      %2208 = vmatprep.subr.mxu0 0.0
      %2209 = vmatpush1.msra.mxu0 %v2096
      %2210 = vmatprep.subr.mxu0 0.0
      %2211 = vmatpush1.msra.mxu0 %v2095
      %2212 = vmatprep.subr.mxu0 0.0
      %2213 = vmatpush1.msra.mxu0 %v2094
      %2214 = vmatprep.subr.mxu0 0.0
      %2215 = vmatpush1.msra.mxu0 %v2093
      %2216 = vmatprep.subr.mxu0 0.0
      %2217 = vmatpush1.msra.mxu0 %v2092
      %2218 = vmatprep.subr.mxu0 0.0
      %2219 = vmatpush1.msra.mxu0 %v2091
      %2220 = vmatprep.subr.mxu0 0.0
      %2221 = vmatpush1.msra.mxu0 %v2090
      %2222 = vmatprep.subr.mxu0 0.0
      %2223 = vmatpush1.msra.mxu0 %v2089
      %2224 = vmatprep.subr.mxu0 0.0
      %2225 = vmatpush1.msra.mxu0 %v2088
      %2226 = vmatprep.subr.mxu0 0.0
      %2227 = vmatpush2.msra.mxu0 %v2119
      %2228 = vmatprep.subr.mxu0 0.0
      %2229 = vmatpush2.msra.mxu0 %v2118
      %2230 = vmatprep.subr.mxu0 0.0
      %2231 = vmatpush2.msra.mxu0 %v2117
      %2232 = vmatprep.subr.mxu0 0.0
      %2233 = vmatpush2.msra.mxu0 %v2116
      %2234 = vmatprep.subr.mxu0 0.0
      %2235 = vmatpush2.msra.mxu0 %v2115
      %2236 = vmatprep.subr.mxu0 0.0
      %2237 = vmatpush2.msra.mxu0 %v2114
      %2238 = vmatprep.subr.mxu0 0.0
      %2239 = vmatpush2.msra.mxu0 %v2113
      %2240 = vmatprep.subr.mxu0 0.0
      %2241 = vmatpush2.msra.mxu0 %v2112
      %2242 = vmatprep.subr.mxu0 0.0
      %2243 = vmatpush2.msra.mxu0 %v2111
      %2244 = vmatprep.subr.mxu0 0.0
      %2245 = vmatpush2.msra.mxu0 %v2110
      %2246 = vmatprep.subr.mxu0 0.0
      %2247 = vmatpush2.msra.mxu0 %v2109
      %2248 = vmatprep.subr.mxu0 0.0
      %2249 = vmatpush2.msra.mxu0 %v2108
      %2250 = vmatprep.subr.mxu0 0.0
      %2251 = vmatpush2.msra.mxu0 %v2107
      %2252 = vmatprep.subr.mxu0 0.0
      %2253 = vmatpush2.msra.mxu0 %v2106
      %2254 = vmatprep.subr.mxu0 0.0
      %2255 = vmatpush2.msra.mxu0 %v2105
      %2256 = vmatprep.subr.mxu0 0.0
      %2257 = vmatpush2.msra.mxu0 %v2104
      %2258 = vmatprep.mubr.f32.mxu0 %v2123
      %2259 = vmatmul.mubr.f32.gmra.mxu0 %v2122
      %v2260 = vpop.f32.mrf.mxu0
      %v2261 = vadd.f32 %v2191, %v2260
      %v2262 = vpop.f32.mrf.mxu0
      %2263 = vdwg.mxu0
      %2264 = vst [vmem:[%s6] sm:$0xff] %v2261
    $region33: #{gcn_forward.4} parent=1 // pred_fallthru
      _
    // Predicated region
    $region34: #{gcn_forward.4} parent=1 // pred_check
      _
    $region35: #{gcn_forward.4} parent=1 // pred_check_branch
      %2266 = sbr.rel (0) target = $region37
    $region36: #{gcn_forward.4} parent=1 // pred_region
      _
    $region37: #{gcn_forward.4} parent=1 // pred_fallthru
      _
    // Predicated region
    $region38: #{gcn_forward.4} parent=1 // pred_check
      _
    $region39: #{gcn_forward.4} parent=1 // pred_check_branch
      %2268 = sbr.rel (0) target = $region41
    $region40: #{gcn_forward.4} parent=1 // pred_region
      _
    $region41: #{gcn_forward.4} parent=1 // pred_fallthru
      _
    %2269 = vsyncpa [#allocation7], 1

</llo_original>
